<compile_context>
chip_gen: v7x
topology: tpu7x:2x2x1
jax: 0.10.0
libtpu: 0.0.40
codegen_flags: <defaults>
</compile_context>

<pallas_src>
import jax
import jax.numpy as jnp
from jax.experimental import pallas as pl
from jax.experimental.pallas import tpu as pltpu


_VMEM_LIMIT = 48 * 1024 * 1024   # > 16/32 MiB defaults, < v7x's 64 MiB physical
_SUBLANE = 16                    # bf16 sublane tile; keeps the in-kernel row merge tile-aligned


def _round_up(x: int, m: int) -> int:
    return (x + m - 1) // m * m


def _ceil_div(a: int, b: int) -> int:
    return -(-a // b)


def _tiles(m_rows: int, t_max: int):
    """Pick (#tiles, tile_rows): tile_rows % 16 == 0, and >=2 tiles so both v7x cores work."""
    nt = max(2, _ceil_div(m_rows, t_max))
    t = _round_up(_ceil_div(m_rows, nt), _SUBLANE)
    return nt, t


# ---------------------------------------------------------------------------
# Pallas kernels
# ---------------------------------------------------------------------------
def _conv_pool_kernel(a_ref, w_ref, b_ref, o_ref):
    """o = relu(max_p(a[p] @ W_bd) + b)  ==  maxpool2x2(relu(conv(...))) per tile.

    a_ref: (4, TM, Kp) bf16  -- 4 pool positions x TM packed rows x block-diag patches
    w_ref: (Kp, 128)  bf16   -- block-diagonal weights (pack copies of (K, Cout))
    b_ref: (1, 128)   f32    -- bias tiled pack times
    o_ref: (TM, 128)  bf16   -- lane-dense output (row r holds `pack` pooled pixels)
    """
    _, tm, kp = a_ref.shape
    # Merge the 4 pool positions into one long MXU stream (weights staged once).
    a2d = a_ref[...].reshape(4 * tm, kp)
    z = jnp.dot(a2d, w_ref[...], preferred_element_type=jnp.float32)   # (4*TM, 128) f32
    # 2x2 pool max: VPU reduce over sublane-aligned row groups (hides under MXU phase).
    m = jnp.maximum(jnp.maximum(z[0 * tm:1 * tm], z[1 * tm:2 * tm]),
                    jnp.maximum(z[2 * tm:3 * tm], z[3 * tm:4 * tm]))
    o_ref[...] = jnp.maximum(m + b_ref[...], 0.0).astype(o_ref.dtype)  # bf16 epilogue cast


def _matmul_bias_relu_kernel(a_ref, w_ref, b_ref, o_ref):
    # o = relu(a @ w + b) -- bf16 MXU matmul, f32 accumulation + epilogue
    z = jnp.dot(a_ref[...], w_ref[...], preferred_element_type=jnp.float32)
    o_ref[...] = jnp.maximum(z + b_ref[...], 0.0)


# ---------------------------------------------------------------------------
# Pallas wrappers (M-tiled, batch-scalable)
# ---------------------------------------------------------------------------
def conv_pool(a, w_bd, b_t, *, pack, tmr_max):
    """a: (4, M, K) bf16 pool-grouped patches; w_bd: (pack*K, 128) bf16 block-diag;
    b_t: (1, 128) f32.  Returns maxpool2x2(relu(conv)): (M, Cout) bf16."""
    _, m, k = a.shape
    kp, coutp = w_bd.shape
    assert kp == pack * k
    cout = coutp // pack

    nt, tmr = _tiles(_ceil_div(m, pack), tmr_max)
    mrp = nt * tmr
    pad = mrp * pack - m
    if pad:
        a = jnp.pad(a, ((0, 0), (0, pad), (0, 0)))
    a_bd = a.reshape(4, mrp, kp)          # free: packs `pack` consecutive rows into one row

    out = pl.pallas_call(
        _conv_pool_kernel,
        out_shape=jax.ShapeDtypeStruct((mrp, coutp), jnp.bfloat16),
        grid=(nt,),
        in_specs=[
            pl.BlockSpec((4, tmr, kp), lambda i: (0, i, 0)),
            pl.BlockSpec((kp, coutp), lambda i: (0, 0)),   # constant index -> VMEM resident
            pl.BlockSpec((1, coutp), lambda i: (0, 0)),
        ],
        out_specs=pl.BlockSpec((tmr, coutp), lambda i: (i, 0)),
        compiler_params=pltpu.CompilerParams(
            dimension_semantics=("parallel",), vmem_limit_bytes=_VMEM_LIMIT),
    )(a_bd, w_bd, b_t)
    # Free row-major reinterpretation back to (rows, Cout); slice drops M padding rows
    # (padded rows hold relu(bias) garbage -- keep this slice).
    return out.reshape(mrp * pack, cout)[:m]


def matmul_bias_relu(a, w, b_t, *, tm_max=256):
    """a: (M, K) bf16; w: (K, N) bf16; b_t: (1, N) f32 -> relu(a@w + b): (M, N) f32."""
    m, k = a.shape
    n_out = w.shape[1]
    nt, tm = _tiles(m, tm_max)
    m_pad = nt * tm
    if m_pad != m:
        a = jnp.pad(a, ((0, m_pad - m), (0, 0)))
    out = pl.pallas_call(
        _matmul_bias_relu_kernel,
        out_shape=jax.ShapeDtypeStruct((m_pad, n_out), jnp.float32),
        grid=(nt,),
        in_specs=[
            pl.BlockSpec((tm, k), lambda i: (i, 0)),
            pl.BlockSpec((k, n_out), lambda i: (0, 0)),    # constant index -> VMEM resident
            pl.BlockSpec((1, n_out), lambda i: (0, 0)),
        ],
        out_specs=pl.BlockSpec((tm, n_out), lambda i: (i, 0)),
        compiler_params=pltpu.CompilerParams(
            dimension_semantics=("parallel",), vmem_limit_bytes=_VMEM_LIMIT),
    )(a, w, b_t)
    return out[:m]


# ---------------------------------------------------------------------------
# XLA glue: im2col (5x5, pad=2) arranged by 2x2 pool position
# ---------------------------------------------------------------------------
def _im2col_pool_groups(x_nhwc):
    """x: (N, H, W, C) -> (4, N*(H//2)*(W//2), 25*C).

    Axis 0 enumerates the 4 spatial positions of each 2x2 pool window; the per-row K
    axis is the 5x5 patch in (dy, dx, c) order (matches weight transpose (2,3,1,0)).
    """
    n, h, w, c = x_nhwc.shape
    xp = jnp.pad(x_nhwc, ((0, 0), (2, 2), (2, 2), (0, 0)))
    taps = [xp[:, dy:dy + h, dx:dx + w, :] for dy in range(5) for dx in range(5)]
    patches = jnp.concatenate(taps, axis=-1)                 # (N, H, W, 25*C)
    k = 25 * c
    patches = patches.reshape(n, h // 2, 2, w // 2, 2, k)
    patches = jnp.transpose(patches, (2, 4, 0, 1, 3, 5))     # (2, 2, N, H/2, W/2, K)
    return patches.reshape(4, n * (h // 2) * (w // 2), k)


# ---------------------------------------------------------------------------
# One-time weight prep: layout, dtype, block-diag packing (mirrors nn.Conv2d/Linear)
# ---------------------------------------------------------------------------
def prepare_params(params):
    def pack_conv(w_oihw, b, pack):
        cout, cin, kh, kw = w_oihw.shape
        w = jnp.transpose(w_oihw, (2, 3, 1, 0)).reshape(kh * kw * cin, cout)  # (K, Cout)
        w_bd = jnp.kron(jnp.eye(pack, dtype=w.dtype), w)      # block-diag (pack*K, pack*Cout)
        b_t = jnp.tile(b, pack).reshape(1, pack * cout)
        return w_bd.astype(jnp.bfloat16), b_t.astype(jnp.float32)

    w1_bd, b1_t = pack_conv(params["conv1_w"], params["conv1_b"], 4)   # (100, 128)
    w2_bd, b2_t = pack_conv(params["conv2_w"], params["conv2_b"], 2)   # (1600, 128)
    # fc1: torch (128, 64*7*7) flattens NCHW; pre-permute rows ONCE to the NHWC flatten
    # order this pipeline produces, so the forward has no activation transpose.
    wf = params["fc1_w"].reshape(128, 64, 7, 7)
    wf = jnp.transpose(wf, (2, 3, 1, 0)).reshape(7 * 7 * 64, 128)
    return {
        "w1_bd": w1_bd, "b1_t": b1_t,
        "w2_bd": w2_bd, "b2_t": b2_t,
        "wf": wf.astype(jnp.bfloat16),
        "bf": params["fc1_b"].reshape(1, 128).astype(jnp.float32),
    }


# ---------------------------------------------------------------------------
# Full forward pass (== aceModel_f.forward)
# ---------------------------------------------------------------------------
def ace_forward(x_nchw, prep):
    """x_nchw: (N, 1, 28, 28) f32 -> (N, 128) f32."""
    n = x_nchw.shape[0]
    x = jnp.transpose(x_nchw, (0, 2, 3, 1)).astype(jnp.bfloat16)          # NHWC (N,28,28,1)

    a1 = _im2col_pool_groups(x)                                           # (4, N*196, 25)
    f1 = conv_pool(a1, prep["w1_bd"], prep["b1_t"], pack=4, tmr_max=512)  # (N*196, 32) bf16
    f1 = f1.reshape(n, 14, 14, 32)                                        # pool(relu(conv1))

    # TODO(synk): build conv2 patches in-kernel from a VMEM-resident padded (18,18,32)
    # tile (or 25-tap accumulating matmuls) to kill the ~25x HBM blowup at large batch.
    a2 = _im2col_pool_groups(f1)                                          # (4, N*49, 800)
    f2 = conv_pool(a2, prep["w2_bd"], prep["b2_t"], pack=2, tmr_max=256)  # (N*49, 64) bf16

    f2 = f2.reshape(n, 7 * 7 * 64)                                        # NHWC flatten (free)
    return matmul_bias_relu(f2, prep["wf"], prep["bf"])                   # relu(fc1): (N,128)


# ---------------------------------------------------------------------------
# Pure-JAX f32 reference (review correctness concern: keep a tolerance test around)
# ---------------------------------------------------------------------------
def reference_forward(x, params):
    def conv(x, w, b):
        y = jax.lax.conv_general_dilated(x, w, (1, 1), ((2, 2), (2, 2)),
                                         dimension_numbers=("NCHW", "OIHW", "NCHW"))
        return y + b[None, :, None, None]

    def pool(x):
        return jax.lax.reduce_window(x, -jnp.inf, jax.lax.max,
                                     (1, 1, 2, 2), (1, 1, 2, 2), "VALID")

    f = pool(jax.nn.relu(conv(x, params["conv1_w"], params["conv1_b"])))
    f = pool(jax.nn.relu(conv(f, params["conv2_w"], params["conv2_b"])))
    f = f.reshape(x.shape[0], 64 * 7 * 7)                    # NCHW flatten (torch .view)
    return jax.nn.relu(f @ params["fc1_w"].T + params["fc1_b"])


def init_params(key):
    ks = jax.random.split(key, 6)
    s1 = 1.0 / (1 * 5 * 5) ** 0.5
    s2 = 1.0 / (32 * 5 * 5) ** 0.5
    s3 = 1.0 / (64 * 7 * 7) ** 0.5
    return {
        "conv1_w": jax.random.uniform(ks[0], (32, 1, 5, 5), jnp.float32, -s1, s1),
        "conv1_b": jax.random.uniform(ks[1], (32,), jnp.float32, -s1, s1),
        "conv2_w": jax.random.uniform(ks[2], (64, 32, 5, 5), jnp.float32, -s2, s2),
        "conv2_b": jax.random.uniform(ks[3], (64,), jnp.float32, -s2, s2),
        "fc1_w": jax.random.uniform(ks[4], (128, 64 * 7 * 7), jnp.float32, -s3, s3),
        "fc1_b": jax.random.uniform(ks[5], (128,), jnp.float32, -s3, s3),
    }


if __name__ == "__main__":
    key = jax.random.PRNGKey(0)
    k_params, k_x = jax.random.split(key)
    params = init_params(k_params)
    prep = prepare_params(params)          # one-time layout / dtype / block-diag prep

    # MNIST-shaped input: batch=2, 1 channel, 28x28 (required by the 64*7*7 flatten).
    x = jax.random.normal(k_x, (2, 1, 28, 28), dtype=jnp.float32)

    out = jax.jit(ace_forward)(x, prep)
    out = jax.block_until_ready(out)
    assert out.shape == (2, 128)
    assert bool(jnp.all(out >= 0.0))       # final ReLU

    # bf16-MXU (f32 accumulation) vs f32 reference: loose tolerance check.
    ref = reference_forward(x, params)
    err = jnp.max(jnp.abs(out - ref)) / (jnp.max(jnp.abs(ref)) + 1e-6)
    assert float(err) < 0.08, f"mismatch vs f32 reference: rel-max-err={float(err)}"

    print("KERNEL_OK")
</pallas_src>

<mosaic_0001>
module attributes {stable_mosaic.version = 11 : i64} {
  func.func @_conv_pool_kernel(%arg0: i32, %arg1: memref<4x64x100xbf16, #tpu.memory_space<vmem>>, %arg2: memref<100x128xbf16, #tpu.memory_space<vmem>>, %arg3: memref<1x128xf32, #tpu.memory_space<vmem>>, %arg4: memref<64x128xbf16, #tpu.memory_space<vmem>>) attributes {dimension_semantics = [#tpu.dimension_semantics<parallel>], iteration_bounds = array<i64: 2>, scalar_prefetch = 0 : i64, scratch_operands = 0 : i64, tpu.core_type = #tpu.core_type<tc>, window_params = [{transform_indices = @transform_0, window_bounds = array<i64: 4, 64, 100>}, {pipeline_mode = #tpu.pipeline_mode<synchronous>, transform_indices = @transform_1, window_bounds = array<i64: 100, 128>}, {pipeline_mode = #tpu.pipeline_mode<synchronous>, transform_indices = @transform_2, window_bounds = array<i64: 1, 128>}, {transform_indices = @transform_3, window_bounds = array<i64: 64, 128>}]} {
    %c0 = arith.constant 0 : index
    %c0_0 = arith.constant 0 : index
    %c0_1 = arith.constant 0 : index
    %0 = vector.load %arg1[%c0, %c0_0, %c0_1] : memref<4x64x100xbf16, #tpu.memory_space<vmem>>, vector<4x64x100xbf16>
    %1 = vector.shape_cast %0 : vector<4x64x100xbf16> to vector<256x100xbf16>
    %c0_2 = arith.constant 0 : index
    %c0_3 = arith.constant 0 : index
    %2 = vector.load %arg2[%c0_2, %c0_3] : memref<100x128xbf16, #tpu.memory_space<vmem>>, vector<100x128xbf16>
    %cst = arith.constant dense<0.000000e+00> : vector<256x128xf32>
    %3 = tpu.matmul %1, %2, %cst {dimension_numbers = #tpu.dot_dimension_numbers<[1], [0], [0], [1], [0, 0, 1, 1], [], []>} : vector<256x100xbf16>, vector<100x128xbf16>, vector<256x128xf32> -> vector<256x128xf32>
    %4 = vector.extract_strided_slice %3 {offsets = [0, 0], sizes = [64, 128], strides = [1, 1]} : vector<256x128xf32> to vector<64x128xf32>
    %5 = vector.extract_strided_slice %3 {offsets = [64, 0], sizes = [64, 128], strides = [1, 1]} : vector<256x128xf32> to vector<64x128xf32>
    %6 = arith.maximumf %4, %5 : vector<64x128xf32>
    %7 = vector.extract_strided_slice %3 {offsets = [128, 0], sizes = [64, 128], strides = [1, 1]} : vector<256x128xf32> to vector<64x128xf32>
    %8 = vector.extract_strided_slice %3 {offsets = [192, 0], sizes = [64, 128], strides = [1, 1]} : vector<256x128xf32> to vector<64x128xf32>
    %9 = arith.maximumf %7, %8 : vector<64x128xf32>
    %10 = arith.maximumf %6, %9 : vector<64x128xf32>
    %c0_4 = arith.constant 0 : index
    %c0_5 = arith.constant 0 : index
    %11 = vector.load %arg3[%c0_4, %c0_5] : memref<1x128xf32, #tpu.memory_space<vmem>>, vector<1x128xf32>
    %12 = vector.broadcast %11 : vector<1x128xf32> to vector<64x128xf32>
    %13 = arith.addf %10, %12 : vector<64x128xf32>
    %cst_6 = arith.constant 0.000000e+00 : f32
    %14 = vector.broadcast %cst_6 : f32 to vector<64x128xf32>
    %15 = arith.maximumf %13, %14 : vector<64x128xf32>
    %16 = arith.truncf %15 : vector<64x128xf32> to vector<64x128xbf16>
    %c0_7 = arith.constant 0 : index
    %c0_8 = arith.constant 0 : index
    %17 = vector.load %arg4[%c0_7, %c0_8] : memref<64x128xbf16, #tpu.memory_space<vmem>>, vector<64x128xbf16>
    tpu.vector_store %arg4[%c0_7, %c0_8], %16 {strides = array<i32>} : memref<64x128xbf16, #tpu.memory_space<vmem>>, vector<64x128xbf16>,
    return
  }
  func.func @transform_0(%arg0: i32) -> (i32, i32, i32) {
    %c0_i32 = arith.constant 0 : i32
    %c0_i32_0 = arith.constant 0 : i32
    %c0_i32_1 = arith.constant 0 : i32
    return %c0_i32, %arg0, %c0_i32_0 : i32, i32, i32
  }
  func.func @transform_1(%arg0: i32) -> (i32, i32) {
    %c0_i32 = arith.constant 0 : i32
    %c0_i32_0 = arith.constant 0 : i32
    %c0_i32_1 = arith.constant 0 : i32
    return %c0_i32, %c0_i32_0 : i32, i32
  }
  func.func @transform_2(%arg0: i32) -> (i32, i32) {
    %c0_i32 = arith.constant 0 : i32
    %c0_i32_0 = arith.constant 0 : i32
    %c0_i32_1 = arith.constant 0 : i32
    return %c0_i32, %c0_i32_0 : i32, i32
  }
  func.func @transform_3(%arg0: i32) -> (i32, i32) {
    %c0_i32 = arith.constant 0 : i32
    %c0_i32_0 = arith.constant 0 : i32
    return %arg0, %c0_i32 : i32, i32
  }
}

module attributes {stable_mosaic.version = 11 : i64} {
  func.func @_conv_pool_kernel(%arg0: i32, %arg1: memref<4x32x1600xbf16, #tpu.memory_space<vmem>>, %arg2: memref<1600x128xbf16, #tpu.memory_space<vmem>>, %arg3: memref<1x128xf32, #tpu.memory_space<vmem>>, %arg4: memref<32x128xbf16, #tpu.memory_space<vmem>>) attributes {dimension_semantics = [#tpu.dimension_semantics<parallel>], iteration_bounds = array<i64: 2>, scalar_prefetch = 0 : i64, scratch_operands = 0 : i64, tpu.core_type = #tpu.core_type<tc>, window_params = [{transform_indices = @transform_0, window_bounds = array<i64: 4, 32, 1600>}, {pipeline_mode = #tpu.pipeline_mode<synchronous>, transform_indices = @transform_1, window_bounds = array<i64: 1600, 128>}, {pipeline_mode = #tpu.pipeline_mode<synchronous>, transform_indices = @transform_2, window_bounds = array<i64: 1, 128>}, {transform_indices = @transform_3, window_bounds = array<i64: 32, 128>}]} {
    %c0 = arith.constant 0 : index
    %c0_0 = arith.constant 0 : index
    %c0_1 = arith.constant 0 : index
    %0 = vector.load %arg1[%c0, %c0_0, %c0_1] : memref<4x32x1600xbf16, #tpu.memory_space<vmem>>, vector<4x32x1600xbf16>
    %1 = vector.shape_cast %0 : vector<4x32x1600xbf16> to vector<128x1600xbf16>
    %c0_2 = arith.constant 0 : index
    %c0_3 = arith.constant 0 : index
    %2 = vector.load %arg2[%c0_2, %c0_3] : memref<1600x128xbf16, #tpu.memory_space<vmem>>, vector<1600x128xbf16>
    %cst = arith.constant dense<0.000000e+00> : vector<128x128xf32>
    %3 = tpu.matmul %1, %2, %cst {dimension_numbers = #tpu.dot_dimension_numbers<[1], [0], [0], [1], [0, 0, 1, 1], [], []>} : vector<128x1600xbf16>, vector<1600x128xbf16>, vector<128x128xf32> -> vector<128x128xf32>
    %4 = vector.extract_strided_slice %3 {offsets = [0, 0], sizes = [32, 128], strides = [1, 1]} : vector<128x128xf32> to vector<32x128xf32>
    %5 = vector.extract_strided_slice %3 {offsets = [32, 0], sizes = [32, 128], strides = [1, 1]} : vector<128x128xf32> to vector<32x128xf32>
    %6 = arith.maximumf %4, %5 : vector<32x128xf32>
    %7 = vector.extract_strided_slice %3 {offsets = [64, 0], sizes = [32, 128], strides = [1, 1]} : vector<128x128xf32> to vector<32x128xf32>
    %8 = vector.extract_strided_slice %3 {offsets = [96, 0], sizes = [32, 128], strides = [1, 1]} : vector<128x128xf32> to vector<32x128xf32>
    %9 = arith.maximumf %7, %8 : vector<32x128xf32>
    %10 = arith.maximumf %6, %9 : vector<32x128xf32>
    %c0_4 = arith.constant 0 : index
    %c0_5 = arith.constant 0 : index
    %11 = vector.load %arg3[%c0_4, %c0_5] : memref<1x128xf32, #tpu.memory_space<vmem>>, vector<1x128xf32>
    %12 = vector.broadcast %11 : vector<1x128xf32> to vector<32x128xf32>
    %13 = arith.addf %10, %12 : vector<32x128xf32>
    %cst_6 = arith.constant 0.000000e+00 : f32
    %14 = vector.broadcast %cst_6 : f32 to vector<32x128xf32>
    %15 = arith.maximumf %13, %14 : vector<32x128xf32>
    %16 = arith.truncf %15 : vector<32x128xf32> to vector<32x128xbf16>
    %c0_7 = arith.constant 0 : index
    %c0_8 = arith.constant 0 : index
    %17 = vector.load %arg4[%c0_7, %c0_8] : memref<32x128xbf16, #tpu.memory_space<vmem>>, vector<32x128xbf16>
    tpu.vector_store %arg4[%c0_7, %c0_8], %16 {strides = array<i32>} : memref<32x128xbf16, #tpu.memory_space<vmem>>, vector<32x128xbf16>,
    return
  }
  func.func @transform_0(%arg0: i32) -> (i32, i32, i32) {
    %c0_i32 = arith.constant 0 : i32
    %c0_i32_0 = arith.constant 0 : i32
    %c0_i32_1 = arith.constant 0 : i32
    return %c0_i32, %arg0, %c0_i32_0 : i32, i32, i32
  }
  func.func @transform_1(%arg0: i32) -> (i32, i32) {
    %c0_i32 = arith.constant 0 : i32
    %c0_i32_0 = arith.constant 0 : i32
    %c0_i32_1 = arith.constant 0 : i32
    return %c0_i32, %c0_i32_0 : i32, i32
  }
  func.func @transform_2(%arg0: i32) -> (i32, i32) {
    %c0_i32 = arith.constant 0 : i32
    %c0_i32_0 = arith.constant 0 : i32
    %c0_i32_1 = arith.constant 0 : i32
    return %c0_i32, %c0_i32_0 : i32, i32
  }
  func.func @transform_3(%arg0: i32) -> (i32, i32) {
    %c0_i32 = arith.constant 0 : i32
    %c0_i32_0 = arith.constant 0 : i32
    return %arg0, %c0_i32 : i32, i32
  }
}

module attributes {stable_mosaic.version = 11 : i64} {
  func.func @_matmul_bias_relu_kernel(%arg0: i32, %arg1: memref<16x3136xbf16, #tpu.memory_space<vmem>>, %arg2: memref<3136x128xbf16, #tpu.memory_space<vmem>>, %arg3: memref<1x128xf32, #tpu.memory_space<vmem>>, %arg4: memref<16x128xf32, #tpu.memory_space<vmem>>) attributes {dimension_semantics = [#tpu.dimension_semantics<parallel>], iteration_bounds = array<i64: 2>, scalar_prefetch = 0 : i64, scratch_operands = 0 : i64, tpu.core_type = #tpu.core_type<tc>, window_params = [{transform_indices = @transform_0, window_bounds = array<i64: 16, 3136>}, {pipeline_mode = #tpu.pipeline_mode<synchronous>, transform_indices = @transform_1, window_bounds = array<i64: 3136, 128>}, {pipeline_mode = #tpu.pipeline_mode<synchronous>, transform_indices = @transform_2, window_bounds = array<i64: 1, 128>}, {transform_indices = @transform_3, window_bounds = array<i64: 16, 128>}]} {
    %c0 = arith.constant 0 : index
    %c0_0 = arith.constant 0 : index
    %0 = vector.load %arg1[%c0, %c0_0] : memref<16x3136xbf16, #tpu.memory_space<vmem>>, vector<16x3136xbf16>
    %c0_1 = arith.constant 0 : index
    %c0_2 = arith.constant 0 : index
    %1 = vector.load %arg2[%c0_1, %c0_2] : memref<3136x128xbf16, #tpu.memory_space<vmem>>, vector<3136x128xbf16>
    %cst = arith.constant dense<0.000000e+00> : vector<16x128xf32>
    %2 = tpu.matmul %0, %1, %cst {dimension_numbers = #tpu.dot_dimension_numbers<[1], [0], [0], [1], [0, 0, 1, 1], [], []>} : vector<16x3136xbf16>, vector<3136x128xbf16>, vector<16x128xf32> -> vector<16x128xf32>
    %c0_3 = arith.constant 0 : index
    %c0_4 = arith.constant 0 : index
    %3 = vector.load %arg3[%c0_3, %c0_4] : memref<1x128xf32, #tpu.memory_space<vmem>>, vector<1x128xf32>
    %4 = vector.broadcast %3 : vector<1x128xf32> to vector<16x128xf32>
    %5 = arith.addf %2, %4 : vector<16x128xf32>
    %cst_5 = arith.constant 0.000000e+00 : f32
    %6 = vector.broadcast %cst_5 : f32 to vector<16x128xf32>
    %7 = arith.maximumf %5, %6 : vector<16x128xf32>
    %c0_6 = arith.constant 0 : index
    %c0_7 = arith.constant 0 : index
    %8 = vector.load %arg4[%c0_6, %c0_7] : memref<16x128xf32, #tpu.memory_space<vmem>>, vector<16x128xf32>
    tpu.vector_store %arg4[%c0_6, %c0_7], %7 {strides = array<i32>} : memref<16x128xf32, #tpu.memory_space<vmem>>, vector<16x128xf32>,
    return
  }
  func.func @transform_0(%arg0: i32) -> (i32, i32) {
    %c0_i32 = arith.constant 0 : i32
    %c0_i32_0 = arith.constant 0 : i32
    return %arg0, %c0_i32 : i32, i32
  }
  func.func @transform_1(%arg0: i32) -> (i32, i32) {
    %c0_i32 = arith.constant 0 : i32
    %c0_i32_0 = arith.constant 0 : i32
    %c0_i32_1 = arith.constant 0 : i32
    return %c0_i32, %c0_i32_0 : i32, i32
  }
  func.func @transform_2(%arg0: i32) -> (i32, i32) {
    %c0_i32 = arith.constant 0 : i32
    %c0_i32_0 = arith.constant 0 : i32
    %c0_i32_1 = arith.constant 0 : i32
    return %c0_i32, %c0_i32_0 : i32, i32
  }
  func.func @transform_3(%arg0: i32) -> (i32, i32) {
    %c0_i32 = arith.constant 0 : i32
    %c0_i32_0 = arith.constant 0 : i32
    return %arg0, %c0_i32 : i32, i32
  }
}

</mosaic_0001>

<llo_original>
// kernel: ace_forward.3
$region0: #{ace_forward.3}
  #allocation0 [shape = 'u32[]', space=smem, size = 0x4, offset = 0x4, fixed_abs, tag = 'smem constant byte address 0x4 - core index']
  #allocation1 [shape = 'u32[144,128]{1,0:T(1,128)}', space=vmem, size = 0x12000, scoped, tag = 'internal scratch']
  %s0 = inlined_call_operand.vmem [shape: bf16[4,128,100], index: 0, kind: input, shape index: {}]
  %s1 = inlined_call_operand.vmem [shape: bf16[100,128], index: 1, kind: input, shape index: {}]
  %s2 = inlined_call_operand.vmem [shape: f32[1,128], index: 2, kind: input, shape index: {}]
  %s3 = inlined_call_operand.vmem [shape: bf16[128,128], index: 3, kind: output, shape index: {}]
  %s4 = sld [smem:[#allocation0]]
  $region86: #{ace_forward.3} parent=0
    _
  %s6 = ssub.s32 1, %s4
  %s7 = scalar_select 0, %s6, %s4
  $region1: #{ace_forward.3} parent=0
    #allocation2 [shape = 'u8[131072]{0}', space=vmem, size = 0x20000, scoped, tag = 'input window, operand 0']
    loop: start=0, step=1, limit=4
    $region2: #{ace_forward.3} parent=1 // loop_pre_header
      _
    $region3: #{ace_forward.3} parent=1 // loop_header
      %s9 = sphi 0, %s13
      %p10 = scmp.ge.s32.totalorder %s9, 4
      %s19 = sphi 0, %s21
      %s22 = sphi 0, %s19
      %s23 = sphi 0, %s22
      %s39 = sphi 0, %s23
      %s43 = sphi 0, %s43
      %s45 = sphi 0, %s43
      %s46 = sphi 0, %s45
      %s60 = sphi 0, %s46
      %s64 = sphi 0, %s64
      %s66 = sphi 0, %s64
      %s67 = sphi 0, %s66
      %s81 = sphi 0, %s67
      %s87 = sphi 0, %s89
      %s90 = sphi 0, %s87
      %s91 = sphi 0, %s90
      %s107 = sphi 0, %s91
    $region4: #{ace_forward.3} parent=1 // loop_header_branch
      %12 = sbr.rel (%p10) target = $region8
    $region5: #{ace_forward.3} parent=1 // loop_body
      %s14 = ssub.s32 %s9, 1
      %s15 = ssub.s32 %s9, 2
      %s16 = sadd.s32 %s9, 1
      %s17 = ssub.s32 %s9, %s16
      %p18 = scmp.eq.s32.totalorder %s17, 0
      %s20 = sadd.s32 %s19, 1
      %s21 = scalar_select %p18, %s19, %s20
      %p24 = pneg %p18
      %p25 = scmp.eq.s32.totalorder %s9, 1
      %p26 = por %p24, %p25
      %p27 = scmp.ne.s32.totalorder %s19, %s22
      %p28 = scmp.eq.s32.totalorder %s9, 0
      %p29 = por %p27, %p28
      %p30 = scmp.ne.s32.totalorder %s19, %s22
      %p31 = scmp.eq.s32.totalorder %s14, 1
      %p32 = por %p30, %p31
      %p33 = scmp.ne.s32.totalorder %s22, %s23
      %p34 = scmp.eq.s32.totalorder %s14, 0
      %p35 = por %p33, %p34
      %p36 = scmp.ne.s32.totalorder %s22, %s23
      %p37 = scmp.eq.s32.totalorder %s15, 1
      %p38 = por %p36, %p37
      %p40 = scmp.ne.s32.totalorder %s23, %s39
      %p41 = scmp.eq.s32.totalorder %s15, 0
      %p42 = por %p40, %p41
      %s44 = sadd.s32 %s43, 1
      %p47 = scmp.eq.s32.totalorder %s9, 1
      %p48 = scmp.ne.s32.totalorder %s43, %s45
      %p49 = scmp.eq.s32.totalorder %s9, 0
      %p50 = por %p48, %p49
      %p51 = scmp.ne.s32.totalorder %s43, %s45
      %p52 = scmp.eq.s32.totalorder %s14, 1
      %p53 = por %p51, %p52
      %p54 = scmp.ne.s32.totalorder %s45, %s46
      %p55 = scmp.eq.s32.totalorder %s14, 0
      %p56 = por %p54, %p55
      %p57 = scmp.ne.s32.totalorder %s45, %s46
      %p58 = scmp.eq.s32.totalorder %s15, 1
      %p59 = por %p57, %p58
      %p61 = scmp.ne.s32.totalorder %s46, %s60
      %p62 = scmp.eq.s32.totalorder %s15, 0
      %p63 = por %p61, %p62
      %s65 = sadd.s32 %s64, 1
      %p68 = scmp.eq.s32.totalorder %s9, 1
      %p69 = scmp.ne.s32.totalorder %s64, %s66
      %p70 = scmp.eq.s32.totalorder %s9, 0
      %p71 = por %p69, %p70
      %p72 = scmp.ne.s32.totalorder %s64, %s66
      %p73 = scmp.eq.s32.totalorder %s14, 1
      %p74 = por %p72, %p73
      %p75 = scmp.ne.s32.totalorder %s66, %s67
      %p76 = scmp.eq.s32.totalorder %s14, 0
      %p77 = por %p75, %p76
      %p78 = scmp.ne.s32.totalorder %s66, %s67
      %p79 = scmp.eq.s32.totalorder %s15, 1
      %p80 = por %p78, %p79
      %p82 = scmp.ne.s32.totalorder %s67, %s81
      %p83 = scmp.eq.s32.totalorder %s15, 0
      %p84 = por %p82, %p83
      %s85 = ssub.s32 %s9, %s16
      %p86 = scmp.eq.s32.totalorder %s85, 0
      %s88 = sadd.s32 %s87, 1
      %s89 = scalar_select %p86, %s87, %s88
      %p92 = pneg %p86
      %p93 = scmp.eq.s32.totalorder %s9, 1
      %p94 = por %p92, %p93
      %p95 = scmp.ne.s32.totalorder %s87, %s90
      %p96 = scmp.eq.s32.totalorder %s9, 0
      %p97 = por %p95, %p96
      %p98 = scmp.ne.s32.totalorder %s87, %s90
      %p99 = scmp.eq.s32.totalorder %s14, 1
      %p100 = por %p98, %p99
      %p101 = scmp.ne.s32.totalorder %s90, %s91
      %p102 = scmp.eq.s32.totalorder %s14, 0
      %p103 = por %p101, %p102
      %p104 = scmp.ne.s32.totalorder %s90, %s91
      %p105 = scmp.eq.s32.totalorder %s15, 1
      %p106 = por %p104, %p105
      %p108 = scmp.ne.s32.totalorder %s91, %s107
      %p109 = scmp.eq.s32.totalorder %s15, 0
      %p110 = por %p108, %p109
      %p111 = scmp.le.s32.totalorder 1, %s9
      %p112 = scmp.lt.s32.totalorder %s9, 3
      %p113 = pnand %p111, %p112
      %p114 = pneg %p113
      // Predicated region
      $region9: #{ace_forward.3} parent=5 // pred_check
        _
      $region10: #{ace_forward.3} parent=5 // pred_check_branch
        %116 = sbr.rel (%p113) target = $region12
      $region11: #{ace_forward.3} parent=5 // pred_region
        %s117 = ssub.s32 %s9, 1
        // Predicated region
        $region13: #{ace_forward.3} parent=11 // pred_check
          %p118 = pneg %p56
        $region14: #{ace_forward.3} parent=11 // pred_check_branch
          %120 = sbr.rel (%p118) target = $region16
        $region15: #{ace_forward.3} parent=11 // pred_region
          _
        $region16: #{ace_forward.3} parent=11 // pred_fallthru
          _
        // Predicated region
        $region17: #{ace_forward.3} parent=11 // pred_check
          %p121 = pneg %p77
        $region18: #{ace_forward.3} parent=11 // pred_check_branch
          %123 = sbr.rel (%p121) target = $region20
        $region19: #{ace_forward.3} parent=11 // pred_region
          _
        $region20: #{ace_forward.3} parent=11 // pred_fallthru
          _
      $region12: #{ace_forward.3} parent=5 // pred_fallthru
        _
      %p124 = scmp.lt.s32.totalorder %s9, 2
      // Predicated region
      $region21: #{ace_forward.3} parent=5 // pred_check
        %p125 = pneg %p124
      $region22: #{ace_forward.3} parent=5 // pred_check_branch
        %127 = sbr.rel (%p125) target = $region24
      $region23: #{ace_forward.3} parent=5 // pred_region
        // Predicated region
        $region25: #{ace_forward.3} parent=23 // pred_check
          %p128 = pneg %p29
        $region26: #{ace_forward.3} parent=23 // pred_check_branch
          %130 = sbr.rel (%p128) target = $region28
        $region27: #{ace_forward.3} parent=23 // pred_region
          %s131 = sand.u32 %s19, 1
          %s132 = sand.u32 %s19, 1
          %s133 = smul.addr %s132, 128
          %s134 = scalar_lea.vmem [#allocation2], %s133
          %s135 = smul.u32 8, %s9
          %s136 = smul.addr %s135, 4
          %s137 = scalar_lea.vmem %s0, %s136
          // Predicated region
          $region29: #{ace_forward.3} parent=27 // pred_check
            _
          $region30: #{ace_forward.3} parent=27 // pred_check_branch
            %139 = sbr.rel (0) target = $region32
          $region31: #{ace_forward.3} parent=27 // pred_region
            // Predicated region
            $region33: #{ace_forward.3} parent=31 // pred_check
              _
            $region34: #{ace_forward.3} parent=31 // pred_check_branch
              %141 = sbr.rel target = $region36
            $region35: #{ace_forward.3} parent=31 // pred_region
              // Predicated region
              $region48: #{ace_forward.3} parent=35 // pred_check
                _
              $region49: #{ace_forward.3} parent=35 // pred_check_branch
                %218 = sbr.rel (0) target = $region51
              $region50: #{ace_forward.3} parent=35 // pred_region
                loop: start=0, step=1, limit=1
                $region52: #{ace_forward.3} parent=50 // loop_pre_header
                  _
                $region53: #{ace_forward.3} parent=50 // loop_header
                  %s220 = sphi 0, %s224
                  %p221 = scmp.ge.s32.totalorder %s220, 1
                  %s225 = sphi %s137, %s137
                  %s226 = sphi %s134, %s134
                $region54: #{ace_forward.3} parent=50 // loop_header_branch
                  %223 = sbr.rel (%p221) target = $region58
                $region55: #{ace_forward.3} parent=50 // loop_body
                  _
                $region56: #{ace_forward.3} parent=50 // loop_footer
                  %s224 = sadd.s32 1, %s220
                $region57: #{ace_forward.3} parent=50 // loop_footer_branch
                  %219 = sbr.rel target = $region53
                $region58: #{ace_forward.3} parent=50 // loop_exit
                  _
                loop: start=0, step=1, limit=1
                $region59: #{ace_forward.3} parent=50 // loop_pre_header
                  _
                $region60: #{ace_forward.3} parent=50 // loop_header
                  %s229 = sphi 0, %s233
                  %p230 = scmp.ge.s32.totalorder %s229, 1
                  %s234 = sphi %s137, %s137
                  %s235 = sphi %s134, %s134
                $region61: #{ace_forward.3} parent=50 // loop_header_branch
                  %232 = sbr.rel (%p230) target = $region65
                $region62: #{ace_forward.3} parent=50 // loop_body
                  %v236 = vld [vmem:[%s234] sm:$0xf]
                  %237 = vst [vmem:[%s235] sm:$0xf] %v236
                  %v238 = vld [vmem:[%s234 + $0x4] sm:$0xf]
                  %239 = vst [vmem:[%s235 + $0x4] sm:$0xf] %v238
                  %v240 = vld [vmem:[%s234 + $0x8] sm:$0xf]
                  %241 = vst [vmem:[%s235 + $0x8] sm:$0xf] %v240
                  %v242 = vld [vmem:[%s234 + $0xc] sm:$0xf]
                  %243 = vst [vmem:[%s235 + $0xc] sm:$0xf] %v242
                  %v244 = vld [vmem:[%s234 + $0x10] sm:$0xf]
                  %245 = vst [vmem:[%s235 + $0x10] sm:$0xf] %v244
                  %v246 = vld [vmem:[%s234 + $0x14] sm:$0xf]
                  %247 = vst [vmem:[%s235 + $0x14] sm:$0xf] %v246
                  %v248 = vld [vmem:[%s234 + $0x18] sm:$0xf]
                  %249 = vst [vmem:[%s235 + $0x18] sm:$0xf] %v248
                  %v250 = vld [vmem:[%s234 + $0x1c] sm:$0xf]
                  %251 = vst [vmem:[%s235 + $0x1c] sm:$0xf] %v250
                  %v252 = vld [vmem:[%s234 + $0x40] sm:$0xf]
                  %253 = vst [vmem:[%s235 + $0x20] sm:$0xf] %v252
                  %v254 = vld [vmem:[%s234 + $0x44] sm:$0xf]
                  %255 = vst [vmem:[%s235 + $0x24] sm:$0xf] %v254
                  %v256 = vld [vmem:[%s234 + $0x48] sm:$0xf]
                  %257 = vst [vmem:[%s235 + $0x28] sm:$0xf] %v256
                  %v258 = vld [vmem:[%s234 + $0x4c] sm:$0xf]
                  %259 = vst [vmem:[%s235 + $0x2c] sm:$0xf] %v258
                  %v260 = vld [vmem:[%s234 + $0x50] sm:$0xf]
                  %261 = vst [vmem:[%s235 + $0x30] sm:$0xf] %v260
                  %v262 = vld [vmem:[%s234 + $0x54] sm:$0xf]
                  %263 = vst [vmem:[%s235 + $0x34] sm:$0xf] %v262
                  %v264 = vld [vmem:[%s234 + $0x58] sm:$0xf]
                  %265 = vst [vmem:[%s235 + $0x38] sm:$0xf] %v264
                  %v266 = vld [vmem:[%s234 + $0x5c] sm:$0xf]
                  %267 = vst [vmem:[%s235 + $0x3c] sm:$0xf] %v266
                  %v268 = vld [vmem:[%s234 + $0x80] sm:$0xf]
                  %269 = vst [vmem:[%s235 + $0x40] sm:$0xf] %v268
                  %v270 = vld [vmem:[%s234 + $0x84] sm:$0xf]
                  %271 = vst [vmem:[%s235 + $0x44] sm:$0xf] %v270
                  %v272 = vld [vmem:[%s234 + $0x88] sm:$0xf]
                  %273 = vst [vmem:[%s235 + $0x48] sm:$0xf] %v272
                  %v274 = vld [vmem:[%s234 + $0x8c] sm:$0xf]
                  %275 = vst [vmem:[%s235 + $0x4c] sm:$0xf] %v274
                  %v276 = vld [vmem:[%s234 + $0x90] sm:$0xf]
                  %277 = vst [vmem:[%s235 + $0x50] sm:$0xf] %v276
                  %v278 = vld [vmem:[%s234 + $0x94] sm:$0xf]
                  %279 = vst [vmem:[%s235 + $0x54] sm:$0xf] %v278
                  %v280 = vld [vmem:[%s234 + $0x98] sm:$0xf]
                  %281 = vst [vmem:[%s235 + $0x58] sm:$0xf] %v280
                  %v282 = vld [vmem:[%s234 + $0x9c] sm:$0xf]
                  %283 = vst [vmem:[%s235 + $0x5c] sm:$0xf] %v282
                  %v284 = vld [vmem:[%s234 + $0xc0] sm:$0xf]
                  %285 = vst [vmem:[%s235 + $0x60] sm:$0xf] %v284
                  %v286 = vld [vmem:[%s234 + $0xc4] sm:$0xf]
                  %287 = vst [vmem:[%s235 + $0x64] sm:$0xf] %v286
                  %v288 = vld [vmem:[%s234 + $0xc8] sm:$0xf]
                  %289 = vst [vmem:[%s235 + $0x68] sm:$0xf] %v288
                  %v290 = vld [vmem:[%s234 + $0xcc] sm:$0xf]
                  %291 = vst [vmem:[%s235 + $0x6c] sm:$0xf] %v290
                  %v292 = vld [vmem:[%s234 + $0xd0] sm:$0xf]
                  %293 = vst [vmem:[%s235 + $0x70] sm:$0xf] %v292
                  %v294 = vld [vmem:[%s234 + $0xd4] sm:$0xf]
                  %295 = vst [vmem:[%s235 + $0x74] sm:$0xf] %v294
                  %v296 = vld [vmem:[%s234 + $0xd8] sm:$0xf]
                  %297 = vst [vmem:[%s235 + $0x78] sm:$0xf] %v296
                  %v298 = vld [vmem:[%s234 + $0xdc] sm:$0xf]
                  %299 = vst [vmem:[%s235 + $0x7c] sm:$0xf] %v298
                $region63: #{ace_forward.3} parent=50 // loop_footer
                  %s233 = sadd.s32 1, %s229
                $region64: #{ace_forward.3} parent=50 // loop_footer_branch
                  %228 = sbr.rel target = $region60
                $region65: #{ace_forward.3} parent=50 // loop_exit
                  _
              $region51: #{ace_forward.3} parent=35 // pred_fallthru
                _
            $region36: #{ace_forward.3} parent=31 // pred_fallthru
              _
            // Predicated region
            $region37: #{ace_forward.3} parent=31 // pred_check
              _
            $region38: #{ace_forward.3} parent=31 // pred_check_branch
              %143 = sbr.rel (0) target = $region40
            $region39: #{ace_forward.3} parent=31 // pred_region
              loop: start=0, step=1, limit=1
              $region41: #{ace_forward.3} parent=39 // loop_pre_header
                _
              $region42: #{ace_forward.3} parent=39 // loop_header
                %s146 = sphi 0, %s150
                %p147 = scmp.ge.s32.totalorder %s146, 1
                %s151 = sphi %s137, %s137
                %s152 = sphi %s134, %s134
              $region43: #{ace_forward.3} parent=39 // loop_header_branch
                %149 = sbr.rel (%p147) target = $region47
              $region44: #{ace_forward.3} parent=39 // loop_body
                %v153 = vld [vmem:[%s151] sm:$0xf]
                %154 = vst [vmem:[%s152] sm:$0xf] %v153
                %v155 = vld [vmem:[%s151 + $0x4] sm:$0xf]
                %156 = vst [vmem:[%s152 + $0x4] sm:$0xf] %v155
                %v157 = vld [vmem:[%s151 + $0x8] sm:$0xf]
                %158 = vst [vmem:[%s152 + $0x8] sm:$0xf] %v157
                %v159 = vld [vmem:[%s151 + $0xc] sm:$0xf]
                %160 = vst [vmem:[%s152 + $0xc] sm:$0xf] %v159
                %v161 = vld [vmem:[%s151 + $0x10] sm:$0xf]
                %162 = vst [vmem:[%s152 + $0x10] sm:$0xf] %v161
                %v163 = vld [vmem:[%s151 + $0x14] sm:$0xf]
                %164 = vst [vmem:[%s152 + $0x14] sm:$0xf] %v163
                %v165 = vld [vmem:[%s151 + $0x18] sm:$0xf]
                %166 = vst [vmem:[%s152 + $0x18] sm:$0xf] %v165
                %v167 = vld [vmem:[%s151 + $0x1c] sm:$0xf]
                %168 = vst [vmem:[%s152 + $0x1c] sm:$0xf] %v167
                %v169 = vld [vmem:[%s151 + $0x40] sm:$0xf]
                %170 = vst [vmem:[%s152 + $0x20] sm:$0xf] %v169
                %v171 = vld [vmem:[%s151 + $0x44] sm:$0xf]
                %172 = vst [vmem:[%s152 + $0x24] sm:$0xf] %v171
                %v173 = vld [vmem:[%s151 + $0x48] sm:$0xf]
                %174 = vst [vmem:[%s152 + $0x28] sm:$0xf] %v173
                %v175 = vld [vmem:[%s151 + $0x4c] sm:$0xf]
                %176 = vst [vmem:[%s152 + $0x2c] sm:$0xf] %v175
                %v177 = vld [vmem:[%s151 + $0x50] sm:$0xf]
                %178 = vst [vmem:[%s152 + $0x30] sm:$0xf] %v177
                %v179 = vld [vmem:[%s151 + $0x54] sm:$0xf]
                %180 = vst [vmem:[%s152 + $0x34] sm:$0xf] %v179
                %v181 = vld [vmem:[%s151 + $0x58] sm:$0xf]
                %182 = vst [vmem:[%s152 + $0x38] sm:$0xf] %v181
                %v183 = vld [vmem:[%s151 + $0x5c] sm:$0xf]
                %184 = vst [vmem:[%s152 + $0x3c] sm:$0xf] %v183
                %v185 = vld [vmem:[%s151 + $0x80] sm:$0xf]
                %186 = vst [vmem:[%s152 + $0x40] sm:$0xf] %v185
                %v187 = vld [vmem:[%s151 + $0x84] sm:$0xf]
                %188 = vst [vmem:[%s152 + $0x44] sm:$0xf] %v187
                %v189 = vld [vmem:[%s151 + $0x88] sm:$0xf]
                %190 = vst [vmem:[%s152 + $0x48] sm:$0xf] %v189
                %v191 = vld [vmem:[%s151 + $0x8c] sm:$0xf]
                %192 = vst [vmem:[%s152 + $0x4c] sm:$0xf] %v191
                %v193 = vld [vmem:[%s151 + $0x90] sm:$0xf]
                %194 = vst [vmem:[%s152 + $0x50] sm:$0xf] %v193
                %v195 = vld [vmem:[%s151 + $0x94] sm:$0xf]
                %196 = vst [vmem:[%s152 + $0x54] sm:$0xf] %v195
                %v197 = vld [vmem:[%s151 + $0x98] sm:$0xf]
                %198 = vst [vmem:[%s152 + $0x58] sm:$0xf] %v197
                %v199 = vld [vmem:[%s151 + $0x9c] sm:$0xf]
                %200 = vst [vmem:[%s152 + $0x5c] sm:$0xf] %v199
                %v201 = vld [vmem:[%s151 + $0xc0] sm:$0xf]
                %202 = vst [vmem:[%s152 + $0x60] sm:$0xf] %v201
                %v203 = vld [vmem:[%s151 + $0xc4] sm:$0xf]
                %204 = vst [vmem:[%s152 + $0x64] sm:$0xf] %v203
                %v205 = vld [vmem:[%s151 + $0xc8] sm:$0xf]
                %206 = vst [vmem:[%s152 + $0x68] sm:$0xf] %v205
                %v207 = vld [vmem:[%s151 + $0xcc] sm:$0xf]
                %208 = vst [vmem:[%s152 + $0x6c] sm:$0xf] %v207
                %v209 = vld [vmem:[%s151 + $0xd0] sm:$0xf]
                %210 = vst [vmem:[%s152 + $0x70] sm:$0xf] %v209
                %v211 = vld [vmem:[%s151 + $0xd4] sm:$0xf]
                %212 = vst [vmem:[%s152 + $0x74] sm:$0xf] %v211
                %v213 = vld [vmem:[%s151 + $0xd8] sm:$0xf]
                %214 = vst [vmem:[%s152 + $0x78] sm:$0xf] %v213
                %v215 = vld [vmem:[%s151 + $0xdc] sm:$0xf]
                %216 = vst [vmem:[%s152 + $0x7c] sm:$0xf] %v215
              $region45: #{ace_forward.3} parent=39 // loop_footer
                %s150 = sadd.s32 1, %s146
              $region46: #{ace_forward.3} parent=39 // loop_footer_branch
                %145 = sbr.rel target = $region42
              $region47: #{ace_forward.3} parent=39 // loop_exit
                _
            $region40: #{ace_forward.3} parent=31 // pred_fallthru
              _
          $region32: #{ace_forward.3} parent=27 // pred_fallthru
            _
          %300 = vnop
        $region28: #{ace_forward.3} parent=23 // pred_fallthru
          _
      $region24: #{ace_forward.3} parent=5 // pred_fallthru
        _
      %p301 = scmp.le.s32.totalorder 1, %s9
      %p302 = scmp.lt.s32.totalorder %s9, 3
      %p303 = pnand %p301, %p302
      %p304 = pneg %p303
      // Predicated region
      $region66: #{ace_forward.3} parent=5 // pred_check
        _
      $region67: #{ace_forward.3} parent=5 // pred_check_branch
        %306 = sbr.rel (%p303) target = $region69
      $region68: #{ace_forward.3} parent=5 // pred_region
        %s307 = ssub.s32 %s9, 1
        %s308 = sand.u32 %s22, 1
        %s309 = sand.u32 %s22, 1
        %s310 = smul.addr %s309, 128
        %s311 = scalar_lea.vmem [#allocation2], %s310
        // Predicated region
        $region70: #{ace_forward.3} parent=68 // pred_check
          %p312 = pneg %p35
        $region71: #{ace_forward.3} parent=68 // pred_check_branch
          %314 = sbr.rel (%p312) target = $region73
        $region72: #{ace_forward.3} parent=68 // pred_region
          _
        $region73: #{ace_forward.3} parent=68 // pred_fallthru
          _
        %s315 = sand.u32 %s22, 1
        %s316 = sand.u32 %s22, 1
        %s317 = smul.addr %s316, 128
        %s318 = scalar_lea.vmem [#allocation2], %s317
        %p319 = pneg %p35
        %p320 = pneg %p32
        %p321 = pneg %p56
        %p322 = pneg %p53
        %p323 = pneg %p77
        %p324 = pneg %p74
        %p325 = pneg %p103
        %p326 = pneg %p100
        %s327 = smul.u32 8, %s14
        %p328 = scmp.lt.s32.totalorder %s327, 15
        %s329 = scalar_select %p328, %s327, 15
        %s330 = smul.addr %s329, 4
        %s331 = scalar_lea.vmem %s3, %s330
        %s332 = smul.u32 8, %s14
        %s333 = smul.u32 8, %s14
        %p334 = scmp.lt.s32.totalorder %s333, 15
        %s335 = scalar_select %p334, %s333, 15
        %s336 = smul.addr %s335, 4
        %s337 = scalar_lea.vmem %s3, %s336
        %s338 = smul.u32 8, %s14
        %v340 = vld [vmem:[%s311] sm:$0xf]
        %v341 = vld [vmem:[%s311 + $0x4] sm:$0xf]
        %v342 = vld [vmem:[%s311 + $0x8] sm:$0xf]
        %v343 = vld [vmem:[%s311 + $0xc] sm:$0xf]
        %v344 = vld [vmem:[%s311 + $0x10] sm:$0xf]
        %v345 = vld [vmem:[%s311 + $0x14] sm:$0xf]
        %v346 = vld [vmem:[%s311 + $0x18] sm:$0xf]
        %v347 = vld [vmem:[%s311 + $0x1c] sm:$0xf]
        %v348 = vld [vmem:[%s311 + $0x20] sm:$0xf]
        %v349 = vld [vmem:[%s311 + $0x24] sm:$0xf]
        %v350 = vld [vmem:[%s311 + $0x28] sm:$0xf]
        %v351 = vld [vmem:[%s311 + $0x2c] sm:$0xf]
        %v352 = vld [vmem:[%s311 + $0x30] sm:$0xf]
        %v353 = vld [vmem:[%s311 + $0x34] sm:$0xf]
        %v354 = vld [vmem:[%s311 + $0x38] sm:$0xf]
        %v355 = vld [vmem:[%s311 + $0x3c] sm:$0xf]
        %v356 = vld [vmem:[%s311 + $0x40] sm:$0xf]
        %v357 = vld [vmem:[%s311 + $0x44] sm:$0xf]
        %v358 = vld [vmem:[%s311 + $0x48] sm:$0xf]
        %v359 = vld [vmem:[%s311 + $0x4c] sm:$0xf]
        %v360 = vld [vmem:[%s311 + $0x50] sm:$0xf]
        %v361 = vld [vmem:[%s311 + $0x54] sm:$0xf]
        %v362 = vld [vmem:[%s311 + $0x58] sm:$0xf]
        %v363 = vld [vmem:[%s311 + $0x5c] sm:$0xf]
        %v364 = vld [vmem:[%s311 + $0x60] sm:$0xf]
        %v365 = vld [vmem:[%s311 + $0x64] sm:$0xf]
        %v366 = vld [vmem:[%s311 + $0x68] sm:$0xf]
        %v367 = vld [vmem:[%s311 + $0x6c] sm:$0xf]
        %v368 = vld [vmem:[%s311 + $0x70] sm:$0xf]
        %v369 = vld [vmem:[%s311 + $0x74] sm:$0xf]
        %v370 = vld [vmem:[%s311 + $0x78] sm:$0xf]
        %v371 = vld [vmem:[%s311 + $0x7c] sm:$0xf]
        %v372 = vld [vmem:[%s1] sm:$0xf]
        %v373 = vld [vmem:[%s1 + $0x4] sm:$0xf]
        %v374 = vld [vmem:[%s1 + $0x8] sm:$0xf]
        %v375 = vld [vmem:[%s1 + $0xc] sm:$0xf]
        %v376 = vld [vmem:[%s1 + $0x10] sm:$0xf]
        %v377 = vld [vmem:[%s1 + $0x14] sm:$0xf]
        %v378 = vld [vmem:[%s1 + $0x18] sm:$0xf]
        %v379 = vld [vmem:[%s1 + $0x1c] sm:$0xf]
        %v380 = vld [vmem:[%s1 + $0x20] sm:$0xf]
        %v381 = vld [vmem:[%s1 + $0x24] sm:$0xf]
        %v382 = vld [vmem:[%s1 + $0x28] sm:$0xf]
        %v383 = vld [vmem:[%s1 + $0x2c] sm:$0xf]
        %v384 = vld [vmem:[%s1 + $0x30] sm:$0x3]
        %v417 = vunpack.c.l.b16 %v340
        %v418 = vunpack.c.l.b16 %v341
        %v419 = vunpack.c.l.b16 %v342
        %v420 = vunpack.c.l.b16 %v343
        %v421 = vunpack.c.l.b16 %v344
        %v422 = vunpack.c.l.b16 %v345
        %v423 = vunpack.c.l.b16 %v346
        %v424 = vunpack.c.l.b16 %v347
        %v425 = vunpack.c.l.b16 %v348
        %v426 = vunpack.c.l.b16 %v349
        %v427 = vunpack.c.l.b16 %v350
        %v428 = vunpack.c.l.b16 %v351
        %v429 = vunpack.c.l.b16 %v352
        %v430 = vunpack.c.l.b16 %v353
        %v431 = vunpack.c.l.b16 %v354
        %v432 = vunpack.c.l.b16 %v355
        %v433 = vunpack.c.l.b16 %v356
        %v434 = vunpack.c.l.b16 %v357
        %v435 = vunpack.c.l.b16 %v358
        %v436 = vunpack.c.l.b16 %v359
        %v437 = vunpack.c.l.b16 %v360
        %v438 = vunpack.c.l.b16 %v361
        %v439 = vunpack.c.l.b16 %v362
        %v440 = vunpack.c.l.b16 %v363
        %v441 = vunpack.c.l.b16 %v364
        %v442 = vunpack.c.l.b16 %v365
        %v443 = vunpack.c.l.b16 %v366
        %v444 = vunpack.c.l.b16 %v367
        %v445 = vunpack.c.l.b16 %v368
        %v446 = vunpack.c.l.b16 %v369
        %v447 = vunpack.c.l.b16 %v370
        %v448 = vunpack.c.l.b16 %v371
        %v449 = vpack.c.b16 %v418, %v417
        %v450 = vpack.c.b16 %v420, %v419
        %v451 = vpack.c.b16 %v422, %v421
        %v452 = vpack.c.b16 %v424, %v423
        %v453 = vpack.c.b16 %v426, %v425
        %v454 = vpack.c.b16 %v428, %v427
        %v455 = vpack.c.b16 %v430, %v429
        %v456 = vpack.c.b16 %v432, %v431
        %v457 = vpack.c.b16 %v434, %v433
        %v458 = vpack.c.b16 %v436, %v435
        %v459 = vpack.c.b16 %v438, %v437
        %v460 = vpack.c.b16 %v440, %v439
        %v461 = vpack.c.b16 %v442, %v441
        %v462 = vpack.c.b16 %v444, %v443
        %v463 = vpack.c.b16 %v446, %v445
        %v464 = vpack.c.b16 %v448, %v447
        %v478 = vunpack.c.l.b16 %v372
        %v479 = vunpack.c.l.b16 %v373
        %v480 = vunpack.c.l.b16 %v374
        %v481 = vunpack.c.l.b16 %v375
        %v482 = vunpack.c.l.b16 %v376
        %v483 = vunpack.c.l.b16 %v377
        %v484 = vunpack.c.l.b16 %v378
        %v485 = vunpack.c.l.b16 %v379
        %v486 = vunpack.c.l.b16 %v380
        %v487 = vunpack.c.l.b16 %v381
        %v488 = vunpack.c.l.b16 %v382
        %v489 = vunpack.c.l.b16 %v383
        %v490 = vunpack.c.l.b16 %v384
        %v491 = vpack.c.b16 %v479, %v478
        %v492 = vpack.c.b16 %v481, %v480
        %v493 = vpack.c.b16 %v483, %v482
        %v494 = vpack.c.b16 %v485, %v484
        %v495 = vpack.c.b16 %v487, %v486
        %v496 = vpack.c.b16 %v489, %v488
        %v497 = vpack.c.b16 %v490, %v490
        %vm504 = vcmask 818176
        %v506 = vsel %vm504, %v449, 0
        %v509 = vsel %vm504, %v450, 0
        %v512 = vsel %vm504, %v451, 0
        %v515 = vsel %vm504, %v452, 0
        %v518 = vsel %vm504, %v453, 0
        %v521 = vsel %vm504, %v454, 0
        %v524 = vsel %vm504, %v455, 0
        %v527 = vsel %vm504, %v456, 0
        %v530 = vsel %vm504, %v457, 0
        %v533 = vsel %vm504, %v458, 0
        %v536 = vsel %vm504, %v459, 0
        %v539 = vsel %vm504, %v460, 0
        %v542 = vsel %vm504, %v461, 0
        %v545 = vsel %vm504, %v462, 0
        %v548 = vsel %vm504, %v463, 0
        %v551 = vsel %vm504, %v464, 0
        %vm553 = vcmask 1041408
        %v555 = vsel %vm553, %v497, 0
        %557 = vmatprep.subr.bf16.mxu0 0
        %558 = vmatpush1.bf16.msra.mxu0 %v491
        %559 = vmatprep.subr.bf16.mxu0 0
        %560 = vmatpush1.bf16.msra.mxu0 %v492
        %561 = vmatprep.subr.bf16.mxu0 0
        %562 = vmatpush1.bf16.msra.mxu0 %v493
        %563 = vmatprep.subr.bf16.mxu0 0
        %564 = vmatpush1.bf16.msra.mxu0 %v494
        %565 = vmatprep.subr.bf16.mxu0 0
        %566 = vmatpush1.bf16.msra.mxu0 %v495
        %567 = vmatprep.subr.bf16.mxu0 0
        %568 = vmatpush1.bf16.msra.mxu0 %v496
        %569 = vmatprep.subr.bf16.mxu0 0
        %570 = vmatpush1.bf16.msra.mxu0 %v555
        %571 = vmatprep.subr.bf16.mxu0 0
        %572 = vmatpush1.bf16.msra.mxu0 0
        %573 = vmatprep.subr.bf16.mxu0 0
        %574 = vmatpush1.bf16.msra.mxu0 0
        %575 = vmatprep.subr.bf16.mxu0 0
        %576 = vmatpush1.bf16.msra.mxu0 0
        %577 = vmatprep.subr.bf16.mxu0 0
        %578 = vmatpush1.bf16.msra.mxu0 0
        %579 = vmatprep.subr.bf16.mxu0 0
        %580 = vmatpush1.bf16.msra.mxu0 0
        %581 = vmatprep.subr.bf16.mxu0 0
        %582 = vmatpush1.bf16.msra.mxu0 0
        %583 = vmatprep.subr.bf16.mxu0 0
        %584 = vmatpush1.bf16.msra.mxu0 0
        %585 = vmatprep.subr.bf16.mxu0 0
        %586 = vmatpush1.bf16.msra.mxu0 0
        %587 = vmatprep.subr.bf16.mxu0 0
        %588 = vmatpush1.bf16.msra.mxu0 0
        %589 = vmatprep.mubr.bf16.mxu0 0
        %590 = vmatmul.mubr.bf16.gmra.mrb[0].mxu0 %v506
        %v591 = vpop.f32.mrb[0].mxu0
        %v592 = vadd.f32 0.0, %v591
        %v593 = vpop.f32.mrb[0].mxu0
        %v594 = vpop.f32.mrb[0].mxu0
        %v595 = vadd.f32 0.0, %v594
        %v596 = vpop.f32.mrb[0].mxu0
        %597 = vmatprep.mubr.bf16.mxu0 0
        %598 = vmatmul.mubr.bf16.gmra.mrb[0].mxu0 %v509
        %v599 = vpop.f32.mrb[0].mxu0
        %v600 = vadd.f32 0.0, %v599
        %v601 = vpop.f32.mrb[0].mxu0
        %v602 = vpop.f32.mrb[0].mxu0
        %v603 = vadd.f32 0.0, %v602
        %v604 = vpop.f32.mrb[0].mxu0
        %605 = vmatprep.mubr.bf16.mxu0 0
        %606 = vmatmul.mubr.bf16.gmra.mrb[0].mxu0 %v512
        %v607 = vpop.f32.mrb[0].mxu0
        %v608 = vadd.f32 0.0, %v607
        %v609 = vpop.f32.mrb[0].mxu0
        %v610 = vpop.f32.mrb[0].mxu0
        %v611 = vadd.f32 0.0, %v610
        %v612 = vpop.f32.mrb[0].mxu0
        %613 = vmatprep.mubr.bf16.mxu0 0
        %614 = vmatmul.mubr.bf16.gmra.mrb[0].mxu0 %v515
        %v615 = vpop.f32.mrb[0].mxu0
        %v616 = vadd.f32 0.0, %v615
        %v617 = vpop.f32.mrb[0].mxu0
        %v618 = vpop.f32.mrb[0].mxu0
        %v619 = vadd.f32 0.0, %v618
        %v620 = vpop.f32.mrb[0].mxu0
        %621 = vmatprep.mubr.bf16.mxu0 0
        %622 = vmatmul.mubr.bf16.gmra.mrb[0].mxu0 %v518
        %v623 = vpop.f32.mrb[0].mxu0
        %v624 = vadd.f32 0.0, %v623
        %v625 = vpop.f32.mrb[0].mxu0
        %v626 = vpop.f32.mrb[0].mxu0
        %v627 = vadd.f32 0.0, %v626
        %v628 = vpop.f32.mrb[0].mxu0
        %629 = vmatprep.mubr.bf16.mxu0 0
        %630 = vmatmul.mubr.bf16.gmra.mrb[0].mxu0 %v521
        %v631 = vpop.f32.mrb[0].mxu0
        %v632 = vadd.f32 0.0, %v631
        %v633 = vpop.f32.mrb[0].mxu0
        %v634 = vpop.f32.mrb[0].mxu0
        %v635 = vadd.f32 0.0, %v634
        %v636 = vpop.f32.mrb[0].mxu0
        %637 = vmatprep.mubr.bf16.mxu0 0
        %638 = vmatmul.mubr.bf16.gmra.mrb[0].mxu0 %v524
        %v639 = vpop.f32.mrb[0].mxu0
        %v640 = vadd.f32 0.0, %v639
        %v641 = vpop.f32.mrb[0].mxu0
        %v642 = vpop.f32.mrb[0].mxu0
        %v643 = vadd.f32 0.0, %v642
        %v644 = vpop.f32.mrb[0].mxu0
        %645 = vmatprep.mubr.bf16.mxu0 0
        %646 = vmatmul.mubr.bf16.gmra.mrb[0].mxu0 %v527
        %v647 = vpop.f32.mrb[0].mxu0
        %v648 = vadd.f32 0.0, %v647
        %v649 = vpop.f32.mrb[0].mxu0
        %v650 = vpop.f32.mrb[0].mxu0
        %v651 = vadd.f32 0.0, %v650
        %v652 = vpop.f32.mrb[0].mxu0
        %653 = vmatprep.mubr.bf16.mxu0 0
        %654 = vmatmul.mubr.bf16.gmra.mrb[0].mxu0 %v530
        %v655 = vpop.f32.mrb[0].mxu0
        %v656 = vadd.f32 0.0, %v655
        %v657 = vpop.f32.mrb[0].mxu0
        %v658 = vpop.f32.mrb[0].mxu0
        %v659 = vadd.f32 0.0, %v658
        %v660 = vpop.f32.mrb[0].mxu0
        %661 = vmatprep.mubr.bf16.mxu0 0
        %662 = vmatmul.mubr.bf16.gmra.mrb[0].mxu0 %v533
        %v663 = vpop.f32.mrb[0].mxu0
        %v664 = vadd.f32 0.0, %v663
        %v665 = vpop.f32.mrb[0].mxu0
        %v666 = vpop.f32.mrb[0].mxu0
        %v667 = vadd.f32 0.0, %v666
        %v668 = vpop.f32.mrb[0].mxu0
        %669 = vmatprep.mubr.bf16.mxu0 0
        %670 = vmatmul.mubr.bf16.gmra.mrb[0].mxu0 %v536
        %v671 = vpop.f32.mrb[0].mxu0
        %v672 = vadd.f32 0.0, %v671
        %v673 = vpop.f32.mrb[0].mxu0
        %v674 = vpop.f32.mrb[0].mxu0
        %v675 = vadd.f32 0.0, %v674
        %v676 = vpop.f32.mrb[0].mxu0
        %677 = vmatprep.mubr.bf16.mxu0 0
        %678 = vmatmul.mubr.bf16.gmra.mrb[0].mxu0 %v539
        %v679 = vpop.f32.mrb[0].mxu0
        %v680 = vadd.f32 0.0, %v679
        %v681 = vpop.f32.mrb[0].mxu0
        %v682 = vpop.f32.mrb[0].mxu0
        %v683 = vadd.f32 0.0, %v682
        %v684 = vpop.f32.mrb[0].mxu0
        %685 = vmatprep.mubr.bf16.mxu0 0
        %686 = vmatmul.mubr.bf16.gmra.mrb[0].mxu0 %v542
        %v687 = vpop.f32.mrb[0].mxu0
        %v688 = vadd.f32 0.0, %v687
        %v689 = vpop.f32.mrb[0].mxu0
        %v690 = vpop.f32.mrb[0].mxu0
        %v691 = vadd.f32 0.0, %v690
        %v692 = vpop.f32.mrb[0].mxu0
        %693 = vmatprep.mubr.bf16.mxu0 0
        %694 = vmatmul.mubr.bf16.gmra.mrb[0].mxu0 %v545
        %v695 = vpop.f32.mrb[0].mxu0
        %v696 = vadd.f32 0.0, %v695
        %v697 = vpop.f32.mrb[0].mxu0
        %v698 = vpop.f32.mrb[0].mxu0
        %v699 = vadd.f32 0.0, %v698
        %v700 = vpop.f32.mrb[0].mxu0
        %701 = vmatprep.mubr.bf16.mxu0 0
        %702 = vmatmul.mubr.bf16.gmra.mrb[0].mxu0 %v548
        %v703 = vpop.f32.mrb[0].mxu0
        %v704 = vadd.f32 0.0, %v703
        %v705 = vpop.f32.mrb[0].mxu0
        %v706 = vpop.f32.mrb[0].mxu0
        %v707 = vadd.f32 0.0, %v706
        %v708 = vpop.f32.mrb[0].mxu0
        %709 = vmatprep.mubr.bf16.mxu0 0
        %710 = vmatmul.mubr.bf16.gmra.mrb[0].mxu0 %v551
        %v711 = vpop.f32.mrb[0].mxu0
        %v712 = vadd.f32 0.0, %v711
        %v713 = vpop.f32.mrb[0].mxu0
        %v714 = vpop.f32.mrb[0].mxu0
        %v715 = vadd.f32 0.0, %v714
        %v716 = vpop.f32.mrb[0].mxu0
        %717 = vdwg.mxu0
        %v718 = vmax.f32 %v592, %v624
        %v719 = vmax.f32 %v595, %v627
        %v720 = vmax.f32 %v600, %v632
        %v721 = vmax.f32 %v603, %v635
        %v722 = vmax.f32 %v608, %v640
        %v723 = vmax.f32 %v611, %v643
        %v724 = vmax.f32 %v616, %v648
        %v725 = vmax.f32 %v619, %v651
        %v726 = vmax.f32 %v656, %v688
        %v727 = vmax.f32 %v659, %v691
        %v728 = vmax.f32 %v664, %v696
        %v729 = vmax.f32 %v667, %v699
        %v730 = vmax.f32 %v672, %v704
        %v731 = vmax.f32 %v675, %v707
        %v732 = vmax.f32 %v680, %v712
        %v733 = vmax.f32 %v683, %v715
        %v734 = vmax.f32 %v718, %v726
        %v735 = vmax.f32 %v719, %v727
        %v736 = vmax.f32 %v720, %v728
        %v737 = vmax.f32 %v721, %v729
        %v738 = vmax.f32 %v722, %v730
        %v739 = vmax.f32 %v723, %v731
        %v740 = vmax.f32 %v724, %v732
        %v741 = vmax.f32 %v725, %v733
        %v742 = vld [vmem:[%s2] sm:$0x1]
        %v744 = vlaneseq
        %v745 = vshrl.u32 %v744, 7
        %v746 = vsub.s32 0, %v745
        %v747 = vrot.slane %v742, %v746
        %v749 = vadd.f32 %v734, %v747
        %v750 = vadd.f32 %v735, %v747
        %v751 = vadd.f32 %v736, %v747
        %v752 = vadd.f32 %v737, %v747
        %v753 = vadd.f32 %v738, %v747
        %v754 = vadd.f32 %v739, %v747
        %v755 = vadd.f32 %v740, %v747
        %v756 = vadd.f32 %v741, %v747
        %v757 = vmax.f32 %v749, 0.0
        %v758 = vmax.f32 %v750, 0.0
        %v759 = vmax.f32 %v751, 0.0
        %v760 = vmax.f32 %v752, 0.0
        %v761 = vmax.f32 %v753, 0.0
        %v762 = vmax.f32 %v754, 0.0
        %v763 = vmax.f32 %v755, 0.0
        %v764 = vmax.f32 %v756, 0.0
        %v765 = vpack.c.bf16 %v758, %v757
        %v766 = vpack.c.bf16 %v760, %v759
        %v767 = vpack.c.bf16 %v762, %v761
        %v768 = vpack.c.bf16 %v764, %v763
        %v773 = vunpack.c.l.b16 %v765
        %v774 = vunpack.c.h.b16 %v765
        %v775 = vunpack.c.l.b16 %v766
        %v776 = vunpack.c.h.b16 %v766
        %v777 = vunpack.c.l.b16 %v767
        %v778 = vunpack.c.h.b16 %v767
        %v779 = vunpack.c.l.b16 %v768
        %v780 = vunpack.c.h.b16 %v768
        %v781 = vpack.c.b16 %v773, %v773
        %v782 = vpack.c.b16 %v774, %v774
        %v783 = vpack.c.b16 %v775, %v775
        %v784 = vpack.c.b16 %v776, %v776
        %v785 = vpack.c.b16 %v777, %v777
        %v786 = vpack.c.b16 %v778, %v778
        %v787 = vpack.c.b16 %v779, %v779
        %v788 = vpack.c.b16 %v780, %v780
        %797 = vst [vmem:[%s337] sm:$0xf] %v781
        %798 = vst [vmem:[%s337 + $0x4] sm:$0xf] %v782
        %799 = vst [vmem:[%s337 + $0x8] sm:$0xf] %v783
        %800 = vst [vmem:[%s337 + $0xc] sm:$0xf] %v784
        %801 = vst [vmem:[%s337 + $0x10] sm:$0xf] %v785
        %802 = vst [vmem:[%s337 + $0x14] sm:$0xf] %v786
        %803 = vst [vmem:[%s337 + $0x18] sm:$0xf] %v787
        %804 = vst [vmem:[%s337 + $0x1c] sm:$0xf] %v788
        %s805 = smul.u32 8, %s14
        %p806 = scmp.lt.s32.totalorder %s805, 15
        %s807 = scalar_select %p806, %s805, 15
        %s808 = smul.addr %s807, 4
        %s809 = scalar_lea.vmem %s3, %s808
        // Predicated region
        $region74: #{ace_forward.3} parent=68 // pred_check
          %p810 = pneg %p100
        $region75: #{ace_forward.3} parent=68 // pred_check_branch
          %812 = sbr.rel (%p810) target = $region77
        $region76: #{ace_forward.3} parent=68 // pred_region
          %s813 = smul.u32 8, %s14
        $region77: #{ace_forward.3} parent=68 // pred_fallthru
          _
      $region69: #{ace_forward.3} parent=5 // pred_fallthru
        _
      %p814 = scmp.le.s32.totalorder 2, %s9
      // Predicated region
      $region78: #{ace_forward.3} parent=5 // pred_check
        %p815 = pneg %p814
      $region79: #{ace_forward.3} parent=5 // pred_check_branch
        %817 = sbr.rel (%p815) target = $region81
      $region80: #{ace_forward.3} parent=5 // pred_region
        %s818 = ssub.s32 %s9, 2
        // Predicated region
        $region82: #{ace_forward.3} parent=80 // pred_check
          %p819 = pneg %p106
        $region83: #{ace_forward.3} parent=80 // pred_check_branch
          %821 = sbr.rel (%p819) target = $region85
        $region84: #{ace_forward.3} parent=80 // pred_region
          %s822 = smul.u32 8, %s15
          %p823 = scmp.lt.s32.totalorder %s822, 15
          %s824 = scalar_select %p823, %s822, 15
          %s825 = smul.addr %s824, 4
          %s826 = scalar_lea.vmem %s3, %s825
        $region85: #{ace_forward.3} parent=80 // pred_fallthru
          _
      $region81: #{ace_forward.3} parent=5 // pred_fallthru
        _
    $region6: #{ace_forward.3} parent=1 // loop_footer
      %s13 = sadd.s32 1, %s9
    $region7: #{ace_forward.3} parent=1 // loop_footer_branch
      %8 = sbr.rel target = $region3
    $region8: #{ace_forward.3} parent=1 // loop_exit
      _

// kernel: ace_forward.4
$region0: #{ace_forward.4}
  #allocation0 [shape = 'u32[]', space=smem, size = 0x4, offset = 0x4, fixed_abs, tag = 'smem constant byte address 0x4 - core index']
  #allocation1 [shape = 'u32[144,128]{1,0:T(1,128)}', space=vmem, size = 0x12000, scoped, tag = 'internal scratch']
  %s0 = inlined_call_operand.vmem [shape: bf16[4,64,1600], index: 0, kind: input, shape index: {}]
  %s1 = inlined_call_operand.vmem [shape: bf16[1600,128], index: 1, kind: input, shape index: {}]
  %s2 = inlined_call_operand.vmem [shape: f32[1,128], index: 2, kind: input, shape index: {}]
  %s3 = inlined_call_operand.vmem [shape: bf16[64,128], index: 3, kind: output, shape index: {}]
  %s4 = sld [smem:[#allocation0]]
  $region71: #{ace_forward.4} parent=0
    _
  %s6 = ssub.s32 1, %s4
  %s7 = scalar_select 0, %s6, %s4
  $region1: #{ace_forward.4} parent=0
    #allocation2 [shape = 'u8[851968]{0}', space=vmem, size = 0xd0000, scoped, tag = 'input window, operand 0']
    loop: start=0, step=1, limit=4
    $region2: #{ace_forward.4} parent=1 // loop_pre_header
      _
    $region3: #{ace_forward.4} parent=1 // loop_header
      %s9 = sphi 0, %s13
      %p10 = scmp.ge.s32.totalorder %s9, 4
      %s19 = sphi 0, %s21
      %s22 = sphi 0, %s19
      %s23 = sphi 0, %s22
      %s39 = sphi 0, %s23
      %s43 = sphi 0, %s43
      %s45 = sphi 0, %s43
      %s46 = sphi 0, %s45
      %s60 = sphi 0, %s46
      %s64 = sphi 0, %s64
      %s66 = sphi 0, %s64
      %s67 = sphi 0, %s66
      %s81 = sphi 0, %s67
      %s87 = sphi 0, %s89
      %s90 = sphi 0, %s87
      %s91 = sphi 0, %s90
      %s107 = sphi 0, %s91
    $region4: #{ace_forward.4} parent=1 // loop_header_branch
      %12 = sbr.rel (%p10) target = $region8
    $region5: #{ace_forward.4} parent=1 // loop_body
      %s14 = ssub.s32 %s9, 1
      %s15 = ssub.s32 %s9, 2
      %s16 = sadd.s32 %s9, 1
      %s17 = ssub.s32 %s9, %s16
      %p18 = scmp.eq.s32.totalorder %s17, 0
      %s20 = sadd.s32 %s19, 1
      %s21 = scalar_select %p18, %s19, %s20
      %p24 = pneg %p18
      %p25 = scmp.eq.s32.totalorder %s9, 1
      %p26 = por %p24, %p25
      %p27 = scmp.ne.s32.totalorder %s19, %s22
      %p28 = scmp.eq.s32.totalorder %s9, 0
      %p29 = por %p27, %p28
      %p30 = scmp.ne.s32.totalorder %s19, %s22
      %p31 = scmp.eq.s32.totalorder %s14, 1
      %p32 = por %p30, %p31
      %p33 = scmp.ne.s32.totalorder %s22, %s23
      %p34 = scmp.eq.s32.totalorder %s14, 0
      %p35 = por %p33, %p34
      %p36 = scmp.ne.s32.totalorder %s22, %s23
      %p37 = scmp.eq.s32.totalorder %s15, 1
      %p38 = por %p36, %p37
      %p40 = scmp.ne.s32.totalorder %s23, %s39
      %p41 = scmp.eq.s32.totalorder %s15, 0
      %p42 = por %p40, %p41
      %s44 = sadd.s32 %s43, 1
      %p47 = scmp.eq.s32.totalorder %s9, 1
      %p48 = scmp.ne.s32.totalorder %s43, %s45
      %p49 = scmp.eq.s32.totalorder %s9, 0
      %p50 = por %p48, %p49
      %p51 = scmp.ne.s32.totalorder %s43, %s45
      %p52 = scmp.eq.s32.totalorder %s14, 1
      %p53 = por %p51, %p52
      %p54 = scmp.ne.s32.totalorder %s45, %s46
      %p55 = scmp.eq.s32.totalorder %s14, 0
      %p56 = por %p54, %p55
      %p57 = scmp.ne.s32.totalorder %s45, %s46
      %p58 = scmp.eq.s32.totalorder %s15, 1
      %p59 = por %p57, %p58
      %p61 = scmp.ne.s32.totalorder %s46, %s60
      %p62 = scmp.eq.s32.totalorder %s15, 0
      %p63 = por %p61, %p62
      %s65 = sadd.s32 %s64, 1
      %p68 = scmp.eq.s32.totalorder %s9, 1
      %p69 = scmp.ne.s32.totalorder %s64, %s66
      %p70 = scmp.eq.s32.totalorder %s9, 0
      %p71 = por %p69, %p70
      %p72 = scmp.ne.s32.totalorder %s64, %s66
      %p73 = scmp.eq.s32.totalorder %s14, 1
      %p74 = por %p72, %p73
      %p75 = scmp.ne.s32.totalorder %s66, %s67
      %p76 = scmp.eq.s32.totalorder %s14, 0
      %p77 = por %p75, %p76
      %p78 = scmp.ne.s32.totalorder %s66, %s67
      %p79 = scmp.eq.s32.totalorder %s15, 1
      %p80 = por %p78, %p79
      %p82 = scmp.ne.s32.totalorder %s67, %s81
      %p83 = scmp.eq.s32.totalorder %s15, 0
      %p84 = por %p82, %p83
      %s85 = ssub.s32 %s9, %s16
      %p86 = scmp.eq.s32.totalorder %s85, 0
      %s88 = sadd.s32 %s87, 1
      %s89 = scalar_select %p86, %s87, %s88
      %p92 = pneg %p86
      %p93 = scmp.eq.s32.totalorder %s9, 1
      %p94 = por %p92, %p93
      %p95 = scmp.ne.s32.totalorder %s87, %s90
      %p96 = scmp.eq.s32.totalorder %s9, 0
      %p97 = por %p95, %p96
      %p98 = scmp.ne.s32.totalorder %s87, %s90
      %p99 = scmp.eq.s32.totalorder %s14, 1
      %p100 = por %p98, %p99
      %p101 = scmp.ne.s32.totalorder %s90, %s91
      %p102 = scmp.eq.s32.totalorder %s14, 0
      %p103 = por %p101, %p102
      %p104 = scmp.ne.s32.totalorder %s90, %s91
      %p105 = scmp.eq.s32.totalorder %s15, 1
      %p106 = por %p104, %p105
      %p108 = scmp.ne.s32.totalorder %s91, %s107
      %p109 = scmp.eq.s32.totalorder %s15, 0
      %p110 = por %p108, %p109
      %p111 = scmp.le.s32.totalorder 1, %s9
      %p112 = scmp.lt.s32.totalorder %s9, 3
      %p113 = pnand %p111, %p112
      %p114 = pneg %p113
      // Predicated region
      $region9: #{ace_forward.4} parent=5 // pred_check
        _
      $region10: #{ace_forward.4} parent=5 // pred_check_branch
        %116 = sbr.rel (%p113) target = $region12
      $region11: #{ace_forward.4} parent=5 // pred_region
        %s117 = ssub.s32 %s9, 1
        // Predicated region
        $region13: #{ace_forward.4} parent=11 // pred_check
          %p118 = pneg %p56
        $region14: #{ace_forward.4} parent=11 // pred_check_branch
          %120 = sbr.rel (%p118) target = $region16
        $region15: #{ace_forward.4} parent=11 // pred_region
          _
        $region16: #{ace_forward.4} parent=11 // pred_fallthru
          _
        // Predicated region
        $region17: #{ace_forward.4} parent=11 // pred_check
          %p121 = pneg %p77
        $region18: #{ace_forward.4} parent=11 // pred_check_branch
          %123 = sbr.rel (%p121) target = $region20
        $region19: #{ace_forward.4} parent=11 // pred_region
          _
        $region20: #{ace_forward.4} parent=11 // pred_fallthru
          _
      $region12: #{ace_forward.4} parent=5 // pred_fallthru
        _
      %p124 = scmp.lt.s32.totalorder %s9, 2
      // Predicated region
      $region21: #{ace_forward.4} parent=5 // pred_check
        %p125 = pneg %p124
      $region22: #{ace_forward.4} parent=5 // pred_check_branch
        %127 = sbr.rel (%p125) target = $region24
      $region23: #{ace_forward.4} parent=5 // pred_region
        // Predicated region
        $region25: #{ace_forward.4} parent=23 // pred_check
          %p128 = pneg %p29
        $region26: #{ace_forward.4} parent=23 // pred_check_branch
          %130 = sbr.rel (%p128) target = $region28
        $region27: #{ace_forward.4} parent=23 // pred_region
          %s131 = sand.u32 %s19, 1
          %s132 = sand.u32 %s19, 1
          %s133 = smul.addr %s132, 832
          %s134 = scalar_lea.vmem [#allocation2], %s133
          %s135 = smul.u32 4, %s9
          %s136 = smul.addr %s135, 13
          %s137 = smul.addr %s136, 4
          %s138 = scalar_lea.vmem %s0, %s137
          // Predicated region
          $region29: #{ace_forward.4} parent=27 // pred_check
            _
          $region30: #{ace_forward.4} parent=27 // pred_check_branch
            %140 = sbr.rel (0) target = $region32
          $region31: #{ace_forward.4} parent=27 // pred_region
            // Predicated region
            $region33: #{ace_forward.4} parent=31 // pred_check
              _
            $region34: #{ace_forward.4} parent=31 // pred_check_branch
              %142 = sbr.rel (0) target = $region36
            $region35: #{ace_forward.4} parent=31 // pred_region
              %s143 = scalar_lea.vmem %s138, 48
              %s144 = scalar_lea.vmem %s134, 48 [#allocation2]
              loop: start=0, step=1, limit=1
              $region37: #{ace_forward.4} parent=35 // loop_pre_header
                _
              $region38: #{ace_forward.4} parent=35 // loop_header
                %s146 = sphi 0, %s150
                %p147 = scmp.ge.s32.totalorder %s146, 1
                %s151 = sphi %s138, %s138
                %s152 = sphi %s134, %s134
              $region39: #{ace_forward.4} parent=35 // loop_header_branch
                %149 = sbr.rel (%p147) target = $region43
              $region40: #{ace_forward.4} parent=35 // loop_body
                %v153 = vld [vmem:[%s151] sm:$0xff]
                %154 = vst [vmem:[%s152] sm:$0xff] %v153
                %v155 = vld [vmem:[%s151 + $0x8] sm:$0xff]
                %156 = vst [vmem:[%s152 + $0x8] sm:$0xff] %v155
                %v157 = vld [vmem:[%s151 + $0x10] sm:$0xff]
                %158 = vst [vmem:[%s152 + $0x10] sm:$0xff] %v157
                %v159 = vld [vmem:[%s151 + $0x18] sm:$0xff]
                %160 = vst [vmem:[%s152 + $0x18] sm:$0xff] %v159
                %v161 = vld [vmem:[%s151 + $0x20] sm:$0xff]
                %162 = vst [vmem:[%s152 + $0x20] sm:$0xff] %v161
                %v163 = vld [vmem:[%s151 + $0x28] sm:$0xff]
                %164 = vst [vmem:[%s152 + $0x28] sm:$0xff] %v163
                %v165 = vld [vmem:[%s151 + $0x34] sm:$0xff]
                %166 = vst [vmem:[%s152 + $0x34] sm:$0xff] %v165
                %v167 = vld [vmem:[%s151 + $0x3c] sm:$0xff]
                %168 = vst [vmem:[%s152 + $0x3c] sm:$0xff] %v167
                %v169 = vld [vmem:[%s151 + $0x44] sm:$0xff]
                %170 = vst [vmem:[%s152 + $0x44] sm:$0xff] %v169
                %v171 = vld [vmem:[%s151 + $0x4c] sm:$0xff]
                %172 = vst [vmem:[%s152 + $0x4c] sm:$0xff] %v171
                %v173 = vld [vmem:[%s151 + $0x54] sm:$0xff]
                %174 = vst [vmem:[%s152 + $0x54] sm:$0xff] %v173
                %v175 = vld [vmem:[%s151 + $0x5c] sm:$0xff]
                %176 = vst [vmem:[%s152 + $0x5c] sm:$0xff] %v175
                %v177 = vld [vmem:[%s151 + $0x68] sm:$0xff]
                %178 = vst [vmem:[%s152 + $0x68] sm:$0xff] %v177
                %v179 = vld [vmem:[%s151 + $0x70] sm:$0xff]
                %180 = vst [vmem:[%s152 + $0x70] sm:$0xff] %v179
                %v181 = vld [vmem:[%s151 + $0x78] sm:$0xff]
                %182 = vst [vmem:[%s152 + $0x78] sm:$0xff] %v181
                %v183 = vld [vmem:[%s151 + $0x80] sm:$0xff]
                %184 = vst [vmem:[%s152 + $0x80] sm:$0xff] %v183
                %v185 = vld [vmem:[%s151 + $0x88] sm:$0xff]
                %186 = vst [vmem:[%s152 + $0x88] sm:$0xff] %v185
                %v187 = vld [vmem:[%s151 + $0x90] sm:$0xff]
                %188 = vst [vmem:[%s152 + $0x90] sm:$0xff] %v187
                %v189 = vld [vmem:[%s151 + $0x9c] sm:$0xff]
                %190 = vst [vmem:[%s152 + $0x9c] sm:$0xff] %v189
                %v191 = vld [vmem:[%s151 + $0xa4] sm:$0xff]
                %192 = vst [vmem:[%s152 + $0xa4] sm:$0xff] %v191
                %v193 = vld [vmem:[%s151 + $0xac] sm:$0xff]
                %194 = vst [vmem:[%s152 + $0xac] sm:$0xff] %v193
                %v195 = vld [vmem:[%s151 + $0xb4] sm:$0xff]
                %196 = vst [vmem:[%s152 + $0xb4] sm:$0xff] %v195
                %v197 = vld [vmem:[%s151 + $0xbc] sm:$0xff]
                %198 = vst [vmem:[%s152 + $0xbc] sm:$0xff] %v197
                %v199 = vld [vmem:[%s151 + $0xc4] sm:$0xff]
                %200 = vst [vmem:[%s152 + $0xc4] sm:$0xff] %v199
                %v201 = vld [vmem:[%s151 + $0x1a0] sm:$0xff]
                %202 = vst [vmem:[%s152 + $0xd0] sm:$0xff] %v201
                %v203 = vld [vmem:[%s151 + $0x1a8] sm:$0xff]
                %204 = vst [vmem:[%s152 + $0xd8] sm:$0xff] %v203
                %v205 = vld [vmem:[%s151 + $0x1b0] sm:$0xff]
                %206 = vst [vmem:[%s152 + $0xe0] sm:$0xff] %v205
                %v207 = vld [vmem:[%s151 + $0x1b8] sm:$0xff]
                %208 = vst [vmem:[%s152 + $0xe8] sm:$0xff] %v207
                %v209 = vld [vmem:[%s151 + $0x1c0] sm:$0xff]
                %210 = vst [vmem:[%s152 + $0xf0] sm:$0xff] %v209
                %v211 = vld [vmem:[%s151 + $0x1c8] sm:$0xff]
                %212 = vst [vmem:[%s152 + $0xf8] sm:$0xff] %v211
                %v213 = vld [vmem:[%s151 + $0x1d4] sm:$0xff]
                %214 = vst [vmem:[%s152 + $0x104] sm:$0xff] %v213
                %v215 = vld [vmem:[%s151 + $0x1dc] sm:$0xff]
                %216 = vst [vmem:[%s152 + $0x10c] sm:$0xff] %v215
                %v217 = vld [vmem:[%s151 + $0x1e4] sm:$0xff]
                %218 = vst [vmem:[%s152 + $0x114] sm:$0xff] %v217
                %v219 = vld [vmem:[%s151 + $0x1ec] sm:$0xff]
                %220 = vst [vmem:[%s152 + $0x11c] sm:$0xff] %v219
                %v221 = vld [vmem:[%s151 + $0x1f4] sm:$0xff]
                %222 = vst [vmem:[%s152 + $0x124] sm:$0xff] %v221
                %v223 = vld [vmem:[%s151 + $0x1fc] sm:$0xff]
                %224 = vst [vmem:[%s152 + $0x12c] sm:$0xff] %v223
                %v225 = vld [vmem:[%s151 + $0x208] sm:$0xff]
                %226 = vst [vmem:[%s152 + $0x138] sm:$0xff] %v225
                %v227 = vld [vmem:[%s151 + $0x210] sm:$0xff]
                %228 = vst [vmem:[%s152 + $0x140] sm:$0xff] %v227
                %v229 = vld [vmem:[%s151 + $0x218] sm:$0xff]
                %230 = vst [vmem:[%s152 + $0x148] sm:$0xff] %v229
                %v231 = vld [vmem:[%s151 + $0x220] sm:$0xff]
                %232 = vst [vmem:[%s152 + $0x150] sm:$0xff] %v231
                %v233 = vld [vmem:[%s151 + $0x228] sm:$0xff]
                %234 = vst [vmem:[%s152 + $0x158] sm:$0xff] %v233
                %v235 = vld [vmem:[%s151 + $0x230] sm:$0xff]
                %236 = vst [vmem:[%s152 + $0x160] sm:$0xff] %v235
                %v237 = vld [vmem:[%s151 + $0x23c] sm:$0xff]
                %238 = vst [vmem:[%s152 + $0x16c] sm:$0xff] %v237
                %v239 = vld [vmem:[%s151 + $0x244] sm:$0xff]
                %240 = vst [vmem:[%s152 + $0x174] sm:$0xff] %v239
                %v241 = vld [vmem:[%s151 + $0x24c] sm:$0xff]
                %242 = vst [vmem:[%s152 + $0x17c] sm:$0xff] %v241
                %v243 = vld [vmem:[%s151 + $0x254] sm:$0xff]
                %244 = vst [vmem:[%s152 + $0x184] sm:$0xff] %v243
                %v245 = vld [vmem:[%s151 + $0x25c] sm:$0xff]
                %246 = vst [vmem:[%s152 + $0x18c] sm:$0xff] %v245
                %v247 = vld [vmem:[%s151 + $0x264] sm:$0xff]
                %248 = vst [vmem:[%s152 + $0x194] sm:$0xff] %v247
                %v249 = vld [vmem:[%s151 + $0x340] sm:$0xff]
                %250 = vst [vmem:[%s152 + $0x1a0] sm:$0xff] %v249
                %v251 = vld [vmem:[%s151 + $0x348] sm:$0xff]
                %252 = vst [vmem:[%s152 + $0x1a8] sm:$0xff] %v251
                %v253 = vld [vmem:[%s151 + $0x350] sm:$0xff]
                %254 = vst [vmem:[%s152 + $0x1b0] sm:$0xff] %v253
                %v255 = vld [vmem:[%s151 + $0x358] sm:$0xff]
                %256 = vst [vmem:[%s152 + $0x1b8] sm:$0xff] %v255
                %v257 = vld [vmem:[%s151 + $0x360] sm:$0xff]
                %258 = vst [vmem:[%s152 + $0x1c0] sm:$0xff] %v257
                %v259 = vld [vmem:[%s151 + $0x368] sm:$0xff]
                %260 = vst [vmem:[%s152 + $0x1c8] sm:$0xff] %v259
                %v261 = vld [vmem:[%s151 + $0x374] sm:$0xff]
                %262 = vst [vmem:[%s152 + $0x1d4] sm:$0xff] %v261
                %v263 = vld [vmem:[%s151 + $0x37c] sm:$0xff]
                %264 = vst [vmem:[%s152 + $0x1dc] sm:$0xff] %v263
                %v265 = vld [vmem:[%s151 + $0x384] sm:$0xff]
                %266 = vst [vmem:[%s152 + $0x1e4] sm:$0xff] %v265
                %v267 = vld [vmem:[%s151 + $0x38c] sm:$0xff]
                %268 = vst [vmem:[%s152 + $0x1ec] sm:$0xff] %v267
                %v269 = vld [vmem:[%s151 + $0x394] sm:$0xff]
                %270 = vst [vmem:[%s152 + $0x1f4] sm:$0xff] %v269
                %v271 = vld [vmem:[%s151 + $0x39c] sm:$0xff]
                %272 = vst [vmem:[%s152 + $0x1fc] sm:$0xff] %v271
                %v273 = vld [vmem:[%s151 + $0x3a8] sm:$0xff]
                %274 = vst [vmem:[%s152 + $0x208] sm:$0xff] %v273
                %v275 = vld [vmem:[%s151 + $0x3b0] sm:$0xff]
                %276 = vst [vmem:[%s152 + $0x210] sm:$0xff] %v275
                %v277 = vld [vmem:[%s151 + $0x3b8] sm:$0xff]
                %278 = vst [vmem:[%s152 + $0x218] sm:$0xff] %v277
                %v279 = vld [vmem:[%s151 + $0x3c0] sm:$0xff]
                %280 = vst [vmem:[%s152 + $0x220] sm:$0xff] %v279
                %v281 = vld [vmem:[%s151 + $0x3c8] sm:$0xff]
                %282 = vst [vmem:[%s152 + $0x228] sm:$0xff] %v281
                %v283 = vld [vmem:[%s151 + $0x3d0] sm:$0xff]
                %284 = vst [vmem:[%s152 + $0x230] sm:$0xff] %v283
                %v285 = vld [vmem:[%s151 + $0x3dc] sm:$0xff]
                %286 = vst [vmem:[%s152 + $0x23c] sm:$0xff] %v285
                %v287 = vld [vmem:[%s151 + $0x3e4] sm:$0xff]
                %288 = vst [vmem:[%s152 + $0x244] sm:$0xff] %v287
                %v289 = vld [vmem:[%s151 + $0x3ec] sm:$0xff]
                %290 = vst [vmem:[%s152 + $0x24c] sm:$0xff] %v289
                %v291 = vld [vmem:[%s151 + $0x3f4] sm:$0xff]
                %292 = vst [vmem:[%s152 + $0x254] sm:$0xff] %v291
                %v293 = vld [vmem:[%s151 + $0x3fc] sm:$0xff]
                %294 = vst [vmem:[%s152 + $0x25c] sm:$0xff] %v293
                %v295 = vld [vmem:[%s151 + $0x404] sm:$0xff]
                %296 = vst [vmem:[%s152 + $0x264] sm:$0xff] %v295
                %v297 = vld [vmem:[%s151 + $0x4e0] sm:$0xff]
                %298 = vst [vmem:[%s152 + $0x270] sm:$0xff] %v297
                %v299 = vld [vmem:[%s151 + $0x4e8] sm:$0xff]
                %300 = vst [vmem:[%s152 + $0x278] sm:$0xff] %v299
                %v301 = vld [vmem:[%s151 + $0x4f0] sm:$0xff]
                %302 = vst [vmem:[%s152 + $0x280] sm:$0xff] %v301
                %v303 = vld [vmem:[%s151 + $0x4f8] sm:$0xff]
                %304 = vst [vmem:[%s152 + $0x288] sm:$0xff] %v303
                %v305 = vld [vmem:[%s151 + $0x500] sm:$0xff]
                %306 = vst [vmem:[%s152 + $0x290] sm:$0xff] %v305
                %v307 = vld [vmem:[%s151 + $0x508] sm:$0xff]
                %308 = vst [vmem:[%s152 + $0x298] sm:$0xff] %v307
                %v309 = vld [vmem:[%s151 + $0x514] sm:$0xff]
                %310 = vst [vmem:[%s152 + $0x2a4] sm:$0xff] %v309
                %v311 = vld [vmem:[%s151 + $0x51c] sm:$0xff]
                %312 = vst [vmem:[%s152 + $0x2ac] sm:$0xff] %v311
                %v313 = vld [vmem:[%s151 + $0x524] sm:$0xff]
                %314 = vst [vmem:[%s152 + $0x2b4] sm:$0xff] %v313
                %v315 = vld [vmem:[%s151 + $0x52c] sm:$0xff]
                %316 = vst [vmem:[%s152 + $0x2bc] sm:$0xff] %v315
                %v317 = vld [vmem:[%s151 + $0x534] sm:$0xff]
                %318 = vst [vmem:[%s152 + $0x2c4] sm:$0xff] %v317
                %v319 = vld [vmem:[%s151 + $0x53c] sm:$0xff]
                %320 = vst [vmem:[%s152 + $0x2cc] sm:$0xff] %v319
                %v321 = vld [vmem:[%s151 + $0x548] sm:$0xff]
                %322 = vst [vmem:[%s152 + $0x2d8] sm:$0xff] %v321
                %v323 = vld [vmem:[%s151 + $0x550] sm:$0xff]
                %324 = vst [vmem:[%s152 + $0x2e0] sm:$0xff] %v323
                %v325 = vld [vmem:[%s151 + $0x558] sm:$0xff]
                %326 = vst [vmem:[%s152 + $0x2e8] sm:$0xff] %v325
                %v327 = vld [vmem:[%s151 + $0x560] sm:$0xff]
                %328 = vst [vmem:[%s152 + $0x2f0] sm:$0xff] %v327
                %v329 = vld [vmem:[%s151 + $0x568] sm:$0xff]
                %330 = vst [vmem:[%s152 + $0x2f8] sm:$0xff] %v329
                %v331 = vld [vmem:[%s151 + $0x570] sm:$0xff]
                %332 = vst [vmem:[%s152 + $0x300] sm:$0xff] %v331
                %v333 = vld [vmem:[%s151 + $0x57c] sm:$0xff]
                %334 = vst [vmem:[%s152 + $0x30c] sm:$0xff] %v333
                %v335 = vld [vmem:[%s151 + $0x584] sm:$0xff]
                %336 = vst [vmem:[%s152 + $0x314] sm:$0xff] %v335
                %v337 = vld [vmem:[%s151 + $0x58c] sm:$0xff]
                %338 = vst [vmem:[%s152 + $0x31c] sm:$0xff] %v337
                %v339 = vld [vmem:[%s151 + $0x594] sm:$0xff]
                %340 = vst [vmem:[%s152 + $0x324] sm:$0xff] %v339
                %v341 = vld [vmem:[%s151 + $0x59c] sm:$0xff]
                %342 = vst [vmem:[%s152 + $0x32c] sm:$0xff] %v341
                %v343 = vld [vmem:[%s151 + $0x5a4] sm:$0xff]
                %344 = vst [vmem:[%s152 + $0x334] sm:$0xff] %v343
              $region41: #{ace_forward.4} parent=35 // loop_footer
                %s150 = sadd.s32 1, %s146
              $region42: #{ace_forward.4} parent=35 // loop_footer_branch
                %145 = sbr.rel target = $region38
              $region43: #{ace_forward.4} parent=35 // loop_exit
                _
              loop: start=0, step=1, limit=1
              $region44: #{ace_forward.4} parent=35 // loop_pre_header
                _
              $region45: #{ace_forward.4} parent=35 // loop_header
                %s347 = sphi 0, %s351
                %p348 = scmp.ge.s32.totalorder %s347, 1
                %s352 = sphi %s143, %s143
                %s353 = sphi %s144, %s144
              $region46: #{ace_forward.4} parent=35 // loop_header_branch
                %350 = sbr.rel (%p348) target = $region50
              $region47: #{ace_forward.4} parent=35 // loop_body
                %v354 = vld [vmem:[%s352] sm:$0xf]
                %355 = vst [vmem:[%s353] sm:$0xf] %v354
                %v356 = vld [vmem:[%s352 + $0x34] sm:$0xf]
                %357 = vst [vmem:[%s353 + $0x34] sm:$0xf] %v356
                %v358 = vld [vmem:[%s352 + $0x68] sm:$0xf]
                %359 = vst [vmem:[%s353 + $0x68] sm:$0xf] %v358
                %v360 = vld [vmem:[%s352 + $0x9c] sm:$0xf]
                %361 = vst [vmem:[%s353 + $0x9c] sm:$0xf] %v360
                %v362 = vld [vmem:[%s352 + $0x1a0] sm:$0xf]
                %363 = vst [vmem:[%s353 + $0xd0] sm:$0xf] %v362
                %v364 = vld [vmem:[%s352 + $0x1d4] sm:$0xf]
                %365 = vst [vmem:[%s353 + $0x104] sm:$0xf] %v364
                %v366 = vld [vmem:[%s352 + $0x208] sm:$0xf]
                %367 = vst [vmem:[%s353 + $0x138] sm:$0xf] %v366
                %v368 = vld [vmem:[%s352 + $0x23c] sm:$0xf]
                %369 = vst [vmem:[%s353 + $0x16c] sm:$0xf] %v368
                %v370 = vld [vmem:[%s352 + $0x340] sm:$0xf]
                %371 = vst [vmem:[%s353 + $0x1a0] sm:$0xf] %v370
                %v372 = vld [vmem:[%s352 + $0x374] sm:$0xf]
                %373 = vst [vmem:[%s353 + $0x1d4] sm:$0xf] %v372
                %v374 = vld [vmem:[%s352 + $0x3a8] sm:$0xf]
                %375 = vst [vmem:[%s353 + $0x208] sm:$0xf] %v374
                %v376 = vld [vmem:[%s352 + $0x3dc] sm:$0xf]
                %377 = vst [vmem:[%s353 + $0x23c] sm:$0xf] %v376
                %v378 = vld [vmem:[%s352 + $0x4e0] sm:$0xf]
                %379 = vst [vmem:[%s353 + $0x270] sm:$0xf] %v378
                %v380 = vld [vmem:[%s352 + $0x514] sm:$0xf]
                %381 = vst [vmem:[%s353 + $0x2a4] sm:$0xf] %v380
                %v382 = vld [vmem:[%s352 + $0x548] sm:$0xf]
                %383 = vst [vmem:[%s353 + $0x2d8] sm:$0xf] %v382
                %v384 = vld [vmem:[%s352 + $0x57c] sm:$0xf]
                %385 = vst [vmem:[%s353 + $0x30c] sm:$0xf] %v384
              $region48: #{ace_forward.4} parent=35 // loop_footer
                %s351 = sadd.s32 1, %s347
              $region49: #{ace_forward.4} parent=35 // loop_footer_branch
                %346 = sbr.rel target = $region45
              $region50: #{ace_forward.4} parent=35 // loop_exit
                _
            $region36: #{ace_forward.4} parent=31 // pred_fallthru
              _
          $region32: #{ace_forward.4} parent=27 // pred_fallthru
            _
          %386 = vnop
        $region28: #{ace_forward.4} parent=23 // pred_fallthru
          _
      $region24: #{ace_forward.4} parent=5 // pred_fallthru
        _
      %p387 = scmp.le.s32.totalorder 1, %s9
      %p388 = scmp.lt.s32.totalorder %s9, 3
      %p389 = pnand %p387, %p388
      %p390 = pneg %p389
      // Predicated region
      $region51: #{ace_forward.4} parent=5 // pred_check
        _
      $region52: #{ace_forward.4} parent=5 // pred_check_branch
        %392 = sbr.rel (%p389) target = $region54
      $region53: #{ace_forward.4} parent=5 // pred_region
        %s393 = ssub.s32 %s9, 1
        %s394 = sand.u32 %s22, 1
        %s395 = sand.u32 %s22, 1
        %s396 = smul.addr %s395, 832
        %s397 = scalar_lea.vmem [#allocation2], %s396
        // Predicated region
        $region55: #{ace_forward.4} parent=53 // pred_check
          %p398 = pneg %p35
        $region56: #{ace_forward.4} parent=53 // pred_check_branch
          %400 = sbr.rel (%p398) target = $region58
        $region57: #{ace_forward.4} parent=53 // pred_region
          _
        $region58: #{ace_forward.4} parent=53 // pred_fallthru
          _
        %s401 = sand.u32 %s22, 1
        %s402 = sand.u32 %s22, 1
        %s403 = smul.addr %s402, 832
        %s404 = scalar_lea.vmem [#allocation2], %s403
        %p405 = pneg %p35
        %p406 = pneg %p32
        %p407 = pneg %p56
        %p408 = pneg %p53
        %p409 = pneg %p77
        %p410 = pneg %p74
        %p411 = pneg %p103
        %p412 = pneg %p100
        %s413 = smul.u32 4, %s14
        %p414 = scmp.lt.s32.totalorder %s413, 7
        %s415 = scalar_select %p414, %s413, 7
        %s416 = smul.addr %s415, 4
        %s417 = scalar_lea.vmem %s3, %s416
        %s418 = smul.u32 4, %s14
        %s419 = smul.u32 4, %s14
        %p420 = scmp.lt.s32.totalorder %s419, 7
        %s421 = scalar_select %p420, %s419, 7
        %s422 = smul.addr %s421, 4
        %s423 = scalar_lea.vmem %s3, %s422
        %s424 = smul.u32 4, %s14
        %v426 = vld [vmem:[%s397] sm:$0xff]
        %v427 = vld [vmem:[%s397 + $0x8] sm:$0xff]
        %v428 = vld [vmem:[%s397 + $0x10] sm:$0xff]
        %v429 = vld [vmem:[%s397 + $0x18] sm:$0xff]
        %v430 = vld [vmem:[%s397 + $0x20] sm:$0xff]
        %v431 = vld [vmem:[%s397 + $0x28] sm:$0xff]
        %v432 = vld [vmem:[%s397 + $0x30] sm:$0xf]
        %v433 = vld [vmem:[%s397 + $0x34] sm:$0xff]
        %v434 = vld [vmem:[%s397 + $0x3c] sm:$0xff]
        %v435 = vld [vmem:[%s397 + $0x44] sm:$0xff]
        %v436 = vld [vmem:[%s397 + $0x4c] sm:$0xff]
        %v437 = vld [vmem:[%s397 + $0x54] sm:$0xff]
        %v438 = vld [vmem:[%s397 + $0x5c] sm:$0xff]
        %v439 = vld [vmem:[%s397 + $0x64] sm:$0xf]
        %v440 = vld [vmem:[%s397 + $0x68] sm:$0xff]
        %v441 = vld [vmem:[%s397 + $0x70] sm:$0xff]
        %v442 = vld [vmem:[%s397 + $0x78] sm:$0xff]
        %v443 = vld [vmem:[%s397 + $0x80] sm:$0xff]
        %v444 = vld [vmem:[%s397 + $0x88] sm:$0xff]
        %v445 = vld [vmem:[%s397 + $0x90] sm:$0xff]
        %v446 = vld [vmem:[%s397 + $0x98] sm:$0xf]
        %v447 = vld [vmem:[%s397 + $0x9c] sm:$0xff]
        %v448 = vld [vmem:[%s397 + $0xa4] sm:$0xff]
        %v449 = vld [vmem:[%s397 + $0xac] sm:$0xff]
        %v450 = vld [vmem:[%s397 + $0xb4] sm:$0xff]
        %v451 = vld [vmem:[%s397 + $0xbc] sm:$0xff]
        %v452 = vld [vmem:[%s397 + $0xc4] sm:$0xff]
        %v453 = vld [vmem:[%s397 + $0xcc] sm:$0xf]
        %v454 = vld [vmem:[%s397 + $0xd0] sm:$0xff]
        %v455 = vld [vmem:[%s397 + $0xd8] sm:$0xff]
        %v456 = vld [vmem:[%s397 + $0xe0] sm:$0xff]
        %v457 = vld [vmem:[%s397 + $0xe8] sm:$0xff]
        %v458 = vld [vmem:[%s397 + $0xf0] sm:$0xff]
        %v459 = vld [vmem:[%s397 + $0xf8] sm:$0xff]
        %v460 = vld [vmem:[%s397 + $0x100] sm:$0xf]
        %v461 = vld [vmem:[%s397 + $0x104] sm:$0xff]
        %v462 = vld [vmem:[%s397 + $0x10c] sm:$0xff]
        %v463 = vld [vmem:[%s397 + $0x114] sm:$0xff]
        %v464 = vld [vmem:[%s397 + $0x11c] sm:$0xff]
        %v465 = vld [vmem:[%s397 + $0x124] sm:$0xff]
        %v466 = vld [vmem:[%s397 + $0x12c] sm:$0xff]
        %v467 = vld [vmem:[%s397 + $0x134] sm:$0xf]
        %v468 = vld [vmem:[%s397 + $0x138] sm:$0xff]
        %v469 = vld [vmem:[%s397 + $0x140] sm:$0xff]
        %v470 = vld [vmem:[%s397 + $0x148] sm:$0xff]
        %v471 = vld [vmem:[%s397 + $0x150] sm:$0xff]
        %v472 = vld [vmem:[%s397 + $0x158] sm:$0xff]
        %v473 = vld [vmem:[%s397 + $0x160] sm:$0xff]
        %v474 = vld [vmem:[%s397 + $0x168] sm:$0xf]
        %v475 = vld [vmem:[%s397 + $0x16c] sm:$0xff]
        %v476 = vld [vmem:[%s397 + $0x174] sm:$0xff]
        %v477 = vld [vmem:[%s397 + $0x17c] sm:$0xff]
        %v478 = vld [vmem:[%s397 + $0x184] sm:$0xff]
        %v479 = vld [vmem:[%s397 + $0x18c] sm:$0xff]
        %v480 = vld [vmem:[%s397 + $0x194] sm:$0xff]
        %v481 = vld [vmem:[%s397 + $0x19c] sm:$0xf]
        %v482 = vld [vmem:[%s397 + $0x1a0] sm:$0xff]
        %v483 = vld [vmem:[%s397 + $0x1a8] sm:$0xff]
        %v484 = vld [vmem:[%s397 + $0x1b0] sm:$0xff]
        %v485 = vld [vmem:[%s397 + $0x1b8] sm:$0xff]
        %v486 = vld [vmem:[%s397 + $0x1c0] sm:$0xff]
        %v487 = vld [vmem:[%s397 + $0x1c8] sm:$0xff]
        %v488 = vld [vmem:[%s397 + $0x1d0] sm:$0xf]
        %v489 = vld [vmem:[%s397 + $0x1d4] sm:$0xff]
        %v490 = vld [vmem:[%s397 + $0x1dc] sm:$0xff]
        %v491 = vld [vmem:[%s397 + $0x1e4] sm:$0xff]
        %v492 = vld [vmem:[%s397 + $0x1ec] sm:$0xff]
        %v493 = vld [vmem:[%s397 + $0x1f4] sm:$0xff]
        %v494 = vld [vmem:[%s397 + $0x1fc] sm:$0xff]
        %v495 = vld [vmem:[%s397 + $0x204] sm:$0xf]
        %v496 = vld [vmem:[%s397 + $0x208] sm:$0xff]
        %v497 = vld [vmem:[%s397 + $0x210] sm:$0xff]
        %v498 = vld [vmem:[%s397 + $0x218] sm:$0xff]
        %v499 = vld [vmem:[%s397 + $0x220] sm:$0xff]
        %v500 = vld [vmem:[%s397 + $0x228] sm:$0xff]
        %v501 = vld [vmem:[%s397 + $0x230] sm:$0xff]
        %v502 = vld [vmem:[%s397 + $0x238] sm:$0xf]
        %v503 = vld [vmem:[%s397 + $0x23c] sm:$0xff]
        %v504 = vld [vmem:[%s397 + $0x244] sm:$0xff]
        %v505 = vld [vmem:[%s397 + $0x24c] sm:$0xff]
        %v506 = vld [vmem:[%s397 + $0x254] sm:$0xff]
        %v507 = vld [vmem:[%s397 + $0x25c] sm:$0xff]
        %v508 = vld [vmem:[%s397 + $0x264] sm:$0xff]
        %v509 = vld [vmem:[%s397 + $0x26c] sm:$0xf]
        %v510 = vld [vmem:[%s397 + $0x270] sm:$0xff]
        %v511 = vld [vmem:[%s397 + $0x278] sm:$0xff]
        %v512 = vld [vmem:[%s397 + $0x280] sm:$0xff]
        %v513 = vld [vmem:[%s397 + $0x288] sm:$0xff]
        %v514 = vld [vmem:[%s397 + $0x290] sm:$0xff]
        %v515 = vld [vmem:[%s397 + $0x298] sm:$0xff]
        %v516 = vld [vmem:[%s397 + $0x2a0] sm:$0xf]
        %v517 = vld [vmem:[%s397 + $0x2a4] sm:$0xff]
        %v518 = vld [vmem:[%s397 + $0x2ac] sm:$0xff]
        %v519 = vld [vmem:[%s397 + $0x2b4] sm:$0xff]
        %v520 = vld [vmem:[%s397 + $0x2bc] sm:$0xff]
        %v521 = vld [vmem:[%s397 + $0x2c4] sm:$0xff]
        %v522 = vld [vmem:[%s397 + $0x2cc] sm:$0xff]
        %v523 = vld [vmem:[%s397 + $0x2d4] sm:$0xf]
        %v524 = vld [vmem:[%s397 + $0x2d8] sm:$0xff]
        %v525 = vld [vmem:[%s397 + $0x2e0] sm:$0xff]
        %v526 = vld [vmem:[%s397 + $0x2e8] sm:$0xff]
        %v527 = vld [vmem:[%s397 + $0x2f0] sm:$0xff]
        %v528 = vld [vmem:[%s397 + $0x2f8] sm:$0xff]
        %v529 = vld [vmem:[%s397 + $0x300] sm:$0xff]
        %v530 = vld [vmem:[%s397 + $0x308] sm:$0xf]
        %v531 = vld [vmem:[%s397 + $0x30c] sm:$0xff]
        %v532 = vld [vmem:[%s397 + $0x314] sm:$0xff]
        %v533 = vld [vmem:[%s397 + $0x31c] sm:$0xff]
        %v534 = vld [vmem:[%s397 + $0x324] sm:$0xff]
        %v535 = vld [vmem:[%s397 + $0x32c] sm:$0xff]
        %v536 = vld [vmem:[%s397 + $0x334] sm:$0xff]
        %v537 = vld [vmem:[%s397 + $0x33c] sm:$0xf]
        %v538 = vld [vmem:[%s1] sm:$0xf]
        %v539 = vld [vmem:[%s1 + $0x4] sm:$0xf]
        %v540 = vld [vmem:[%s1 + $0x8] sm:$0xf]
        %v541 = vld [vmem:[%s1 + $0xc] sm:$0xf]
        %v542 = vld [vmem:[%s1 + $0x10] sm:$0xf]
        %v543 = vld [vmem:[%s1 + $0x14] sm:$0xf]
        %v544 = vld [vmem:[%s1 + $0x18] sm:$0xf]
        %v545 = vld [vmem:[%s1 + $0x1c] sm:$0xf]
        %v546 = vld [vmem:[%s1 + $0x20] sm:$0xf]
        %v547 = vld [vmem:[%s1 + $0x24] sm:$0xf]
        %v548 = vld [vmem:[%s1 + $0x28] sm:$0xf]
        %v549 = vld [vmem:[%s1 + $0x2c] sm:$0xf]
        %v550 = vld [vmem:[%s1 + $0x30] sm:$0xf]
        %v551 = vld [vmem:[%s1 + $0x34] sm:$0xf]
        %v552 = vld [vmem:[%s1 + $0x38] sm:$0xf]
        %v553 = vld [vmem:[%s1 + $0x3c] sm:$0xf]
        %v554 = vld [vmem:[%s1 + $0x40] sm:$0xf]
        %v555 = vld [vmem:[%s1 + $0x44] sm:$0xf]
        %v556 = vld [vmem:[%s1 + $0x48] sm:$0xf]
        %v557 = vld [vmem:[%s1 + $0x4c] sm:$0xf]
        %v558 = vld [vmem:[%s1 + $0x50] sm:$0xf]
        %v559 = vld [vmem:[%s1 + $0x54] sm:$0xf]
        %v560 = vld [vmem:[%s1 + $0x58] sm:$0xf]
        %v561 = vld [vmem:[%s1 + $0x5c] sm:$0xf]
        %v562 = vld [vmem:[%s1 + $0x60] sm:$0xf]
        %v563 = vld [vmem:[%s1 + $0x64] sm:$0xf]
        %v564 = vld [vmem:[%s1 + $0x68] sm:$0xf]
        %v565 = vld [vmem:[%s1 + $0x6c] sm:$0xf]
        %v566 = vld [vmem:[%s1 + $0x70] sm:$0xf]
        %v567 = vld [vmem:[%s1 + $0x74] sm:$0xf]
        %v568 = vld [vmem:[%s1 + $0x78] sm:$0xf]
        %v569 = vld [vmem:[%s1 + $0x7c] sm:$0xf]
        %v570 = vld [vmem:[%s1 + $0x80] sm:$0xf]
        %v571 = vld [vmem:[%s1 + $0x84] sm:$0xf]
        %v572 = vld [vmem:[%s1 + $0x88] sm:$0xf]
        %v573 = vld [vmem:[%s1 + $0x8c] sm:$0xf]
        %v574 = vld [vmem:[%s1 + $0x90] sm:$0xf]
        %v575 = vld [vmem:[%s1 + $0x94] sm:$0xf]
        %v576 = vld [vmem:[%s1 + $0x98] sm:$0xf]
        %v577 = vld [vmem:[%s1 + $0x9c] sm:$0xf]
        %v578 = vld [vmem:[%s1 + $0xa0] sm:$0xf]
        %v579 = vld [vmem:[%s1 + $0xa4] sm:$0xf]
        %v580 = vld [vmem:[%s1 + $0xa8] sm:$0xf]
        %v581 = vld [vmem:[%s1 + $0xac] sm:$0xf]
        %v582 = vld [vmem:[%s1 + $0xb0] sm:$0xf]
        %v583 = vld [vmem:[%s1 + $0xb4] sm:$0xf]
        %v584 = vld [vmem:[%s1 + $0xb8] sm:$0xf]
        %v585 = vld [vmem:[%s1 + $0xbc] sm:$0xf]
        %v586 = vld [vmem:[%s1 + $0xc0] sm:$0xf]
        %v587 = vld [vmem:[%s1 + $0xc4] sm:$0xf]
        %v588 = vld [vmem:[%s1 + $0xc8] sm:$0xf]
        %v589 = vld [vmem:[%s1 + $0xcc] sm:$0xf]
        %v590 = vld [vmem:[%s1 + $0xd0] sm:$0xf]
        %v591 = vld [vmem:[%s1 + $0xd4] sm:$0xf]
        %v592 = vld [vmem:[%s1 + $0xd8] sm:$0xf]
        %v593 = vld [vmem:[%s1 + $0xdc] sm:$0xf]
        %v594 = vld [vmem:[%s1 + $0xe0] sm:$0xf]
        %v595 = vld [vmem:[%s1 + $0xe4] sm:$0xf]
        %v596 = vld [vmem:[%s1 + $0xe8] sm:$0xf]
        %v597 = vld [vmem:[%s1 + $0xec] sm:$0xf]
        %v598 = vld [vmem:[%s1 + $0xf0] sm:$0xf]
        %v599 = vld [vmem:[%s1 + $0xf4] sm:$0xf]
        %v600 = vld [vmem:[%s1 + $0xf8] sm:$0xf]
        %v601 = vld [vmem:[%s1 + $0xfc] sm:$0xf]
        %v602 = vld [vmem:[%s1 + $0x100] sm:$0xf]
        %v603 = vld [vmem:[%s1 + $0x104] sm:$0xf]
        %v604 = vld [vmem:[%s1 + $0x108] sm:$0xf]
        %v605 = vld [vmem:[%s1 + $0x10c] sm:$0xf]
        %v606 = vld [vmem:[%s1 + $0x110] sm:$0xf]
        %v607 = vld [vmem:[%s1 + $0x114] sm:$0xf]
        %v608 = vld [vmem:[%s1 + $0x118] sm:$0xf]
        %v609 = vld [vmem:[%s1 + $0x11c] sm:$0xf]
        %v610 = vld [vmem:[%s1 + $0x120] sm:$0xf]
        %v611 = vld [vmem:[%s1 + $0x124] sm:$0xf]
        %v612 = vld [vmem:[%s1 + $0x128] sm:$0xf]
        %v613 = vld [vmem:[%s1 + $0x12c] sm:$0xf]
        %v614 = vld [vmem:[%s1 + $0x130] sm:$0xf]
        %v615 = vld [vmem:[%s1 + $0x134] sm:$0xf]
        %v616 = vld [vmem:[%s1 + $0x138] sm:$0xf]
        %v617 = vld [vmem:[%s1 + $0x13c] sm:$0xf]
        %v618 = vld [vmem:[%s1 + $0x140] sm:$0xf]
        %v619 = vld [vmem:[%s1 + $0x144] sm:$0xf]
        %v620 = vld [vmem:[%s1 + $0x148] sm:$0xf]
        %v621 = vld [vmem:[%s1 + $0x14c] sm:$0xf]
        %v622 = vld [vmem:[%s1 + $0x150] sm:$0xf]
        %v623 = vld [vmem:[%s1 + $0x154] sm:$0xf]
        %v624 = vld [vmem:[%s1 + $0x158] sm:$0xf]
        %v625 = vld [vmem:[%s1 + $0x15c] sm:$0xf]
        %v626 = vld [vmem:[%s1 + $0x160] sm:$0xf]
        %v627 = vld [vmem:[%s1 + $0x164] sm:$0xf]
        %v628 = vld [vmem:[%s1 + $0x168] sm:$0xf]
        %v629 = vld [vmem:[%s1 + $0x16c] sm:$0xf]
        %v630 = vld [vmem:[%s1 + $0x170] sm:$0xf]
        %v631 = vld [vmem:[%s1 + $0x174] sm:$0xf]
        %v632 = vld [vmem:[%s1 + $0x178] sm:$0xf]
        %v633 = vld [vmem:[%s1 + $0x17c] sm:$0xf]
        %v634 = vld [vmem:[%s1 + $0x180] sm:$0xf]
        %v635 = vld [vmem:[%s1 + $0x184] sm:$0xf]
        %v636 = vld [vmem:[%s1 + $0x188] sm:$0xf]
        %v637 = vld [vmem:[%s1 + $0x18c] sm:$0xf]
        %v638 = vld [vmem:[%s1 + $0x190] sm:$0xf]
        %v639 = vld [vmem:[%s1 + $0x194] sm:$0xf]
        %v640 = vld [vmem:[%s1 + $0x198] sm:$0xf]
        %v641 = vld [vmem:[%s1 + $0x19c] sm:$0xf]
        %v642 = vld [vmem:[%s1 + $0x1a0] sm:$0xf]
        %v643 = vld [vmem:[%s1 + $0x1a4] sm:$0xf]
        %v644 = vld [vmem:[%s1 + $0x1a8] sm:$0xf]
        %v645 = vld [vmem:[%s1 + $0x1ac] sm:$0xf]
        %v646 = vld [vmem:[%s1 + $0x1b0] sm:$0xf]
        %v647 = vld [vmem:[%s1 + $0x1b4] sm:$0xf]
        %v648 = vld [vmem:[%s1 + $0x1b8] sm:$0xf]
        %v649 = vld [vmem:[%s1 + $0x1bc] sm:$0xf]
        %v650 = vld [vmem:[%s1 + $0x1c0] sm:$0xf]
        %v651 = vld [vmem:[%s1 + $0x1c4] sm:$0xf]
        %v652 = vld [vmem:[%s1 + $0x1c8] sm:$0xf]
        %v653 = vld [vmem:[%s1 + $0x1cc] sm:$0xf]
        %v654 = vld [vmem:[%s1 + $0x1d0] sm:$0xf]
        %v655 = vld [vmem:[%s1 + $0x1d4] sm:$0xf]
        %v656 = vld [vmem:[%s1 + $0x1d8] sm:$0xf]
        %v657 = vld [vmem:[%s1 + $0x1dc] sm:$0xf]
        %v658 = vld [vmem:[%s1 + $0x1e0] sm:$0xf]
        %v659 = vld [vmem:[%s1 + $0x1e4] sm:$0xf]
        %v660 = vld [vmem:[%s1 + $0x1e8] sm:$0xf]
        %v661 = vld [vmem:[%s1 + $0x1ec] sm:$0xf]
        %v662 = vld [vmem:[%s1 + $0x1f0] sm:$0xf]
        %v663 = vld [vmem:[%s1 + $0x1f4] sm:$0xf]
        %v664 = vld [vmem:[%s1 + $0x1f8] sm:$0xf]
        %v665 = vld [vmem:[%s1 + $0x1fc] sm:$0xf]
        %v666 = vld [vmem:[%s1 + $0x200] sm:$0xf]
        %v667 = vld [vmem:[%s1 + $0x204] sm:$0xf]
        %v668 = vld [vmem:[%s1 + $0x208] sm:$0xf]
        %v669 = vld [vmem:[%s1 + $0x20c] sm:$0xf]
        %v670 = vld [vmem:[%s1 + $0x210] sm:$0xf]
        %v671 = vld [vmem:[%s1 + $0x214] sm:$0xf]
        %v672 = vld [vmem:[%s1 + $0x218] sm:$0xf]
        %v673 = vld [vmem:[%s1 + $0x21c] sm:$0xf]
        %v674 = vld [vmem:[%s1 + $0x220] sm:$0xf]
        %v675 = vld [vmem:[%s1 + $0x224] sm:$0xf]
        %v676 = vld [vmem:[%s1 + $0x228] sm:$0xf]
        %v677 = vld [vmem:[%s1 + $0x22c] sm:$0xf]
        %v678 = vld [vmem:[%s1 + $0x230] sm:$0xf]
        %v679 = vld [vmem:[%s1 + $0x234] sm:$0xf]
        %v680 = vld [vmem:[%s1 + $0x238] sm:$0xf]
        %v681 = vld [vmem:[%s1 + $0x23c] sm:$0xf]
        %v682 = vld [vmem:[%s1 + $0x240] sm:$0xf]
        %v683 = vld [vmem:[%s1 + $0x244] sm:$0xf]
        %v684 = vld [vmem:[%s1 + $0x248] sm:$0xf]
        %v685 = vld [vmem:[%s1 + $0x24c] sm:$0xf]
        %v686 = vld [vmem:[%s1 + $0x250] sm:$0xf]
        %v687 = vld [vmem:[%s1 + $0x254] sm:$0xf]
        %v688 = vld [vmem:[%s1 + $0x258] sm:$0xf]
        %v689 = vld [vmem:[%s1 + $0x25c] sm:$0xf]
        %v690 = vld [vmem:[%s1 + $0x260] sm:$0xf]
        %v691 = vld [vmem:[%s1 + $0x264] sm:$0xf]
        %v692 = vld [vmem:[%s1 + $0x268] sm:$0xf]
        %v693 = vld [vmem:[%s1 + $0x26c] sm:$0xf]
        %v694 = vld [vmem:[%s1 + $0x270] sm:$0xf]
        %v695 = vld [vmem:[%s1 + $0x274] sm:$0xf]
        %v696 = vld [vmem:[%s1 + $0x278] sm:$0xf]
        %v697 = vld [vmem:[%s1 + $0x27c] sm:$0xf]
        %v698 = vld [vmem:[%s1 + $0x280] sm:$0xf]
        %v699 = vld [vmem:[%s1 + $0x284] sm:$0xf]
        %v700 = vld [vmem:[%s1 + $0x288] sm:$0xf]
        %v701 = vld [vmem:[%s1 + $0x28c] sm:$0xf]
        %v702 = vld [vmem:[%s1 + $0x290] sm:$0xf]
        %v703 = vld [vmem:[%s1 + $0x294] sm:$0xf]
        %v704 = vld [vmem:[%s1 + $0x298] sm:$0xf]
        %v705 = vld [vmem:[%s1 + $0x29c] sm:$0xf]
        %v706 = vld [vmem:[%s1 + $0x2a0] sm:$0xf]
        %v707 = vld [vmem:[%s1 + $0x2a4] sm:$0xf]
        %v708 = vld [vmem:[%s1 + $0x2a8] sm:$0xf]
        %v709 = vld [vmem:[%s1 + $0x2ac] sm:$0xf]
        %v710 = vld [vmem:[%s1 + $0x2b0] sm:$0xf]
        %v711 = vld [vmem:[%s1 + $0x2b4] sm:$0xf]
        %v712 = vld [vmem:[%s1 + $0x2b8] sm:$0xf]
        %v713 = vld [vmem:[%s1 + $0x2bc] sm:$0xf]
        %v714 = vld [vmem:[%s1 + $0x2c0] sm:$0xf]
        %v715 = vld [vmem:[%s1 + $0x2c4] sm:$0xf]
        %v716 = vld [vmem:[%s1 + $0x2c8] sm:$0xf]
        %v717 = vld [vmem:[%s1 + $0x2cc] sm:$0xf]
        %v718 = vld [vmem:[%s1 + $0x2d0] sm:$0xf]
        %v719 = vld [vmem:[%s1 + $0x2d4] sm:$0xf]
        %v720 = vld [vmem:[%s1 + $0x2d8] sm:$0xf]
        %v721 = vld [vmem:[%s1 + $0x2dc] sm:$0xf]
        %v722 = vld [vmem:[%s1 + $0x2e0] sm:$0xf]
        %v723 = vld [vmem:[%s1 + $0x2e4] sm:$0xf]
        %v724 = vld [vmem:[%s1 + $0x2e8] sm:$0xf]
        %v725 = vld [vmem:[%s1 + $0x2ec] sm:$0xf]
        %v726 = vld [vmem:[%s1 + $0x2f0] sm:$0xf]
        %v727 = vld [vmem:[%s1 + $0x2f4] sm:$0xf]
        %v728 = vld [vmem:[%s1 + $0x2f8] sm:$0xf]
        %v729 = vld [vmem:[%s1 + $0x2fc] sm:$0xf]
        %v730 = vld [vmem:[%s1 + $0x300] sm:$0xf]
        %v731 = vld [vmem:[%s1 + $0x304] sm:$0xf]
        %v732 = vld [vmem:[%s1 + $0x308] sm:$0xf]
        %v733 = vld [vmem:[%s1 + $0x30c] sm:$0xf]
        %v734 = vld [vmem:[%s1 + $0x310] sm:$0xf]
        %v735 = vld [vmem:[%s1 + $0x314] sm:$0xf]
        %v736 = vld [vmem:[%s1 + $0x318] sm:$0xf]
        %v737 = vld [vmem:[%s1 + $0x31c] sm:$0xf]
        %v850 = vunpack.c.l.b16 %v426
        %v851 = vunpack.c.h.b16 %v426
        %v852 = vunpack.c.l.b16 %v427
        %v853 = vunpack.c.h.b16 %v427
        %v854 = vunpack.c.l.b16 %v428
        %v855 = vunpack.c.h.b16 %v428
        %v856 = vunpack.c.l.b16 %v429
        %v857 = vunpack.c.h.b16 %v429
        %v858 = vunpack.c.l.b16 %v430
        %v859 = vunpack.c.h.b16 %v430
        %v860 = vunpack.c.l.b16 %v431
        %v861 = vunpack.c.h.b16 %v431
        %v862 = vunpack.c.l.b16 %v432
        %v863 = vunpack.c.l.b16 %v433
        %v864 = vunpack.c.h.b16 %v433
        %v865 = vunpack.c.l.b16 %v434
        %v866 = vunpack.c.h.b16 %v434
        %v867 = vunpack.c.l.b16 %v435
        %v868 = vunpack.c.h.b16 %v435
        %v869 = vunpack.c.l.b16 %v436
        %v870 = vunpack.c.h.b16 %v436
        %v871 = vunpack.c.l.b16 %v437
        %v872 = vunpack.c.h.b16 %v437
        %v873 = vunpack.c.l.b16 %v438
        %v874 = vunpack.c.h.b16 %v438
        %v875 = vunpack.c.l.b16 %v439
        %v876 = vunpack.c.l.b16 %v440
        %v877 = vunpack.c.h.b16 %v440
        %v878 = vunpack.c.l.b16 %v441
        %v879 = vunpack.c.h.b16 %v441
        %v880 = vunpack.c.l.b16 %v442
        %v881 = vunpack.c.h.b16 %v442
        %v882 = vunpack.c.l.b16 %v443
        %v883 = vunpack.c.h.b16 %v443
        %v884 = vunpack.c.l.b16 %v444
        %v885 = vunpack.c.h.b16 %v444
        %v886 = vunpack.c.l.b16 %v445
        %v887 = vunpack.c.h.b16 %v445
        %v888 = vunpack.c.l.b16 %v446
        %v889 = vunpack.c.l.b16 %v447
        %v890 = vunpack.c.h.b16 %v447
        %v891 = vunpack.c.l.b16 %v448
        %v892 = vunpack.c.h.b16 %v448
        %v893 = vunpack.c.l.b16 %v449
        %v894 = vunpack.c.h.b16 %v449
        %v895 = vunpack.c.l.b16 %v450
        %v896 = vunpack.c.h.b16 %v450
        %v897 = vunpack.c.l.b16 %v451
        %v898 = vunpack.c.h.b16 %v451
        %v899 = vunpack.c.l.b16 %v452
        %v900 = vunpack.c.h.b16 %v452
        %v901 = vunpack.c.l.b16 %v453
        %v902 = vunpack.c.l.b16 %v454
        %v903 = vunpack.c.h.b16 %v454
        %v904 = vunpack.c.l.b16 %v455
        %v905 = vunpack.c.h.b16 %v455
        %v906 = vunpack.c.l.b16 %v456
        %v907 = vunpack.c.h.b16 %v456
        %v908 = vunpack.c.l.b16 %v457
        %v909 = vunpack.c.h.b16 %v457
        %v910 = vunpack.c.l.b16 %v458
        %v911 = vunpack.c.h.b16 %v458
        %v912 = vunpack.c.l.b16 %v459
        %v913 = vunpack.c.h.b16 %v459
        %v914 = vunpack.c.l.b16 %v460
        %v915 = vunpack.c.l.b16 %v461
        %v916 = vunpack.c.h.b16 %v461
        %v917 = vunpack.c.l.b16 %v462
        %v918 = vunpack.c.h.b16 %v462
        %v919 = vunpack.c.l.b16 %v463
        %v920 = vunpack.c.h.b16 %v463
        %v921 = vunpack.c.l.b16 %v464
        %v922 = vunpack.c.h.b16 %v464
        %v923 = vunpack.c.l.b16 %v465
        %v924 = vunpack.c.h.b16 %v465
        %v925 = vunpack.c.l.b16 %v466
        %v926 = vunpack.c.h.b16 %v466
        %v927 = vunpack.c.l.b16 %v467
        %v928 = vunpack.c.l.b16 %v468
        %v929 = vunpack.c.h.b16 %v468
        %v930 = vunpack.c.l.b16 %v469
        %v931 = vunpack.c.h.b16 %v469
        %v932 = vunpack.c.l.b16 %v470
        %v933 = vunpack.c.h.b16 %v470
        %v934 = vunpack.c.l.b16 %v471
        %v935 = vunpack.c.h.b16 %v471
        %v936 = vunpack.c.l.b16 %v472
        %v937 = vunpack.c.h.b16 %v472
        %v938 = vunpack.c.l.b16 %v473
        %v939 = vunpack.c.h.b16 %v473
        %v940 = vunpack.c.l.b16 %v474
        %v941 = vunpack.c.l.b16 %v475
        %v942 = vunpack.c.h.b16 %v475
        %v943 = vunpack.c.l.b16 %v476
        %v944 = vunpack.c.h.b16 %v476
        %v945 = vunpack.c.l.b16 %v477
        %v946 = vunpack.c.h.b16 %v477
        %v947 = vunpack.c.l.b16 %v478
        %v948 = vunpack.c.h.b16 %v478
        %v949 = vunpack.c.l.b16 %v479
        %v950 = vunpack.c.h.b16 %v479
        %v951 = vunpack.c.l.b16 %v480
        %v952 = vunpack.c.h.b16 %v480
        %v953 = vunpack.c.l.b16 %v481
        %v954 = vunpack.c.l.b16 %v482
        %v955 = vunpack.c.h.b16 %v482
        %v956 = vunpack.c.l.b16 %v483
        %v957 = vunpack.c.h.b16 %v483
        %v958 = vunpack.c.l.b16 %v484
        %v959 = vunpack.c.h.b16 %v484
        %v960 = vunpack.c.l.b16 %v485
        %v961 = vunpack.c.h.b16 %v485
        %v962 = vunpack.c.l.b16 %v486
        %v963 = vunpack.c.h.b16 %v486
        %v964 = vunpack.c.l.b16 %v487
        %v965 = vunpack.c.h.b16 %v487
        %v966 = vunpack.c.l.b16 %v488
        %v967 = vunpack.c.l.b16 %v489
        %v968 = vunpack.c.h.b16 %v489
        %v969 = vunpack.c.l.b16 %v490
        %v970 = vunpack.c.h.b16 %v490
        %v971 = vunpack.c.l.b16 %v491
        %v972 = vunpack.c.h.b16 %v491
        %v973 = vunpack.c.l.b16 %v492
        %v974 = vunpack.c.h.b16 %v492
        %v975 = vunpack.c.l.b16 %v493
        %v976 = vunpack.c.h.b16 %v493
        %v977 = vunpack.c.l.b16 %v494
        %v978 = vunpack.c.h.b16 %v494
        %v979 = vunpack.c.l.b16 %v495
        %v980 = vunpack.c.l.b16 %v496
        %v981 = vunpack.c.h.b16 %v496
        %v982 = vunpack.c.l.b16 %v497
        %v983 = vunpack.c.h.b16 %v497
        %v984 = vunpack.c.l.b16 %v498
        %v985 = vunpack.c.h.b16 %v498
        %v986 = vunpack.c.l.b16 %v499
        %v987 = vunpack.c.h.b16 %v499
        %v988 = vunpack.c.l.b16 %v500
        %v989 = vunpack.c.h.b16 %v500
        %v990 = vunpack.c.l.b16 %v501
        %v991 = vunpack.c.h.b16 %v501
        %v992 = vunpack.c.l.b16 %v502
        %v993 = vunpack.c.l.b16 %v503
        %v994 = vunpack.c.h.b16 %v503
        %v995 = vunpack.c.l.b16 %v504
        %v996 = vunpack.c.h.b16 %v504
        %v997 = vunpack.c.l.b16 %v505
        %v998 = vunpack.c.h.b16 %v505
        %v999 = vunpack.c.l.b16 %v506
        %v1000 = vunpack.c.h.b16 %v506
        %v1001 = vunpack.c.l.b16 %v507
        %v1002 = vunpack.c.h.b16 %v507
        %v1003 = vunpack.c.l.b16 %v508
        %v1004 = vunpack.c.h.b16 %v508
        %v1005 = vunpack.c.l.b16 %v509
        %v1006 = vunpack.c.l.b16 %v510
        %v1007 = vunpack.c.h.b16 %v510
        %v1008 = vunpack.c.l.b16 %v511
        %v1009 = vunpack.c.h.b16 %v511
        %v1010 = vunpack.c.l.b16 %v512
        %v1011 = vunpack.c.h.b16 %v512
        %v1012 = vunpack.c.l.b16 %v513
        %v1013 = vunpack.c.h.b16 %v513
        %v1014 = vunpack.c.l.b16 %v514
        %v1015 = vunpack.c.h.b16 %v514
        %v1016 = vunpack.c.l.b16 %v515
        %v1017 = vunpack.c.h.b16 %v515
        %v1018 = vunpack.c.l.b16 %v516
        %v1019 = vunpack.c.l.b16 %v517
        %v1020 = vunpack.c.h.b16 %v517
        %v1021 = vunpack.c.l.b16 %v518
        %v1022 = vunpack.c.h.b16 %v518
        %v1023 = vunpack.c.l.b16 %v519
        %v1024 = vunpack.c.h.b16 %v519
        %v1025 = vunpack.c.l.b16 %v520
        %v1026 = vunpack.c.h.b16 %v520
        %v1027 = vunpack.c.l.b16 %v521
        %v1028 = vunpack.c.h.b16 %v521
        %v1029 = vunpack.c.l.b16 %v522
        %v1030 = vunpack.c.h.b16 %v522
        %v1031 = vunpack.c.l.b16 %v523
        %v1032 = vunpack.c.l.b16 %v524
        %v1033 = vunpack.c.h.b16 %v524
        %v1034 = vunpack.c.l.b16 %v525
        %v1035 = vunpack.c.h.b16 %v525
        %v1036 = vunpack.c.l.b16 %v526
        %v1037 = vunpack.c.h.b16 %v526
        %v1038 = vunpack.c.l.b16 %v527
        %v1039 = vunpack.c.h.b16 %v527
        %v1040 = vunpack.c.l.b16 %v528
        %v1041 = vunpack.c.h.b16 %v528
        %v1042 = vunpack.c.l.b16 %v529
        %v1043 = vunpack.c.h.b16 %v529
        %v1044 = vunpack.c.l.b16 %v530
        %v1045 = vunpack.c.l.b16 %v531
        %v1046 = vunpack.c.h.b16 %v531
        %v1047 = vunpack.c.l.b16 %v532
        %v1048 = vunpack.c.h.b16 %v532
        %v1049 = vunpack.c.l.b16 %v533
        %v1050 = vunpack.c.h.b16 %v533
        %v1051 = vunpack.c.l.b16 %v534
        %v1052 = vunpack.c.h.b16 %v534
        %v1053 = vunpack.c.l.b16 %v535
        %v1054 = vunpack.c.h.b16 %v535
        %v1055 = vunpack.c.l.b16 %v536
        %v1056 = vunpack.c.h.b16 %v536
        %v1057 = vunpack.c.l.b16 %v537
        %v1058 = vpack.c.b16 %v863, %v850
        %v1059 = vpack.c.b16 %v864, %v851
        %v1060 = vpack.c.b16 %v865, %v852
        %v1061 = vpack.c.b16 %v866, %v853
        %v1062 = vpack.c.b16 %v867, %v854
        %v1063 = vpack.c.b16 %v868, %v855
        %v1064 = vpack.c.b16 %v869, %v856
        %v1065 = vpack.c.b16 %v870, %v857
        %v1066 = vpack.c.b16 %v871, %v858
        %v1067 = vpack.c.b16 %v872, %v859
        %v1068 = vpack.c.b16 %v873, %v860
        %v1069 = vpack.c.b16 %v874, %v861
        %v1070 = vpack.c.b16 %v875, %v862
        %v1071 = vpack.c.b16 %v889, %v876
        %v1072 = vpack.c.b16 %v890, %v877
        %v1073 = vpack.c.b16 %v891, %v878
        %v1074 = vpack.c.b16 %v892, %v879
        %v1075 = vpack.c.b16 %v893, %v880
        %v1076 = vpack.c.b16 %v894, %v881
        %v1077 = vpack.c.b16 %v895, %v882
        %v1078 = vpack.c.b16 %v896, %v883
        %v1079 = vpack.c.b16 %v897, %v884
        %v1080 = vpack.c.b16 %v898, %v885
        %v1081 = vpack.c.b16 %v899, %v886
        %v1082 = vpack.c.b16 %v900, %v887
        %v1083 = vpack.c.b16 %v901, %v888
        %v1084 = vpack.c.b16 %v915, %v902
        %v1085 = vpack.c.b16 %v916, %v903
        %v1086 = vpack.c.b16 %v917, %v904
        %v1087 = vpack.c.b16 %v918, %v905
        %v1088 = vpack.c.b16 %v919, %v906
        %v1089 = vpack.c.b16 %v920, %v907
        %v1090 = vpack.c.b16 %v921, %v908
        %v1091 = vpack.c.b16 %v922, %v909
        %v1092 = vpack.c.b16 %v923, %v910
        %v1093 = vpack.c.b16 %v924, %v911
        %v1094 = vpack.c.b16 %v925, %v912
        %v1095 = vpack.c.b16 %v926, %v913
        %v1096 = vpack.c.b16 %v927, %v914
        %v1097 = vpack.c.b16 %v941, %v928
        %v1098 = vpack.c.b16 %v942, %v929
        %v1099 = vpack.c.b16 %v943, %v930
        %v1100 = vpack.c.b16 %v944, %v931
        %v1101 = vpack.c.b16 %v945, %v932
        %v1102 = vpack.c.b16 %v946, %v933
        %v1103 = vpack.c.b16 %v947, %v934
        %v1104 = vpack.c.b16 %v948, %v935
        %v1105 = vpack.c.b16 %v949, %v936
        %v1106 = vpack.c.b16 %v950, %v937
        %v1107 = vpack.c.b16 %v951, %v938
        %v1108 = vpack.c.b16 %v952, %v939
        %v1109 = vpack.c.b16 %v953, %v940
        %v1110 = vpack.c.b16 %v967, %v954
        %v1111 = vpack.c.b16 %v968, %v955
        %v1112 = vpack.c.b16 %v969, %v956
        %v1113 = vpack.c.b16 %v970, %v957
        %v1114 = vpack.c.b16 %v971, %v958
        %v1115 = vpack.c.b16 %v972, %v959
        %v1116 = vpack.c.b16 %v973, %v960
        %v1117 = vpack.c.b16 %v974, %v961
        %v1118 = vpack.c.b16 %v975, %v962
        %v1119 = vpack.c.b16 %v976, %v963
        %v1120 = vpack.c.b16 %v977, %v964
        %v1121 = vpack.c.b16 %v978, %v965
        %v1122 = vpack.c.b16 %v979, %v966
        %v1123 = vpack.c.b16 %v993, %v980
        %v1124 = vpack.c.b16 %v994, %v981
        %v1125 = vpack.c.b16 %v995, %v982
        %v1126 = vpack.c.b16 %v996, %v983
        %v1127 = vpack.c.b16 %v997, %v984
        %v1128 = vpack.c.b16 %v998, %v985
        %v1129 = vpack.c.b16 %v999, %v986
        %v1130 = vpack.c.b16 %v1000, %v987
        %v1131 = vpack.c.b16 %v1001, %v988
        %v1132 = vpack.c.b16 %v1002, %v989
        %v1133 = vpack.c.b16 %v1003, %v990
        %v1134 = vpack.c.b16 %v1004, %v991
        %v1135 = vpack.c.b16 %v1005, %v992
        %v1136 = vpack.c.b16 %v1019, %v1006
        %v1137 = vpack.c.b16 %v1020, %v1007
        %v1138 = vpack.c.b16 %v1021, %v1008
        %v1139 = vpack.c.b16 %v1022, %v1009
        %v1140 = vpack.c.b16 %v1023, %v1010
        %v1141 = vpack.c.b16 %v1024, %v1011
        %v1142 = vpack.c.b16 %v1025, %v1012
        %v1143 = vpack.c.b16 %v1026, %v1013
        %v1144 = vpack.c.b16 %v1027, %v1014
        %v1145 = vpack.c.b16 %v1028, %v1015
        %v1146 = vpack.c.b16 %v1029, %v1016
        %v1147 = vpack.c.b16 %v1030, %v1017
        %v1148 = vpack.c.b16 %v1031, %v1018
        %v1149 = vpack.c.b16 %v1045, %v1032
        %v1150 = vpack.c.b16 %v1046, %v1033
        %v1151 = vpack.c.b16 %v1047, %v1034
        %v1152 = vpack.c.b16 %v1048, %v1035
        %v1153 = vpack.c.b16 %v1049, %v1036
        %v1154 = vpack.c.b16 %v1050, %v1037
        %v1155 = vpack.c.b16 %v1051, %v1038
        %v1156 = vpack.c.b16 %v1052, %v1039
        %v1157 = vpack.c.b16 %v1053, %v1040
        %v1158 = vpack.c.b16 %v1054, %v1041
        %v1159 = vpack.c.b16 %v1055, %v1042
        %v1160 = vpack.c.b16 %v1056, %v1043
        %v1161 = vpack.c.b16 %v1057, %v1044
        %v1458 = vunpack.c.l.b16 %v538
        %v1459 = vunpack.c.l.b16 %v539
        %v1460 = vunpack.c.l.b16 %v540
        %v1461 = vunpack.c.l.b16 %v541
        %v1462 = vunpack.c.l.b16 %v542
        %v1463 = vunpack.c.l.b16 %v543
        %v1464 = vunpack.c.l.b16 %v544
        %v1465 = vunpack.c.l.b16 %v545
        %v1466 = vunpack.c.l.b16 %v546
        %v1467 = vunpack.c.l.b16 %v547
        %v1468 = vunpack.c.l.b16 %v548
        %v1469 = vunpack.c.l.b16 %v549
        %v1470 = vunpack.c.l.b16 %v550
        %v1471 = vunpack.c.l.b16 %v551
        %v1472 = vunpack.c.l.b16 %v552
        %v1473 = vunpack.c.l.b16 %v553
        %v1474 = vunpack.c.l.b16 %v554
        %v1475 = vunpack.c.l.b16 %v555
        %v1476 = vunpack.c.l.b16 %v556
        %v1477 = vunpack.c.l.b16 %v557
        %v1478 = vunpack.c.l.b16 %v558
        %v1479 = vunpack.c.l.b16 %v559
        %v1480 = vunpack.c.l.b16 %v560
        %v1481 = vunpack.c.l.b16 %v561
        %v1482 = vunpack.c.l.b16 %v562
        %v1483 = vunpack.c.l.b16 %v563
        %v1484 = vunpack.c.l.b16 %v564
        %v1485 = vunpack.c.l.b16 %v565
        %v1486 = vunpack.c.l.b16 %v566
        %v1487 = vunpack.c.l.b16 %v567
        %v1488 = vunpack.c.l.b16 %v568
        %v1489 = vunpack.c.l.b16 %v569
        %v1490 = vunpack.c.l.b16 %v570
        %v1491 = vunpack.c.l.b16 %v571
        %v1492 = vunpack.c.l.b16 %v572
        %v1493 = vunpack.c.l.b16 %v573
        %v1494 = vunpack.c.l.b16 %v574
        %v1495 = vunpack.c.l.b16 %v575
        %v1496 = vunpack.c.l.b16 %v576
        %v1497 = vunpack.c.l.b16 %v577
        %v1498 = vunpack.c.l.b16 %v578
        %v1499 = vunpack.c.l.b16 %v579
        %v1500 = vunpack.c.l.b16 %v580
        %v1501 = vunpack.c.l.b16 %v581
        %v1502 = vunpack.c.l.b16 %v582
        %v1503 = vunpack.c.l.b16 %v583
        %v1504 = vunpack.c.l.b16 %v584
        %v1505 = vunpack.c.l.b16 %v585
        %v1506 = vunpack.c.l.b16 %v586
        %v1507 = vunpack.c.l.b16 %v587
        %v1508 = vunpack.c.l.b16 %v588
        %v1509 = vunpack.c.l.b16 %v589
        %v1510 = vunpack.c.l.b16 %v590
        %v1511 = vunpack.c.l.b16 %v591
        %v1512 = vunpack.c.l.b16 %v592
        %v1513 = vunpack.c.l.b16 %v593
        %v1514 = vunpack.c.l.b16 %v594
        %v1515 = vunpack.c.l.b16 %v595
        %v1516 = vunpack.c.l.b16 %v596
        %v1517 = vunpack.c.l.b16 %v597
        %v1518 = vunpack.c.l.b16 %v598
        %v1519 = vunpack.c.l.b16 %v599
        %v1520 = vunpack.c.l.b16 %v600
        %v1521 = vunpack.c.l.b16 %v601
        %v1522 = vunpack.c.l.b16 %v602
        %v1523 = vunpack.c.l.b16 %v603
        %v1524 = vunpack.c.l.b16 %v604
        %v1525 = vunpack.c.l.b16 %v605
        %v1526 = vunpack.c.l.b16 %v606
        %v1527 = vunpack.c.l.b16 %v607
        %v1528 = vunpack.c.l.b16 %v608
        %v1529 = vunpack.c.l.b16 %v609
        %v1530 = vunpack.c.l.b16 %v610
        %v1531 = vunpack.c.l.b16 %v611
        %v1532 = vunpack.c.l.b16 %v612
        %v1533 = vunpack.c.l.b16 %v613
        %v1534 = vunpack.c.l.b16 %v614
        %v1535 = vunpack.c.l.b16 %v615
        %v1536 = vunpack.c.l.b16 %v616
        %v1537 = vunpack.c.l.b16 %v617
        %v1538 = vunpack.c.l.b16 %v618
        %v1539 = vunpack.c.l.b16 %v619
        %v1540 = vunpack.c.l.b16 %v620
        %v1541 = vunpack.c.l.b16 %v621
        %v1542 = vunpack.c.l.b16 %v622
        %v1543 = vunpack.c.l.b16 %v623
        %v1544 = vunpack.c.l.b16 %v624
        %v1545 = vunpack.c.l.b16 %v625
        %v1546 = vunpack.c.l.b16 %v626
        %v1547 = vunpack.c.l.b16 %v627
        %v1548 = vunpack.c.l.b16 %v628
        %v1549 = vunpack.c.l.b16 %v629
        %v1550 = vunpack.c.l.b16 %v630
        %v1551 = vunpack.c.l.b16 %v631
        %v1552 = vunpack.c.l.b16 %v632
        %v1553 = vunpack.c.l.b16 %v633
        %v1554 = vunpack.c.l.b16 %v634
        %v1555 = vunpack.c.l.b16 %v635
        %v1556 = vunpack.c.l.b16 %v636
        %v1557 = vunpack.c.l.b16 %v637
        %v1558 = vunpack.c.l.b16 %v638
        %v1559 = vunpack.c.l.b16 %v639
        %v1560 = vunpack.c.l.b16 %v640
        %v1561 = vunpack.c.l.b16 %v641
        %v1562 = vunpack.c.l.b16 %v642
        %v1563 = vunpack.c.l.b16 %v643
        %v1564 = vunpack.c.l.b16 %v644
        %v1565 = vunpack.c.l.b16 %v645
        %v1566 = vunpack.c.l.b16 %v646
        %v1567 = vunpack.c.l.b16 %v647
        %v1568 = vunpack.c.l.b16 %v648
        %v1569 = vunpack.c.l.b16 %v649
        %v1570 = vunpack.c.l.b16 %v650
        %v1571 = vunpack.c.l.b16 %v651
        %v1572 = vunpack.c.l.b16 %v652
        %v1573 = vunpack.c.l.b16 %v653
        %v1574 = vunpack.c.l.b16 %v654
        %v1575 = vunpack.c.l.b16 %v655
        %v1576 = vunpack.c.l.b16 %v656
        %v1577 = vunpack.c.l.b16 %v657
        %v1578 = vunpack.c.l.b16 %v658
        %v1579 = vunpack.c.l.b16 %v659
        %v1580 = vunpack.c.l.b16 %v660
        %v1581 = vunpack.c.l.b16 %v661
        %v1582 = vunpack.c.l.b16 %v662
        %v1583 = vunpack.c.l.b16 %v663
        %v1584 = vunpack.c.l.b16 %v664
        %v1585 = vunpack.c.l.b16 %v665
        %v1586 = vunpack.c.l.b16 %v666
        %v1587 = vunpack.c.l.b16 %v667
        %v1588 = vunpack.c.l.b16 %v668
        %v1589 = vunpack.c.l.b16 %v669
        %v1590 = vunpack.c.l.b16 %v670
        %v1591 = vunpack.c.l.b16 %v671
        %v1592 = vunpack.c.l.b16 %v672
        %v1593 = vunpack.c.l.b16 %v673
        %v1594 = vunpack.c.l.b16 %v674
        %v1595 = vunpack.c.l.b16 %v675
        %v1596 = vunpack.c.l.b16 %v676
        %v1597 = vunpack.c.l.b16 %v677
        %v1598 = vunpack.c.l.b16 %v678
        %v1599 = vunpack.c.l.b16 %v679
        %v1600 = vunpack.c.l.b16 %v680
        %v1601 = vunpack.c.l.b16 %v681
        %v1602 = vunpack.c.l.b16 %v682
        %v1603 = vunpack.c.l.b16 %v683
        %v1604 = vunpack.c.l.b16 %v684
        %v1605 = vunpack.c.l.b16 %v685
        %v1606 = vunpack.c.l.b16 %v686
        %v1607 = vunpack.c.l.b16 %v687
        %v1608 = vunpack.c.l.b16 %v688
        %v1609 = vunpack.c.l.b16 %v689
        %v1610 = vunpack.c.l.b16 %v690
        %v1611 = vunpack.c.l.b16 %v691
        %v1612 = vunpack.c.l.b16 %v692
        %v1613 = vunpack.c.l.b16 %v693
        %v1614 = vunpack.c.l.b16 %v694
        %v1615 = vunpack.c.l.b16 %v695
        %v1616 = vunpack.c.l.b16 %v696
        %v1617 = vunpack.c.l.b16 %v697
        %v1618 = vunpack.c.l.b16 %v698
        %v1619 = vunpack.c.l.b16 %v699
        %v1620 = vunpack.c.l.b16 %v700
        %v1621 = vunpack.c.l.b16 %v701
        %v1622 = vunpack.c.l.b16 %v702
        %v1623 = vunpack.c.l.b16 %v703
        %v1624 = vunpack.c.l.b16 %v704
        %v1625 = vunpack.c.l.b16 %v705
        %v1626 = vunpack.c.l.b16 %v706
        %v1627 = vunpack.c.l.b16 %v707
        %v1628 = vunpack.c.l.b16 %v708
        %v1629 = vunpack.c.l.b16 %v709
        %v1630 = vunpack.c.l.b16 %v710
        %v1631 = vunpack.c.l.b16 %v711
        %v1632 = vunpack.c.l.b16 %v712
        %v1633 = vunpack.c.l.b16 %v713
        %v1634 = vunpack.c.l.b16 %v714
        %v1635 = vunpack.c.l.b16 %v715
        %v1636 = vunpack.c.l.b16 %v716
        %v1637 = vunpack.c.l.b16 %v717
        %v1638 = vunpack.c.l.b16 %v718
        %v1639 = vunpack.c.l.b16 %v719
        %v1640 = vunpack.c.l.b16 %v720
        %v1641 = vunpack.c.l.b16 %v721
        %v1642 = vunpack.c.l.b16 %v722
        %v1643 = vunpack.c.l.b16 %v723
        %v1644 = vunpack.c.l.b16 %v724
        %v1645 = vunpack.c.l.b16 %v725
        %v1646 = vunpack.c.l.b16 %v726
        %v1647 = vunpack.c.l.b16 %v727
        %v1648 = vunpack.c.l.b16 %v728
        %v1649 = vunpack.c.l.b16 %v729
        %v1650 = vunpack.c.l.b16 %v730
        %v1651 = vunpack.c.l.b16 %v731
        %v1652 = vunpack.c.l.b16 %v732
        %v1653 = vunpack.c.l.b16 %v733
        %v1654 = vunpack.c.l.b16 %v734
        %v1655 = vunpack.c.l.b16 %v735
        %v1656 = vunpack.c.l.b16 %v736
        %v1657 = vunpack.c.l.b16 %v737
        %v1658 = vpack.c.b16 %v1459, %v1458
        %v1659 = vpack.c.b16 %v1461, %v1460
        %v1660 = vpack.c.b16 %v1463, %v1462
        %v1661 = vpack.c.b16 %v1465, %v1464
        %v1662 = vpack.c.b16 %v1467, %v1466
        %v1663 = vpack.c.b16 %v1469, %v1468
        %v1664 = vpack.c.b16 %v1471, %v1470
        %v1665 = vpack.c.b16 %v1473, %v1472
        %v1666 = vpack.c.b16 %v1475, %v1474
        %v1667 = vpack.c.b16 %v1477, %v1476
        %v1668 = vpack.c.b16 %v1479, %v1478
        %v1669 = vpack.c.b16 %v1481, %v1480
        %v1670 = vpack.c.b16 %v1483, %v1482
        %v1671 = vpack.c.b16 %v1485, %v1484
        %v1672 = vpack.c.b16 %v1487, %v1486
        %v1673 = vpack.c.b16 %v1489, %v1488
        %v1674 = vpack.c.b16 %v1491, %v1490
        %v1675 = vpack.c.b16 %v1493, %v1492
        %v1676 = vpack.c.b16 %v1495, %v1494
        %v1677 = vpack.c.b16 %v1497, %v1496
        %v1678 = vpack.c.b16 %v1499, %v1498
        %v1679 = vpack.c.b16 %v1501, %v1500
        %v1680 = vpack.c.b16 %v1503, %v1502
        %v1681 = vpack.c.b16 %v1505, %v1504
        %v1682 = vpack.c.b16 %v1507, %v1506
        %v1683 = vpack.c.b16 %v1509, %v1508
        %v1684 = vpack.c.b16 %v1511, %v1510
        %v1685 = vpack.c.b16 %v1513, %v1512
        %v1686 = vpack.c.b16 %v1515, %v1514
        %v1687 = vpack.c.b16 %v1517, %v1516
        %v1688 = vpack.c.b16 %v1519, %v1518
        %v1689 = vpack.c.b16 %v1521, %v1520
        %v1690 = vpack.c.b16 %v1523, %v1522
        %v1691 = vpack.c.b16 %v1525, %v1524
        %v1692 = vpack.c.b16 %v1527, %v1526
        %v1693 = vpack.c.b16 %v1529, %v1528
        %v1694 = vpack.c.b16 %v1531, %v1530
        %v1695 = vpack.c.b16 %v1533, %v1532
        %v1696 = vpack.c.b16 %v1535, %v1534
        %v1697 = vpack.c.b16 %v1537, %v1536
        %v1698 = vpack.c.b16 %v1539, %v1538
        %v1699 = vpack.c.b16 %v1541, %v1540
        %v1700 = vpack.c.b16 %v1543, %v1542
        %v1701 = vpack.c.b16 %v1545, %v1544
        %v1702 = vpack.c.b16 %v1547, %v1546
        %v1703 = vpack.c.b16 %v1549, %v1548
        %v1704 = vpack.c.b16 %v1551, %v1550
        %v1705 = vpack.c.b16 %v1553, %v1552
        %v1706 = vpack.c.b16 %v1555, %v1554
        %v1707 = vpack.c.b16 %v1557, %v1556
        %v1708 = vpack.c.b16 %v1559, %v1558
        %v1709 = vpack.c.b16 %v1561, %v1560
        %v1710 = vpack.c.b16 %v1563, %v1562
        %v1711 = vpack.c.b16 %v1565, %v1564
        %v1712 = vpack.c.b16 %v1567, %v1566
        %v1713 = vpack.c.b16 %v1569, %v1568
        %v1714 = vpack.c.b16 %v1571, %v1570
        %v1715 = vpack.c.b16 %v1573, %v1572
        %v1716 = vpack.c.b16 %v1575, %v1574
        %v1717 = vpack.c.b16 %v1577, %v1576
        %v1718 = vpack.c.b16 %v1579, %v1578
        %v1719 = vpack.c.b16 %v1581, %v1580
        %v1720 = vpack.c.b16 %v1583, %v1582
        %v1721 = vpack.c.b16 %v1585, %v1584
        %v1722 = vpack.c.b16 %v1587, %v1586
        %v1723 = vpack.c.b16 %v1589, %v1588
        %v1724 = vpack.c.b16 %v1591, %v1590
        %v1725 = vpack.c.b16 %v1593, %v1592
        %v1726 = vpack.c.b16 %v1595, %v1594
        %v1727 = vpack.c.b16 %v1597, %v1596
        %v1728 = vpack.c.b16 %v1599, %v1598
        %v1729 = vpack.c.b16 %v1601, %v1600
        %v1730 = vpack.c.b16 %v1603, %v1602
        %v1731 = vpack.c.b16 %v1605, %v1604
        %v1732 = vpack.c.b16 %v1607, %v1606
        %v1733 = vpack.c.b16 %v1609, %v1608
        %v1734 = vpack.c.b16 %v1611, %v1610
        %v1735 = vpack.c.b16 %v1613, %v1612
        %v1736 = vpack.c.b16 %v1615, %v1614
        %v1737 = vpack.c.b16 %v1617, %v1616
        %v1738 = vpack.c.b16 %v1619, %v1618
        %v1739 = vpack.c.b16 %v1621, %v1620
        %v1740 = vpack.c.b16 %v1623, %v1622
        %v1741 = vpack.c.b16 %v1625, %v1624
        %v1742 = vpack.c.b16 %v1627, %v1626
        %v1743 = vpack.c.b16 %v1629, %v1628
        %v1744 = vpack.c.b16 %v1631, %v1630
        %v1745 = vpack.c.b16 %v1633, %v1632
        %v1746 = vpack.c.b16 %v1635, %v1634
        %v1747 = vpack.c.b16 %v1637, %v1636
        %v1748 = vpack.c.b16 %v1639, %v1638
        %v1749 = vpack.c.b16 %v1641, %v1640
        %v1750 = vpack.c.b16 %v1643, %v1642
        %v1751 = vpack.c.b16 %v1645, %v1644
        %v1752 = vpack.c.b16 %v1647, %v1646
        %v1753 = vpack.c.b16 %v1649, %v1648
        %v1754 = vpack.c.b16 %v1651, %v1650
        %v1755 = vpack.c.b16 %v1653, %v1652
        %v1756 = vpack.c.b16 %v1655, %v1654
        %v1757 = vpack.c.b16 %v1657, %v1656
        %vm1858 = vcmask 523264
        %v1860 = vsel %vm1858, %v1070, 0
        %v1863 = vsel %vm1858, %v1083, 0
        %v1866 = vsel %vm1858, %v1096, 0
        %v1869 = vsel %vm1858, %v1109, 0
        %v1872 = vsel %vm1858, %v1122, 0
        %v1875 = vsel %vm1858, %v1135, 0
        %v1878 = vsel %vm1858, %v1148, 0
        %v1881 = vsel %vm1858, %v1161, 0
        %1883 = vmatprep.subr.bf16.mxu0 0
        %1884 = vmatpush1.bf16.msra.mxu0 %v1658
        %1885 = vmatprep.subr.bf16.mxu0 0
        %1886 = vmatpush1.bf16.msra.mxu0 %v1659
        %1887 = vmatprep.subr.bf16.mxu0 0
        %1888 = vmatpush1.bf16.msra.mxu0 %v1660
        %1889 = vmatprep.subr.bf16.mxu0 0
        %1890 = vmatpush1.bf16.msra.mxu0 %v1661
        %1891 = vmatprep.subr.bf16.mxu0 0
        %1892 = vmatpush1.bf16.msra.mxu0 %v1662
        %1893 = vmatprep.subr.bf16.mxu0 0
        %1894 = vmatpush1.bf16.msra.mxu0 %v1663
        %1895 = vmatprep.subr.bf16.mxu0 0
        %1896 = vmatpush1.bf16.msra.mxu0 %v1664
        %1897 = vmatprep.subr.bf16.mxu0 0
        %1898 = vmatpush1.bf16.msra.mxu0 %v1665
        %1899 = vmatprep.subr.bf16.mxu0 0
        %1900 = vmatpush1.bf16.msra.mxu0 %v1666
        %1901 = vmatprep.subr.bf16.mxu0 0
        %1902 = vmatpush1.bf16.msra.mxu0 %v1667
        %1903 = vmatprep.subr.bf16.mxu0 0
        %1904 = vmatpush1.bf16.msra.mxu0 %v1668
        %1905 = vmatprep.subr.bf16.mxu0 0
        %1906 = vmatpush1.bf16.msra.mxu0 %v1669
        %1907 = vmatprep.subr.bf16.mxu0 0
        %1908 = vmatpush1.bf16.msra.mxu0 %v1670
        %1909 = vmatprep.subr.bf16.mxu0 0
        %1910 = vmatpush1.bf16.msra.mxu0 %v1671
        %1911 = vmatprep.subr.bf16.mxu0 0
        %1912 = vmatpush1.bf16.msra.mxu0 %v1672
        %1913 = vmatprep.subr.bf16.mxu0 0
        %1914 = vmatpush1.bf16.msra.mxu0 %v1673
        %1915 = vmatprep.mubr.bf16.mxu0 %v1059
        %1916 = vmatmul.mubr.bf16.gmra.mrb[0].mxu0 %v1058
        %v1917 = vpop.f32.mrb[0].mxu0
        %v1918 = vadd.f32 0.0, %v1917
        %v1919 = vpop.f32.mrb[0].mxu0
        %v1920 = vpop.f32.mrb[0].mxu0
        %v1921 = vadd.f32 0.0, %v1920
        %v1922 = vpop.f32.mrb[0].mxu0
        %1923 = vmatprep.mubr.bf16.mxu0 %v1072
        %1924 = vmatmul.mubr.bf16.gmra.mrb[0].mxu0 %v1071
        %v1925 = vpop.f32.mrb[0].mxu0
        %v1926 = vadd.f32 0.0, %v1925
        %v1927 = vpop.f32.mrb[0].mxu0
        %v1928 = vpop.f32.mrb[0].mxu0
        %v1929 = vadd.f32 0.0, %v1928
        %v1930 = vpop.f32.mrb[0].mxu0
        %1931 = vmatprep.mubr.bf16.mxu0 %v1085
        %1932 = vmatmul.mubr.bf16.gmra.mrb[0].mxu0 %v1084
        %v1933 = vpop.f32.mrb[0].mxu0
        %v1934 = vadd.f32 0.0, %v1933
        %v1935 = vpop.f32.mrb[0].mxu0
        %v1936 = vpop.f32.mrb[0].mxu0
        %v1937 = vadd.f32 0.0, %v1936
        %v1938 = vpop.f32.mrb[0].mxu0
        %1939 = vmatprep.mubr.bf16.mxu0 %v1098
        %1940 = vmatmul.mubr.bf16.gmra.mrb[0].mxu0 %v1097
        %v1941 = vpop.f32.mrb[0].mxu0
        %v1942 = vadd.f32 0.0, %v1941
        %v1943 = vpop.f32.mrb[0].mxu0
        %v1944 = vpop.f32.mrb[0].mxu0
        %v1945 = vadd.f32 0.0, %v1944
        %v1946 = vpop.f32.mrb[0].mxu0
        %1947 = vmatprep.mubr.bf16.mxu0 %v1111
        %1948 = vmatmul.mubr.bf16.gmra.mrb[0].mxu0 %v1110
        %v1949 = vpop.f32.mrb[0].mxu0
        %v1950 = vadd.f32 0.0, %v1949
        %v1951 = vpop.f32.mrb[0].mxu0
        %v1952 = vpop.f32.mrb[0].mxu0
        %v1953 = vadd.f32 0.0, %v1952
        %v1954 = vpop.f32.mrb[0].mxu0
        %1955 = vmatprep.mubr.bf16.mxu0 %v1124
        %1956 = vmatmul.mubr.bf16.gmra.mrb[0].mxu0 %v1123
        %v1957 = vpop.f32.mrb[0].mxu0
        %v1958 = vadd.f32 0.0, %v1957
        %v1959 = vpop.f32.mrb[0].mxu0
        %v1960 = vpop.f32.mrb[0].mxu0
        %v1961 = vadd.f32 0.0, %v1960
        %v1962 = vpop.f32.mrb[0].mxu0
        %1963 = vmatprep.mubr.bf16.mxu0 %v1137
        %1964 = vmatmul.mubr.bf16.gmra.mrb[0].mxu0 %v1136
        %v1965 = vpop.f32.mrb[0].mxu0
        %v1966 = vadd.f32 0.0, %v1965
        %v1967 = vpop.f32.mrb[0].mxu0
        %v1968 = vpop.f32.mrb[0].mxu0
        %v1969 = vadd.f32 0.0, %v1968
        %v1970 = vpop.f32.mrb[0].mxu0
        %1971 = vmatprep.mubr.bf16.mxu0 %v1150
        %1972 = vmatmul.mubr.bf16.gmra.mrb[0].mxu0 %v1149
        %v1973 = vpop.f32.mrb[0].mxu0
        %v1974 = vadd.f32 0.0, %v1973
        %v1975 = vpop.f32.mrb[0].mxu0
        %v1976 = vpop.f32.mrb[0].mxu0
        %v1977 = vadd.f32 0.0, %v1976
        %v1978 = vpop.f32.mrb[0].mxu0
        %1979 = vdwg.mxu0
        %1980 = vmatprep.subr.bf16.mxu0 0
        %1981 = vmatpush1.bf16.msra.mxu0 %v1674
        %1982 = vmatprep.subr.bf16.mxu0 0
        %1983 = vmatpush1.bf16.msra.mxu0 %v1675
        %1984 = vmatprep.subr.bf16.mxu0 0
        %1985 = vmatpush1.bf16.msra.mxu0 %v1676
        %1986 = vmatprep.subr.bf16.mxu0 0
        %1987 = vmatpush1.bf16.msra.mxu0 %v1677
        %1988 = vmatprep.subr.bf16.mxu0 0
        %1989 = vmatpush1.bf16.msra.mxu0 %v1678
        %1990 = vmatprep.subr.bf16.mxu0 0
        %1991 = vmatpush1.bf16.msra.mxu0 %v1679
        %1992 = vmatprep.subr.bf16.mxu0 0
        %1993 = vmatpush1.bf16.msra.mxu0 %v1680
        %1994 = vmatprep.subr.bf16.mxu0 0
        %1995 = vmatpush1.bf16.msra.mxu0 %v1681
        %1996 = vmatprep.subr.bf16.mxu0 0
        %1997 = vmatpush1.bf16.msra.mxu0 %v1682
        %1998 = vmatprep.subr.bf16.mxu0 0
        %1999 = vmatpush1.bf16.msra.mxu0 %v1683
        %2000 = vmatprep.subr.bf16.mxu0 0
        %2001 = vmatpush1.bf16.msra.mxu0 %v1684
        %2002 = vmatprep.subr.bf16.mxu0 0
        %2003 = vmatpush1.bf16.msra.mxu0 %v1685
        %2004 = vmatprep.subr.bf16.mxu0 0
        %2005 = vmatpush1.bf16.msra.mxu0 %v1686
        %2006 = vmatprep.subr.bf16.mxu0 0
        %2007 = vmatpush1.bf16.msra.mxu0 %v1687
        %2008 = vmatprep.subr.bf16.mxu0 0
        %2009 = vmatpush1.bf16.msra.mxu0 %v1688
        %2010 = vmatprep.subr.bf16.mxu0 0
        %2011 = vmatpush1.bf16.msra.mxu0 %v1689
        %2012 = vmatprep.mubr.bf16.mxu0 %v1061
        %2013 = vmatmul.mubr.bf16.gmra.mrb[0].mxu0 %v1060
        %v2014 = vpop.f32.mrb[0].mxu0
        %v2015 = vadd.f32 %v1918, %v2014
        %v2016 = vpop.f32.mrb[0].mxu0
        %v2017 = vpop.f32.mrb[0].mxu0
        %v2018 = vadd.f32 %v1921, %v2017
        %v2019 = vpop.f32.mrb[0].mxu0
        %2020 = vmatprep.mubr.bf16.mxu0 %v1074
        %2021 = vmatmul.mubr.bf16.gmra.mrb[0].mxu0 %v1073
        %v2022 = vpop.f32.mrb[0].mxu0
        %v2023 = vadd.f32 %v1926, %v2022
        %v2024 = vpop.f32.mrb[0].mxu0
        %v2025 = vpop.f32.mrb[0].mxu0
        %v2026 = vadd.f32 %v1929, %v2025
        %v2027 = vpop.f32.mrb[0].mxu0
        %2028 = vmatprep.mubr.bf16.mxu0 %v1087
        %2029 = vmatmul.mubr.bf16.gmra.mrb[0].mxu0 %v1086
        %v2030 = vpop.f32.mrb[0].mxu0
        %v2031 = vadd.f32 %v1934, %v2030
        %v2032 = vpop.f32.mrb[0].mxu0
        %v2033 = vpop.f32.mrb[0].mxu0
        %v2034 = vadd.f32 %v1937, %v2033
        %v2035 = vpop.f32.mrb[0].mxu0
        %2036 = vmatprep.mubr.bf16.mxu0 %v1100
        %2037 = vmatmul.mubr.bf16.gmra.mrb[0].mxu0 %v1099
        %v2038 = vpop.f32.mrb[0].mxu0
        %v2039 = vadd.f32 %v1942, %v2038
        %v2040 = vpop.f32.mrb[0].mxu0
        %v2041 = vpop.f32.mrb[0].mxu0
        %v2042 = vadd.f32 %v1945, %v2041
        %v2043 = vpop.f32.mrb[0].mxu0
        %2044 = vmatprep.mubr.bf16.mxu0 %v1113
        %2045 = vmatmul.mubr.bf16.gmra.mrb[0].mxu0 %v1112
        %v2046 = vpop.f32.mrb[0].mxu0
        %v2047 = vadd.f32 %v1950, %v2046
        %v2048 = vpop.f32.mrb[0].mxu0
        %v2049 = vpop.f32.mrb[0].mxu0
        %v2050 = vadd.f32 %v1953, %v2049
        %v2051 = vpop.f32.mrb[0].mxu0
        %2052 = vmatprep.mubr.bf16.mxu0 %v1126
        %2053 = vmatmul.mubr.bf16.gmra.mrb[0].mxu0 %v1125
        %v2054 = vpop.f32.mrb[0].mxu0
        %v2055 = vadd.f32 %v1958, %v2054
        %v2056 = vpop.f32.mrb[0].mxu0
        %v2057 = vpop.f32.mrb[0].mxu0
        %v2058 = vadd.f32 %v1961, %v2057
        %v2059 = vpop.f32.mrb[0].mxu0
        %2060 = vmatprep.mubr.bf16.mxu0 %v1139
        %2061 = vmatmul.mubr.bf16.gmra.mrb[0].mxu0 %v1138
        %v2062 = vpop.f32.mrb[0].mxu0
        %v2063 = vadd.f32 %v1966, %v2062
        %v2064 = vpop.f32.mrb[0].mxu0
        %v2065 = vpop.f32.mrb[0].mxu0
        %v2066 = vadd.f32 %v1969, %v2065
        %v2067 = vpop.f32.mrb[0].mxu0
        %2068 = vmatprep.mubr.bf16.mxu0 %v1152
        %2069 = vmatmul.mubr.bf16.gmra.mrb[0].mxu0 %v1151
        %v2070 = vpop.f32.mrb[0].mxu0
        %v2071 = vadd.f32 %v1974, %v2070
        %v2072 = vpop.f32.mrb[0].mxu0
        %v2073 = vpop.f32.mrb[0].mxu0
        %v2074 = vadd.f32 %v1977, %v2073
        %v2075 = vpop.f32.mrb[0].mxu0
        %2076 = vdwg.mxu0
        %2077 = vmatprep.subr.bf16.mxu0 0
        %2078 = vmatpush1.bf16.msra.mxu0 %v1690
        %2079 = vmatprep.subr.bf16.mxu0 0
        %2080 = vmatpush1.bf16.msra.mxu0 %v1691
        %2081 = vmatprep.subr.bf16.mxu0 0
        %2082 = vmatpush1.bf16.msra.mxu0 %v1692
        %2083 = vmatprep.subr.bf16.mxu0 0
        %2084 = vmatpush1.bf16.msra.mxu0 %v1693
        %2085 = vmatprep.subr.bf16.mxu0 0
        %2086 = vmatpush1.bf16.msra.mxu0 %v1694
        %2087 = vmatprep.subr.bf16.mxu0 0
        %2088 = vmatpush1.bf16.msra.mxu0 %v1695
        %2089 = vmatprep.subr.bf16.mxu0 0
        %2090 = vmatpush1.bf16.msra.mxu0 %v1696
        %2091 = vmatprep.subr.bf16.mxu0 0
        %2092 = vmatpush1.bf16.msra.mxu0 %v1697
        %2093 = vmatprep.subr.bf16.mxu0 0
        %2094 = vmatpush1.bf16.msra.mxu0 %v1698
        %2095 = vmatprep.subr.bf16.mxu0 0
        %2096 = vmatpush1.bf16.msra.mxu0 %v1699
        %2097 = vmatprep.subr.bf16.mxu0 0
        %2098 = vmatpush1.bf16.msra.mxu0 %v1700
        %2099 = vmatprep.subr.bf16.mxu0 0
        %2100 = vmatpush1.bf16.msra.mxu0 %v1701
        %2101 = vmatprep.subr.bf16.mxu0 0
        %2102 = vmatpush1.bf16.msra.mxu0 %v1702
        %2103 = vmatprep.subr.bf16.mxu0 0
        %2104 = vmatpush1.bf16.msra.mxu0 %v1703
        %2105 = vmatprep.subr.bf16.mxu0 0
        %2106 = vmatpush1.bf16.msra.mxu0 %v1704
        %2107 = vmatprep.subr.bf16.mxu0 0
        %2108 = vmatpush1.bf16.msra.mxu0 %v1705
        %2109 = vmatprep.mubr.bf16.mxu0 %v1063
        %2110 = vmatmul.mubr.bf16.gmra.mrb[0].mxu0 %v1062
        %v2111 = vpop.f32.mrb[0].mxu0
        %v2112 = vadd.f32 %v2015, %v2111
        %v2113 = vpop.f32.mrb[0].mxu0
        %v2114 = vpop.f32.mrb[0].mxu0
        %v2115 = vadd.f32 %v2018, %v2114
        %v2116 = vpop.f32.mrb[0].mxu0
        %2117 = vmatprep.mubr.bf16.mxu0 %v1076
        %2118 = vmatmul.mubr.bf16.gmra.mrb[0].mxu0 %v1075
        %v2119 = vpop.f32.mrb[0].mxu0
        %v2120 = vadd.f32 %v2023, %v2119
        %v2121 = vpop.f32.mrb[0].mxu0
        %v2122 = vpop.f32.mrb[0].mxu0
        %v2123 = vadd.f32 %v2026, %v2122
        %v2124 = vpop.f32.mrb[0].mxu0
        %2125 = vmatprep.mubr.bf16.mxu0 %v1089
        %2126 = vmatmul.mubr.bf16.gmra.mrb[0].mxu0 %v1088
        %v2127 = vpop.f32.mrb[0].mxu0
        %v2128 = vadd.f32 %v2031, %v2127
        %v2129 = vpop.f32.mrb[0].mxu0
        %v2130 = vpop.f32.mrb[0].mxu0
        %v2131 = vadd.f32 %v2034, %v2130
        %v2132 = vpop.f32.mrb[0].mxu0
        %2133 = vmatprep.mubr.bf16.mxu0 %v1102
        %2134 = vmatmul.mubr.bf16.gmra.mrb[0].mxu0 %v1101
        %v2135 = vpop.f32.mrb[0].mxu0
        %v2136 = vadd.f32 %v2039, %v2135
        %v2137 = vpop.f32.mrb[0].mxu0
        %v2138 = vpop.f32.mrb[0].mxu0
        %v2139 = vadd.f32 %v2042, %v2138
        %v2140 = vpop.f32.mrb[0].mxu0
        %2141 = vmatprep.mubr.bf16.mxu0 %v1115
        %2142 = vmatmul.mubr.bf16.gmra.mrb[0].mxu0 %v1114
        %v2143 = vpop.f32.mrb[0].mxu0
        %v2144 = vadd.f32 %v2047, %v2143
        %v2145 = vpop.f32.mrb[0].mxu0
        %v2146 = vpop.f32.mrb[0].mxu0
        %v2147 = vadd.f32 %v2050, %v2146
        %v2148 = vpop.f32.mrb[0].mxu0
        %2149 = vmatprep.mubr.bf16.mxu0 %v1128
        %2150 = vmatmul.mubr.bf16.gmra.mrb[0].mxu0 %v1127
        %v2151 = vpop.f32.mrb[0].mxu0
        %v2152 = vadd.f32 %v2055, %v2151
        %v2153 = vpop.f32.mrb[0].mxu0
        %v2154 = vpop.f32.mrb[0].mxu0
        %v2155 = vadd.f32 %v2058, %v2154
        %v2156 = vpop.f32.mrb[0].mxu0
        %2157 = vmatprep.mubr.bf16.mxu0 %v1141
        %2158 = vmatmul.mubr.bf16.gmra.mrb[0].mxu0 %v1140
        %v2159 = vpop.f32.mrb[0].mxu0
        %v2160 = vadd.f32 %v2063, %v2159
        %v2161 = vpop.f32.mrb[0].mxu0
        %v2162 = vpop.f32.mrb[0].mxu0
        %v2163 = vadd.f32 %v2066, %v2162
        %v2164 = vpop.f32.mrb[0].mxu0
        %2165 = vmatprep.mubr.bf16.mxu0 %v1154
        %2166 = vmatmul.mubr.bf16.gmra.mrb[0].mxu0 %v1153
        %v2167 = vpop.f32.mrb[0].mxu0
        %v2168 = vadd.f32 %v2071, %v2167
        %v2169 = vpop.f32.mrb[0].mxu0
        %v2170 = vpop.f32.mrb[0].mxu0
        %v2171 = vadd.f32 %v2074, %v2170
        %v2172 = vpop.f32.mrb[0].mxu0
        %2173 = vdwg.mxu0
        %2174 = vmatprep.subr.bf16.mxu0 0
        %2175 = vmatpush1.bf16.msra.mxu0 %v1706
        %2176 = vmatprep.subr.bf16.mxu0 0
        %2177 = vmatpush1.bf16.msra.mxu0 %v1707
        %2178 = vmatprep.subr.bf16.mxu0 0
        %2179 = vmatpush1.bf16.msra.mxu0 %v1708
        %2180 = vmatprep.subr.bf16.mxu0 0
        %2181 = vmatpush1.bf16.msra.mxu0 %v1709
        %2182 = vmatprep.subr.bf16.mxu0 0
        %2183 = vmatpush1.bf16.msra.mxu0 %v1710
        %2184 = vmatprep.subr.bf16.mxu0 0
        %2185 = vmatpush1.bf16.msra.mxu0 %v1711
        %2186 = vmatprep.subr.bf16.mxu0 0
        %2187 = vmatpush1.bf16.msra.mxu0 %v1712
        %2188 = vmatprep.subr.bf16.mxu0 0
        %2189 = vmatpush1.bf16.msra.mxu0 %v1713
        %2190 = vmatprep.subr.bf16.mxu0 0
        %2191 = vmatpush1.bf16.msra.mxu0 %v1714
        %2192 = vmatprep.subr.bf16.mxu0 0
        %2193 = vmatpush1.bf16.msra.mxu0 %v1715
        %2194 = vmatprep.subr.bf16.mxu0 0
        %2195 = vmatpush1.bf16.msra.mxu0 %v1716
        %2196 = vmatprep.subr.bf16.mxu0 0
        %2197 = vmatpush1.bf16.msra.mxu0 %v1717
        %2198 = vmatprep.subr.bf16.mxu0 0
        %2199 = vmatpush1.bf16.msra.mxu0 %v1718
        %2200 = vmatprep.subr.bf16.mxu0 0
        %2201 = vmatpush1.bf16.msra.mxu0 %v1719
        %2202 = vmatprep.subr.bf16.mxu0 0
        %2203 = vmatpush1.bf16.msra.mxu0 %v1720
        %2204 = vmatprep.subr.bf16.mxu0 0
        %2205 = vmatpush1.bf16.msra.mxu0 %v1721
        %2206 = vmatprep.mubr.bf16.mxu0 %v1065
        %2207 = vmatmul.mubr.bf16.gmra.mrb[0].mxu0 %v1064
        %v2208 = vpop.f32.mrb[0].mxu0
        %v2209 = vadd.f32 %v2112, %v2208
        %v2210 = vpop.f32.mrb[0].mxu0
        %v2211 = vpop.f32.mrb[0].mxu0
        %v2212 = vadd.f32 %v2115, %v2211
        %v2213 = vpop.f32.mrb[0].mxu0
        %2214 = vmatprep.mubr.bf16.mxu0 %v1078
        %2215 = vmatmul.mubr.bf16.gmra.mrb[0].mxu0 %v1077
        %v2216 = vpop.f32.mrb[0].mxu0
        %v2217 = vadd.f32 %v2120, %v2216
        %v2218 = vpop.f32.mrb[0].mxu0
        %v2219 = vpop.f32.mrb[0].mxu0
        %v2220 = vadd.f32 %v2123, %v2219
        %v2221 = vpop.f32.mrb[0].mxu0
        %2222 = vmatprep.mubr.bf16.mxu0 %v1091
        %2223 = vmatmul.mubr.bf16.gmra.mrb[0].mxu0 %v1090
        %v2224 = vpop.f32.mrb[0].mxu0
        %v2225 = vadd.f32 %v2128, %v2224
        %v2226 = vpop.f32.mrb[0].mxu0
        %v2227 = vpop.f32.mrb[0].mxu0
        %v2228 = vadd.f32 %v2131, %v2227
        %v2229 = vpop.f32.mrb[0].mxu0
        %2230 = vmatprep.mubr.bf16.mxu0 %v1104
        %2231 = vmatmul.mubr.bf16.gmra.mrb[0].mxu0 %v1103
        %v2232 = vpop.f32.mrb[0].mxu0
        %v2233 = vadd.f32 %v2136, %v2232
        %v2234 = vpop.f32.mrb[0].mxu0
        %v2235 = vpop.f32.mrb[0].mxu0
        %v2236 = vadd.f32 %v2139, %v2235
        %v2237 = vpop.f32.mrb[0].mxu0
        %2238 = vmatprep.mubr.bf16.mxu0 %v1117
        %2239 = vmatmul.mubr.bf16.gmra.mrb[0].mxu0 %v1116
        %v2240 = vpop.f32.mrb[0].mxu0
        %v2241 = vadd.f32 %v2144, %v2240
        %v2242 = vpop.f32.mrb[0].mxu0
        %v2243 = vpop.f32.mrb[0].mxu0
        %v2244 = vadd.f32 %v2147, %v2243
        %v2245 = vpop.f32.mrb[0].mxu0
        %2246 = vmatprep.mubr.bf16.mxu0 %v1130
        %2247 = vmatmul.mubr.bf16.gmra.mrb[0].mxu0 %v1129
        %v2248 = vpop.f32.mrb[0].mxu0
        %v2249 = vadd.f32 %v2152, %v2248
        %v2250 = vpop.f32.mrb[0].mxu0
        %v2251 = vpop.f32.mrb[0].mxu0
        %v2252 = vadd.f32 %v2155, %v2251
        %v2253 = vpop.f32.mrb[0].mxu0
        %2254 = vmatprep.mubr.bf16.mxu0 %v1143
        %2255 = vmatmul.mubr.bf16.gmra.mrb[0].mxu0 %v1142
        %v2256 = vpop.f32.mrb[0].mxu0
        %v2257 = vadd.f32 %v2160, %v2256
        %v2258 = vpop.f32.mrb[0].mxu0
        %v2259 = vpop.f32.mrb[0].mxu0
        %v2260 = vadd.f32 %v2163, %v2259
        %v2261 = vpop.f32.mrb[0].mxu0
        %2262 = vmatprep.mubr.bf16.mxu0 %v1156
        %2263 = vmatmul.mubr.bf16.gmra.mrb[0].mxu0 %v1155
        %v2264 = vpop.f32.mrb[0].mxu0
        %v2265 = vadd.f32 %v2168, %v2264
        %v2266 = vpop.f32.mrb[0].mxu0
        %v2267 = vpop.f32.mrb[0].mxu0
        %v2268 = vadd.f32 %v2171, %v2267
        %v2269 = vpop.f32.mrb[0].mxu0
        %2270 = vdwg.mxu0
        %2271 = vmatprep.subr.bf16.mxu0 0
        %2272 = vmatpush1.bf16.msra.mxu0 %v1722
        %2273 = vmatprep.subr.bf16.mxu0 0
        %2274 = vmatpush1.bf16.msra.mxu0 %v1723
        %2275 = vmatprep.subr.bf16.mxu0 0
        %2276 = vmatpush1.bf16.msra.mxu0 %v1724
        %2277 = vmatprep.subr.bf16.mxu0 0
        %2278 = vmatpush1.bf16.msra.mxu0 %v1725
        %2279 = vmatprep.subr.bf16.mxu0 0
        %2280 = vmatpush1.bf16.msra.mxu0 %v1726
        %2281 = vmatprep.subr.bf16.mxu0 0
        %2282 = vmatpush1.bf16.msra.mxu0 %v1727
        %2283 = vmatprep.subr.bf16.mxu0 0
        %2284 = vmatpush1.bf16.msra.mxu0 %v1728
        %2285 = vmatprep.subr.bf16.mxu0 0
        %2286 = vmatpush1.bf16.msra.mxu0 %v1729
        %2287 = vmatprep.subr.bf16.mxu0 0
        %2288 = vmatpush1.bf16.msra.mxu0 %v1730
        %2289 = vmatprep.subr.bf16.mxu0 0
        %2290 = vmatpush1.bf16.msra.mxu0 %v1731
        %2291 = vmatprep.subr.bf16.mxu0 0
        %2292 = vmatpush1.bf16.msra.mxu0 %v1732
        %2293 = vmatprep.subr.bf16.mxu0 0
        %2294 = vmatpush1.bf16.msra.mxu0 %v1733
        %2295 = vmatprep.subr.bf16.mxu0 0
        %2296 = vmatpush1.bf16.msra.mxu0 %v1734
        %2297 = vmatprep.subr.bf16.mxu0 0
        %2298 = vmatpush1.bf16.msra.mxu0 %v1735
        %2299 = vmatprep.subr.bf16.mxu0 0
        %2300 = vmatpush1.bf16.msra.mxu0 %v1736
        %2301 = vmatprep.subr.bf16.mxu0 0
        %2302 = vmatpush1.bf16.msra.mxu0 %v1737
        %2303 = vmatprep.mubr.bf16.mxu0 %v1067
        %2304 = vmatmul.mubr.bf16.gmra.mrb[0].mxu0 %v1066
        %v2305 = vpop.f32.mrb[0].mxu0
        %v2306 = vadd.f32 %v2209, %v2305
        %v2307 = vpop.f32.mrb[0].mxu0
        %v2308 = vpop.f32.mrb[0].mxu0
        %v2309 = vadd.f32 %v2212, %v2308
        %v2310 = vpop.f32.mrb[0].mxu0
        %2311 = vmatprep.mubr.bf16.mxu0 %v1080
        %2312 = vmatmul.mubr.bf16.gmra.mrb[0].mxu0 %v1079
        %v2313 = vpop.f32.mrb[0].mxu0
        %v2314 = vadd.f32 %v2217, %v2313
        %v2315 = vpop.f32.mrb[0].mxu0
        %v2316 = vpop.f32.mrb[0].mxu0
        %v2317 = vadd.f32 %v2220, %v2316
        %v2318 = vpop.f32.mrb[0].mxu0
        %2319 = vmatprep.mubr.bf16.mxu0 %v1093
        %2320 = vmatmul.mubr.bf16.gmra.mrb[0].mxu0 %v1092
        %v2321 = vpop.f32.mrb[0].mxu0
        %v2322 = vadd.f32 %v2225, %v2321
        %v2323 = vpop.f32.mrb[0].mxu0
        %v2324 = vpop.f32.mrb[0].mxu0
        %v2325 = vadd.f32 %v2228, %v2324
        %v2326 = vpop.f32.mrb[0].mxu0
        %2327 = vmatprep.mubr.bf16.mxu0 %v1106
        %2328 = vmatmul.mubr.bf16.gmra.mrb[0].mxu0 %v1105
        %v2329 = vpop.f32.mrb[0].mxu0
        %v2330 = vadd.f32 %v2233, %v2329
        %v2331 = vpop.f32.mrb[0].mxu0
        %v2332 = vpop.f32.mrb[0].mxu0
        %v2333 = vadd.f32 %v2236, %v2332
        %v2334 = vpop.f32.mrb[0].mxu0
        %2335 = vmatprep.mubr.bf16.mxu0 %v1119
        %2336 = vmatmul.mubr.bf16.gmra.mrb[0].mxu0 %v1118
        %v2337 = vpop.f32.mrb[0].mxu0
        %v2338 = vadd.f32 %v2241, %v2337
        %v2339 = vpop.f32.mrb[0].mxu0
        %v2340 = vpop.f32.mrb[0].mxu0
        %v2341 = vadd.f32 %v2244, %v2340
        %v2342 = vpop.f32.mrb[0].mxu0
        %2343 = vmatprep.mubr.bf16.mxu0 %v1132
        %2344 = vmatmul.mubr.bf16.gmra.mrb[0].mxu0 %v1131
        %v2345 = vpop.f32.mrb[0].mxu0
        %v2346 = vadd.f32 %v2249, %v2345
        %v2347 = vpop.f32.mrb[0].mxu0
        %v2348 = vpop.f32.mrb[0].mxu0
        %v2349 = vadd.f32 %v2252, %v2348
        %v2350 = vpop.f32.mrb[0].mxu0
        %2351 = vmatprep.mubr.bf16.mxu0 %v1145
        %2352 = vmatmul.mubr.bf16.gmra.mrb[0].mxu0 %v1144
        %v2353 = vpop.f32.mrb[0].mxu0
        %v2354 = vadd.f32 %v2257, %v2353
        %v2355 = vpop.f32.mrb[0].mxu0
        %v2356 = vpop.f32.mrb[0].mxu0
        %v2357 = vadd.f32 %v2260, %v2356
        %v2358 = vpop.f32.mrb[0].mxu0
        %2359 = vmatprep.mubr.bf16.mxu0 %v1158
        %2360 = vmatmul.mubr.bf16.gmra.mrb[0].mxu0 %v1157
        %v2361 = vpop.f32.mrb[0].mxu0
        %v2362 = vadd.f32 %v2265, %v2361
        %v2363 = vpop.f32.mrb[0].mxu0
        %v2364 = vpop.f32.mrb[0].mxu0
        %v2365 = vadd.f32 %v2268, %v2364
        %v2366 = vpop.f32.mrb[0].mxu0
        %2367 = vdwg.mxu0
        %2368 = vmatprep.subr.bf16.mxu0 0
        %2369 = vmatpush1.bf16.msra.mxu0 %v1738
        %2370 = vmatprep.subr.bf16.mxu0 0
        %2371 = vmatpush1.bf16.msra.mxu0 %v1739
        %2372 = vmatprep.subr.bf16.mxu0 0
        %2373 = vmatpush1.bf16.msra.mxu0 %v1740
        %2374 = vmatprep.subr.bf16.mxu0 0
        %2375 = vmatpush1.bf16.msra.mxu0 %v1741
        %2376 = vmatprep.subr.bf16.mxu0 0
        %2377 = vmatpush1.bf16.msra.mxu0 %v1742
        %2378 = vmatprep.subr.bf16.mxu0 0
        %2379 = vmatpush1.bf16.msra.mxu0 %v1743
        %2380 = vmatprep.subr.bf16.mxu0 0
        %2381 = vmatpush1.bf16.msra.mxu0 %v1744
        %2382 = vmatprep.subr.bf16.mxu0 0
        %2383 = vmatpush1.bf16.msra.mxu0 %v1745
        %2384 = vmatprep.subr.bf16.mxu0 0
        %2385 = vmatpush1.bf16.msra.mxu0 %v1746
        %2386 = vmatprep.subr.bf16.mxu0 0
        %2387 = vmatpush1.bf16.msra.mxu0 %v1747
        %2388 = vmatprep.subr.bf16.mxu0 0
        %2389 = vmatpush1.bf16.msra.mxu0 %v1748
        %2390 = vmatprep.subr.bf16.mxu0 0
        %2391 = vmatpush1.bf16.msra.mxu0 %v1749
        %2392 = vmatprep.subr.bf16.mxu0 0
        %2393 = vmatpush1.bf16.msra.mxu0 %v1750
        %2394 = vmatprep.subr.bf16.mxu0 0
        %2395 = vmatpush1.bf16.msra.mxu0 %v1751
        %2396 = vmatprep.subr.bf16.mxu0 0
        %2397 = vmatpush1.bf16.msra.mxu0 %v1752
        %2398 = vmatprep.subr.bf16.mxu0 0
        %2399 = vmatpush1.bf16.msra.mxu0 %v1753
        %2400 = vmatprep.mubr.bf16.mxu0 %v1069
        %2401 = vmatmul.mubr.bf16.gmra.mrb[0].mxu0 %v1068
        %v2402 = vpop.f32.mrb[0].mxu0
        %v2403 = vadd.f32 %v2306, %v2402
        %v2404 = vpop.f32.mrb[0].mxu0
        %v2405 = vpop.f32.mrb[0].mxu0
        %v2406 = vadd.f32 %v2309, %v2405
        %v2407 = vpop.f32.mrb[0].mxu0
        %2408 = vmatprep.mubr.bf16.mxu0 %v1082
        %2409 = vmatmul.mubr.bf16.gmra.mrb[0].mxu0 %v1081
        %v2410 = vpop.f32.mrb[0].mxu0
        %v2411 = vadd.f32 %v2314, %v2410
        %v2412 = vpop.f32.mrb[0].mxu0
        %v2413 = vpop.f32.mrb[0].mxu0
        %v2414 = vadd.f32 %v2317, %v2413
        %v2415 = vpop.f32.mrb[0].mxu0
        %2416 = vmatprep.mubr.bf16.mxu0 %v1095
        %2417 = vmatmul.mubr.bf16.gmra.mrb[0].mxu0 %v1094
        %v2418 = vpop.f32.mrb[0].mxu0
        %v2419 = vadd.f32 %v2322, %v2418
        %v2420 = vpop.f32.mrb[0].mxu0
        %v2421 = vpop.f32.mrb[0].mxu0
        %v2422 = vadd.f32 %v2325, %v2421
        %v2423 = vpop.f32.mrb[0].mxu0
        %2424 = vmatprep.mubr.bf16.mxu0 %v1108
        %2425 = vmatmul.mubr.bf16.gmra.mrb[0].mxu0 %v1107
        %v2426 = vpop.f32.mrb[0].mxu0
        %v2427 = vadd.f32 %v2330, %v2426
        %v2428 = vpop.f32.mrb[0].mxu0
        %v2429 = vpop.f32.mrb[0].mxu0
        %v2430 = vadd.f32 %v2333, %v2429
        %v2431 = vpop.f32.mrb[0].mxu0
        %2432 = vmatprep.mubr.bf16.mxu0 %v1121
        %2433 = vmatmul.mubr.bf16.gmra.mrb[0].mxu0 %v1120
        %v2434 = vpop.f32.mrb[0].mxu0
        %v2435 = vadd.f32 %v2338, %v2434
        %v2436 = vpop.f32.mrb[0].mxu0
        %v2437 = vpop.f32.mrb[0].mxu0
        %v2438 = vadd.f32 %v2341, %v2437
        %v2439 = vpop.f32.mrb[0].mxu0
        %2440 = vmatprep.mubr.bf16.mxu0 %v1134
        %2441 = vmatmul.mubr.bf16.gmra.mrb[0].mxu0 %v1133
        %v2442 = vpop.f32.mrb[0].mxu0
        %v2443 = vadd.f32 %v2346, %v2442
        %v2444 = vpop.f32.mrb[0].mxu0
        %v2445 = vpop.f32.mrb[0].mxu0
        %v2446 = vadd.f32 %v2349, %v2445
        %v2447 = vpop.f32.mrb[0].mxu0
        %2448 = vmatprep.mubr.bf16.mxu0 %v1147
        %2449 = vmatmul.mubr.bf16.gmra.mrb[0].mxu0 %v1146
        %v2450 = vpop.f32.mrb[0].mxu0
        %v2451 = vadd.f32 %v2354, %v2450
        %v2452 = vpop.f32.mrb[0].mxu0
        %v2453 = vpop.f32.mrb[0].mxu0
        %v2454 = vadd.f32 %v2357, %v2453
        %v2455 = vpop.f32.mrb[0].mxu0
        %2456 = vmatprep.mubr.bf16.mxu0 %v1160
        %2457 = vmatmul.mubr.bf16.gmra.mrb[0].mxu0 %v1159
        %v2458 = vpop.f32.mrb[0].mxu0
        %v2459 = vadd.f32 %v2362, %v2458
        %v2460 = vpop.f32.mrb[0].mxu0
        %v2461 = vpop.f32.mrb[0].mxu0
        %v2462 = vadd.f32 %v2365, %v2461
        %v2463 = vpop.f32.mrb[0].mxu0
        %2464 = vdwg.mxu0
        %2465 = vmatprep.subr.bf16.mxu0 0
        %2466 = vmatpush1.bf16.msra.mxu0 %v1754
        %2467 = vmatprep.subr.bf16.mxu0 0
        %2468 = vmatpush1.bf16.msra.mxu0 %v1755
        %2469 = vmatprep.subr.bf16.mxu0 0
        %2470 = vmatpush1.bf16.msra.mxu0 %v1756
        %2471 = vmatprep.subr.bf16.mxu0 0
        %2472 = vmatpush1.bf16.msra.mxu0 %v1757
        %2473 = vmatprep.subr.bf16.mxu0 0
        %2474 = vmatpush1.bf16.msra.mxu0 0
        %2475 = vmatprep.subr.bf16.mxu0 0
        %2476 = vmatpush1.bf16.msra.mxu0 0
        %2477 = vmatprep.subr.bf16.mxu0 0
        %2478 = vmatpush1.bf16.msra.mxu0 0
        %2479 = vmatprep.subr.bf16.mxu0 0
        %2480 = vmatpush1.bf16.msra.mxu0 0
        %2481 = vmatprep.subr.bf16.mxu0 0
        %2482 = vmatpush1.bf16.msra.mxu0 0
        %2483 = vmatprep.subr.bf16.mxu0 0
        %2484 = vmatpush1.bf16.msra.mxu0 0
        %2485 = vmatprep.subr.bf16.mxu0 0
        %2486 = vmatpush1.bf16.msra.mxu0 0
        %2487 = vmatprep.subr.bf16.mxu0 0
        %2488 = vmatpush1.bf16.msra.mxu0 0
        %2489 = vmatprep.subr.bf16.mxu0 0
        %2490 = vmatpush1.bf16.msra.mxu0 0
        %2491 = vmatprep.subr.bf16.mxu0 0
        %2492 = vmatpush1.bf16.msra.mxu0 0
        %2493 = vmatprep.subr.bf16.mxu0 0
        %2494 = vmatpush1.bf16.msra.mxu0 0
        %2495 = vmatprep.subr.bf16.mxu0 0
        %2496 = vmatpush1.bf16.msra.mxu0 0
        %2497 = vmatprep.mubr.bf16.mxu0 0
        %2498 = vmatmul.mubr.bf16.gmra.mrb[0].mxu0 %v1860
        %v2499 = vpop.f32.mrb[0].mxu0
        %v2500 = vadd.f32 %v2403, %v2499
        %v2501 = vpop.f32.mrb[0].mxu0
        %v2502 = vpop.f32.mrb[0].mxu0
        %v2503 = vadd.f32 %v2406, %v2502
        %v2504 = vpop.f32.mrb[0].mxu0
        %2505 = vmatprep.mubr.bf16.mxu0 0
        %2506 = vmatmul.mubr.bf16.gmra.mrb[0].mxu0 %v1863
        %v2507 = vpop.f32.mrb[0].mxu0
        %v2508 = vadd.f32 %v2411, %v2507
        %v2509 = vpop.f32.mrb[0].mxu0
        %v2510 = vpop.f32.mrb[0].mxu0
        %v2511 = vadd.f32 %v2414, %v2510
        %v2512 = vpop.f32.mrb[0].mxu0
        %2513 = vmatprep.mubr.bf16.mxu0 0
        %2514 = vmatmul.mubr.bf16.gmra.mrb[0].mxu0 %v1866
        %v2515 = vpop.f32.mrb[0].mxu0
        %v2516 = vadd.f32 %v2419, %v2515
        %v2517 = vpop.f32.mrb[0].mxu0
        %v2518 = vpop.f32.mrb[0].mxu0
        %v2519 = vadd.f32 %v2422, %v2518
        %v2520 = vpop.f32.mrb[0].mxu0
        %2521 = vmatprep.mubr.bf16.mxu0 0
        %2522 = vmatmul.mubr.bf16.gmra.mrb[0].mxu0 %v1869
        %v2523 = vpop.f32.mrb[0].mxu0
        %v2524 = vadd.f32 %v2427, %v2523
        %v2525 = vpop.f32.mrb[0].mxu0
        %v2526 = vpop.f32.mrb[0].mxu0
        %v2527 = vadd.f32 %v2430, %v2526
        %v2528 = vpop.f32.mrb[0].mxu0
        %2529 = vmatprep.mubr.bf16.mxu0 0
        %2530 = vmatmul.mubr.bf16.gmra.mrb[0].mxu0 %v1872
        %v2531 = vpop.f32.mrb[0].mxu0
        %v2532 = vadd.f32 %v2435, %v2531
        %v2533 = vpop.f32.mrb[0].mxu0
        %v2534 = vpop.f32.mrb[0].mxu0
        %v2535 = vadd.f32 %v2438, %v2534
        %v2536 = vpop.f32.mrb[0].mxu0
        %2537 = vmatprep.mubr.bf16.mxu0 0
        %2538 = vmatmul.mubr.bf16.gmra.mrb[0].mxu0 %v1875
        %v2539 = vpop.f32.mrb[0].mxu0
        %v2540 = vadd.f32 %v2443, %v2539
        %v2541 = vpop.f32.mrb[0].mxu0
        %v2542 = vpop.f32.mrb[0].mxu0
        %v2543 = vadd.f32 %v2446, %v2542
        %v2544 = vpop.f32.mrb[0].mxu0
        %2545 = vmatprep.mubr.bf16.mxu0 0
        %2546 = vmatmul.mubr.bf16.gmra.mrb[0].mxu0 %v1878
        %v2547 = vpop.f32.mrb[0].mxu0
        %v2548 = vadd.f32 %v2451, %v2547
        %v2549 = vpop.f32.mrb[0].mxu0
        %v2550 = vpop.f32.mrb[0].mxu0
        %v2551 = vadd.f32 %v2454, %v2550
        %v2552 = vpop.f32.mrb[0].mxu0
        %2553 = vmatprep.mubr.bf16.mxu0 0
        %2554 = vmatmul.mubr.bf16.gmra.mrb[0].mxu0 %v1881
        %v2555 = vpop.f32.mrb[0].mxu0
        %v2556 = vadd.f32 %v2459, %v2555
        %v2557 = vpop.f32.mrb[0].mxu0
        %v2558 = vpop.f32.mrb[0].mxu0
        %v2559 = vadd.f32 %v2462, %v2558
        %v2560 = vpop.f32.mrb[0].mxu0
        %2561 = vdwg.mxu0
        %v2562 = vmax.f32 %v2500, %v2516
        %v2563 = vmax.f32 %v2503, %v2519
        %v2564 = vmax.f32 %v2508, %v2524
        %v2565 = vmax.f32 %v2511, %v2527
        %v2566 = vmax.f32 %v2532, %v2548
        %v2567 = vmax.f32 %v2535, %v2551
        %v2568 = vmax.f32 %v2540, %v2556
        %v2569 = vmax.f32 %v2543, %v2559
        %v2570 = vmax.f32 %v2562, %v2566
        %v2571 = vmax.f32 %v2563, %v2567
        %v2572 = vmax.f32 %v2564, %v2568
        %v2573 = vmax.f32 %v2565, %v2569
        %v2574 = vld [vmem:[%s2] sm:$0x1]
        %v2576 = vlaneseq
        %v2577 = vshrl.u32 %v2576, 7
        %v2578 = vsub.s32 0, %v2577
        %v2579 = vrot.slane %v2574, %v2578
        %v2581 = vadd.f32 %v2570, %v2579
        %v2582 = vadd.f32 %v2571, %v2579
        %v2583 = vadd.f32 %v2572, %v2579
        %v2584 = vadd.f32 %v2573, %v2579
        %v2585 = vmax.f32 %v2581, 0.0
        %v2586 = vmax.f32 %v2582, 0.0
        %v2587 = vmax.f32 %v2583, 0.0
        %v2588 = vmax.f32 %v2584, 0.0
        %v2589 = vpack.c.bf16 %v2586, %v2585
        %v2590 = vpack.c.bf16 %v2588, %v2587
        %v2593 = vunpack.c.l.b16 %v2589
        %v2594 = vunpack.c.h.b16 %v2589
        %v2595 = vunpack.c.l.b16 %v2590
        %v2596 = vunpack.c.h.b16 %v2590
        %v2597 = vpack.c.b16 %v2593, %v2593
        %v2598 = vpack.c.b16 %v2594, %v2594
        %v2599 = vpack.c.b16 %v2595, %v2595
        %v2600 = vpack.c.b16 %v2596, %v2596
        %2605 = vst [vmem:[%s423] sm:$0xf] %v2597
        %2606 = vst [vmem:[%s423 + $0x4] sm:$0xf] %v2598
        %2607 = vst [vmem:[%s423 + $0x8] sm:$0xf] %v2599
        %2608 = vst [vmem:[%s423 + $0xc] sm:$0xf] %v2600
        %s2609 = smul.u32 4, %s14
        %p2610 = scmp.lt.s32.totalorder %s2609, 7
        %s2611 = scalar_select %p2610, %s2609, 7
        %s2612 = smul.addr %s2611, 4
        %s2613 = scalar_lea.vmem %s3, %s2612
        // Predicated region
        $region59: #{ace_forward.4} parent=53 // pred_check
          %p2614 = pneg %p100
        $region60: #{ace_forward.4} parent=53 // pred_check_branch
          %2616 = sbr.rel (%p2614) target = $region62
        $region61: #{ace_forward.4} parent=53 // pred_region
          %s2617 = smul.u32 4, %s14
        $region62: #{ace_forward.4} parent=53 // pred_fallthru
          _
      $region54: #{ace_forward.4} parent=5 // pred_fallthru
        _
      %p2618 = scmp.le.s32.totalorder 2, %s9
      // Predicated region
      $region63: #{ace_forward.4} parent=5 // pred_check
        %p2619 = pneg %p2618
      $region64: #{ace_forward.4} parent=5 // pred_check_branch
        %2621 = sbr.rel (%p2619) target = $region66
      $region65: #{ace_forward.4} parent=5 // pred_region
        %s2622 = ssub.s32 %s9, 2
        // Predicated region
        $region67: #{ace_forward.4} parent=65 // pred_check
          %p2623 = pneg %p106
        $region68: #{ace_forward.4} parent=65 // pred_check_branch
          %2625 = sbr.rel (%p2623) target = $region70
        $region69: #{ace_forward.4} parent=65 // pred_region
          %s2626 = smul.u32 4, %s15
          %p2627 = scmp.lt.s32.totalorder %s2626, 7
          %s2628 = scalar_select %p2627, %s2626, 7
          %s2629 = smul.addr %s2628, 4
          %s2630 = scalar_lea.vmem %s3, %s2629
        $region70: #{ace_forward.4} parent=65 // pred_fallthru
          _
      $region66: #{ace_forward.4} parent=5 // pred_fallthru
        _
    $region6: #{ace_forward.4} parent=1 // loop_footer
      %s13 = sadd.s32 1, %s9
    $region7: #{ace_forward.4} parent=1 // loop_footer_branch
      %8 = sbr.rel target = $region3
    $region8: #{ace_forward.4} parent=1 // loop_exit
      _

// kernel: ace_forward.5
$region0: #{ace_forward.5}
  #allocation0 [shape = 'u32[]', space=smem, size = 0x4, offset = 0x4, fixed_abs, tag = 'smem constant byte address 0x4 - core index']
  #allocation1 [shape = 'u32[144,128]{1,0:T(1,128)}', space=vmem, size = 0x12000, scoped, tag = 'internal scratch']
  %s0 = inlined_call_operand.vmem [shape: bf16[32,3136], index: 0, kind: input, shape index: {}]
  %s1 = inlined_call_operand.vmem [shape: bf16[3136,128], index: 1, kind: input, shape index: {}]
  %s2 = inlined_call_operand.vmem [shape: f32[1,128], index: 2, kind: input, shape index: {}]
  %s3 = inlined_call_operand.vmem [shape: f32[32,128], index: 3, kind: output, shape index: {}]
  %s4 = sld [smem:[#allocation0]]
  $region45: #{ace_forward.5} parent=0
    _
  %s6 = ssub.s32 1, %s4
  %s7 = scalar_select 0, %s6, %s4
  loop: start=0, step=1, limit=4
  $region2: #{ace_forward.5} parent=0 // loop_pre_header
    _
  $region3: #{ace_forward.5} parent=0 // loop_header
    %s9 = sphi 0, %s13
    %p10 = scmp.ge.s32.totalorder %s9, 4
    %s19 = sphi 0, %s21
    %s22 = sphi 0, %s19
    %s23 = sphi 0, %s22
    %s39 = sphi 0, %s23
    %s43 = sphi 0, %s43
    %s45 = sphi 0, %s43
    %s46 = sphi 0, %s45
    %s60 = sphi 0, %s46
    %s64 = sphi 0, %s64
    %s66 = sphi 0, %s64
    %s67 = sphi 0, %s66
    %s81 = sphi 0, %s67
    %s87 = sphi 0, %s89
    %s90 = sphi 0, %s87
    %s91 = sphi 0, %s90
    %s107 = sphi 0, %s91
  $region4: #{ace_forward.5} parent=0 // loop_header_branch
    %12 = sbr.rel (%p10) target = $region8
  $region5: #{ace_forward.5} parent=0 // loop_body
    %s14 = ssub.s32 %s9, 1
    %s15 = ssub.s32 %s9, 2
    %s16 = sadd.s32 %s9, 1
    %s17 = ssub.s32 %s9, %s16
    %p18 = scmp.eq.s32.totalorder %s17, 0
    %s20 = sadd.s32 %s19, 1
    %s21 = scalar_select %p18, %s19, %s20
    %p24 = pneg %p18
    %p25 = scmp.eq.s32.totalorder %s9, 1
    %p26 = por %p24, %p25
    %p27 = scmp.ne.s32.totalorder %s19, %s22
    %p28 = scmp.eq.s32.totalorder %s9, 0
    %p29 = por %p27, %p28
    %p30 = scmp.ne.s32.totalorder %s19, %s22
    %p31 = scmp.eq.s32.totalorder %s14, 1
    %p32 = por %p30, %p31
    %p33 = scmp.ne.s32.totalorder %s22, %s23
    %p34 = scmp.eq.s32.totalorder %s14, 0
    %p35 = por %p33, %p34
    %p36 = scmp.ne.s32.totalorder %s22, %s23
    %p37 = scmp.eq.s32.totalorder %s15, 1
    %p38 = por %p36, %p37
    %p40 = scmp.ne.s32.totalorder %s23, %s39
    %p41 = scmp.eq.s32.totalorder %s15, 0
    %p42 = por %p40, %p41
    %s44 = sadd.s32 %s43, 1
    %p47 = scmp.eq.s32.totalorder %s9, 1
    %p48 = scmp.ne.s32.totalorder %s43, %s45
    %p49 = scmp.eq.s32.totalorder %s9, 0
    %p50 = por %p48, %p49
    %p51 = scmp.ne.s32.totalorder %s43, %s45
    %p52 = scmp.eq.s32.totalorder %s14, 1
    %p53 = por %p51, %p52
    %p54 = scmp.ne.s32.totalorder %s45, %s46
    %p55 = scmp.eq.s32.totalorder %s14, 0
    %p56 = por %p54, %p55
    %p57 = scmp.ne.s32.totalorder %s45, %s46
    %p58 = scmp.eq.s32.totalorder %s15, 1
    %p59 = por %p57, %p58
    %p61 = scmp.ne.s32.totalorder %s46, %s60
    %p62 = scmp.eq.s32.totalorder %s15, 0
    %p63 = por %p61, %p62
    %s65 = sadd.s32 %s64, 1
    %p68 = scmp.eq.s32.totalorder %s9, 1
    %p69 = scmp.ne.s32.totalorder %s64, %s66
    %p70 = scmp.eq.s32.totalorder %s9, 0
    %p71 = por %p69, %p70
    %p72 = scmp.ne.s32.totalorder %s64, %s66
    %p73 = scmp.eq.s32.totalorder %s14, 1
    %p74 = por %p72, %p73
    %p75 = scmp.ne.s32.totalorder %s66, %s67
    %p76 = scmp.eq.s32.totalorder %s14, 0
    %p77 = por %p75, %p76
    %p78 = scmp.ne.s32.totalorder %s66, %s67
    %p79 = scmp.eq.s32.totalorder %s15, 1
    %p80 = por %p78, %p79
    %p82 = scmp.ne.s32.totalorder %s67, %s81
    %p83 = scmp.eq.s32.totalorder %s15, 0
    %p84 = por %p82, %p83
    %s85 = ssub.s32 %s9, %s16
    %p86 = scmp.eq.s32.totalorder %s85, 0
    %s88 = sadd.s32 %s87, 1
    %s89 = scalar_select %p86, %s87, %s88
    %p92 = pneg %p86
    %p93 = scmp.eq.s32.totalorder %s9, 1
    %p94 = por %p92, %p93
    %p95 = scmp.ne.s32.totalorder %s87, %s90
    %p96 = scmp.eq.s32.totalorder %s9, 0
    %p97 = por %p95, %p96
    %p98 = scmp.ne.s32.totalorder %s87, %s90
    %p99 = scmp.eq.s32.totalorder %s14, 1
    %p100 = por %p98, %p99
    %p101 = scmp.ne.s32.totalorder %s90, %s91
    %p102 = scmp.eq.s32.totalorder %s14, 0
    %p103 = por %p101, %p102
    %p104 = scmp.ne.s32.totalorder %s90, %s91
    %p105 = scmp.eq.s32.totalorder %s15, 1
    %p106 = por %p104, %p105
    %p108 = scmp.ne.s32.totalorder %s91, %s107
    %p109 = scmp.eq.s32.totalorder %s15, 0
    %p110 = por %p108, %p109
    %p111 = scmp.le.s32.totalorder 1, %s9
    %p112 = scmp.lt.s32.totalorder %s9, 3
    %p113 = pnand %p111, %p112
    %p114 = pneg %p113
    // Predicated region
    $region9: #{ace_forward.5} parent=5 // pred_check
      _
    $region10: #{ace_forward.5} parent=5 // pred_check_branch
      %116 = sbr.rel (%p113) target = $region12
    $region11: #{ace_forward.5} parent=5 // pred_region
      %s117 = ssub.s32 %s9, 1
      // Predicated region
      $region13: #{ace_forward.5} parent=11 // pred_check
        %p118 = pneg %p56
      $region14: #{ace_forward.5} parent=11 // pred_check_branch
        %120 = sbr.rel (%p118) target = $region16
      $region15: #{ace_forward.5} parent=11 // pred_region
        _
      $region16: #{ace_forward.5} parent=11 // pred_fallthru
        _
      // Predicated region
      $region17: #{ace_forward.5} parent=11 // pred_check
        %p121 = pneg %p77
      $region18: #{ace_forward.5} parent=11 // pred_check_branch
        %123 = sbr.rel (%p121) target = $region20
      $region19: #{ace_forward.5} parent=11 // pred_region
        _
      $region20: #{ace_forward.5} parent=11 // pred_fallthru
        _
    $region12: #{ace_forward.5} parent=5 // pred_fallthru
      _
    %p124 = scmp.lt.s32.totalorder %s9, 2
    // Predicated region
    $region21: #{ace_forward.5} parent=5 // pred_check
      %p125 = pneg %p124
    $region22: #{ace_forward.5} parent=5 // pred_check_branch
      %127 = sbr.rel (%p125) target = $region24
    $region23: #{ace_forward.5} parent=5 // pred_region
      // Predicated region
      $region25: #{ace_forward.5} parent=23 // pred_check
        %p128 = pneg %p29
      $region26: #{ace_forward.5} parent=23 // pred_check_branch
        %130 = sbr.rel (%p128) target = $region28
      $region27: #{ace_forward.5} parent=23 // pred_region
        %s131 = smul.u32 2, %s9
        %p132 = scmp.lt.s32.totalorder %s131, 3
        %s133 = scalar_select %p132, %s131, 3
        %s134 = smul.addr %s133, 25
        %s135 = smul.addr %s134, 4
        %s136 = scalar_lea.vmem %s0, %s135
        %s137 = smul.u32 2, %s9
      $region28: #{ace_forward.5} parent=23 // pred_fallthru
        _
    $region24: #{ace_forward.5} parent=5 // pred_fallthru
      _
    %p138 = scmp.le.s32.totalorder 1, %s9
    %p139 = scmp.lt.s32.totalorder %s9, 3
    %p140 = pnand %p138, %p139
    %p141 = pneg %p140
    // Predicated region
    $region29: #{ace_forward.5} parent=5 // pred_check
      _
    $region30: #{ace_forward.5} parent=5 // pred_check_branch
      %143 = sbr.rel (%p140) target = $region32
    $region31: #{ace_forward.5} parent=5 // pred_region
      %s144 = ssub.s32 %s9, 1
      %s145 = smul.u32 2, %s14
      %p146 = scmp.lt.s32.totalorder %s145, 3
      %s147 = scalar_select %p146, %s145, 3
      %s148 = smul.addr %s147, 25
      %s149 = smul.addr %s148, 4
      %s150 = scalar_lea.vmem %s0, %s149
      %p151 = pneg %p35
      %p152 = pneg %p32
      %p153 = pneg %p56
      %p154 = pneg %p53
      %p155 = pneg %p77
      %p156 = pneg %p74
      %p157 = pneg %p103
      %p158 = pneg %p100
      %s159 = smul.u32 2, %s14
      %p160 = scmp.lt.s32.totalorder %s159, 3
      %s161 = scalar_select %p160, %s159, 3
      %s162 = smul.addr %s161, 8
      %s163 = scalar_lea.vmem %s3, %s162
      %s164 = smul.u32 2, %s14
      %p165 = scmp.lt.s32.totalorder %s164, 3
      %s166 = scalar_select %p165, %s164, 3
      %s167 = smul.addr %s166, 25
      %s168 = smul.addr %s167, 4
      %s169 = scalar_lea.vmem %s0, %s168
      %s170 = smul.u32 2, %s14
      %s171 = smul.u32 2, %s14
      %p172 = scmp.lt.s32.totalorder %s171, 3
      %s173 = scalar_select %p172, %s171, 3
      %s174 = smul.addr %s173, 8
      %s175 = scalar_lea.vmem %s3, %s174
      %s176 = smul.u32 2, %s14
      %v178 = vld [vmem:[%s169] sm:$0xff]
      %v179 = vld [vmem:[%s169 + $0x8] sm:$0xff]
      %v180 = vld [vmem:[%s169 + $0x10] sm:$0xff]
      %v181 = vld [vmem:[%s169 + $0x18] sm:$0xff]
      %v182 = vld [vmem:[%s169 + $0x20] sm:$0xff]
      %v183 = vld [vmem:[%s169 + $0x28] sm:$0xff]
      %v184 = vld [vmem:[%s169 + $0x30] sm:$0xff]
      %v185 = vld [vmem:[%s169 + $0x38] sm:$0xff]
      %v186 = vld [vmem:[%s169 + $0x40] sm:$0xff]
      %v187 = vld [vmem:[%s169 + $0x48] sm:$0xff]
      %v188 = vld [vmem:[%s169 + $0x50] sm:$0xff]
      %v189 = vld [vmem:[%s169 + $0x58] sm:$0xff]
      %v190 = vld [vmem:[%s169 + $0x60] sm:$0xf]
      %v191 = vld [vmem:[%s169 + $0x64] sm:$0xff]
      %v192 = vld [vmem:[%s169 + $0x6c] sm:$0xff]
      %v193 = vld [vmem:[%s169 + $0x74] sm:$0xff]
      %v194 = vld [vmem:[%s169 + $0x7c] sm:$0xff]
      %v195 = vld [vmem:[%s169 + $0x84] sm:$0xff]
      %v196 = vld [vmem:[%s169 + $0x8c] sm:$0xff]
      %v197 = vld [vmem:[%s169 + $0x94] sm:$0xff]
      %v198 = vld [vmem:[%s169 + $0x9c] sm:$0xff]
      %v199 = vld [vmem:[%s169 + $0xa4] sm:$0xff]
      %v200 = vld [vmem:[%s169 + $0xac] sm:$0xff]
      %v201 = vld [vmem:[%s169 + $0xb4] sm:$0xff]
      %v202 = vld [vmem:[%s169 + $0xbc] sm:$0xff]
      %v203 = vld [vmem:[%s169 + $0xc4] sm:$0xf]
      %v204 = vld [vmem:[%s1] sm:$0xf]
      %v205 = vld [vmem:[%s1 + $0x4] sm:$0xf]
      %v206 = vld [vmem:[%s1 + $0x8] sm:$0xf]
      %v207 = vld [vmem:[%s1 + $0xc] sm:$0xf]
      %v208 = vld [vmem:[%s1 + $0x10] sm:$0xf]
      %v209 = vld [vmem:[%s1 + $0x14] sm:$0xf]
      %v210 = vld [vmem:[%s1 + $0x18] sm:$0xf]
      %v211 = vld [vmem:[%s1 + $0x1c] sm:$0xf]
      %v212 = vld [vmem:[%s1 + $0x20] sm:$0xf]
      %v213 = vld [vmem:[%s1 + $0x24] sm:$0xf]
      %v214 = vld [vmem:[%s1 + $0x28] sm:$0xf]
      %v215 = vld [vmem:[%s1 + $0x2c] sm:$0xf]
      %v216 = vld [vmem:[%s1 + $0x30] sm:$0xf]
      %v217 = vld [vmem:[%s1 + $0x34] sm:$0xf]
      %v218 = vld [vmem:[%s1 + $0x38] sm:$0xf]
      %v219 = vld [vmem:[%s1 + $0x3c] sm:$0xf]
      %v220 = vld [vmem:[%s1 + $0x40] sm:$0xf]
      %v221 = vld [vmem:[%s1 + $0x44] sm:$0xf]
      %v222 = vld [vmem:[%s1 + $0x48] sm:$0xf]
      %v223 = vld [vmem:[%s1 + $0x4c] sm:$0xf]
      %v224 = vld [vmem:[%s1 + $0x50] sm:$0xf]
      %v225 = vld [vmem:[%s1 + $0x54] sm:$0xf]
      %v226 = vld [vmem:[%s1 + $0x58] sm:$0xf]
      %v227 = vld [vmem:[%s1 + $0x5c] sm:$0xf]
      %v228 = vld [vmem:[%s1 + $0x60] sm:$0xf]
      %v229 = vld [vmem:[%s1 + $0x64] sm:$0xf]
      %v230 = vld [vmem:[%s1 + $0x68] sm:$0xf]
      %v231 = vld [vmem:[%s1 + $0x6c] sm:$0xf]
      %v232 = vld [vmem:[%s1 + $0x70] sm:$0xf]
      %v233 = vld [vmem:[%s1 + $0x74] sm:$0xf]
      %v234 = vld [vmem:[%s1 + $0x78] sm:$0xf]
      %v235 = vld [vmem:[%s1 + $0x7c] sm:$0xf]
      %v236 = vld [vmem:[%s1 + $0x80] sm:$0xf]
      %v237 = vld [vmem:[%s1 + $0x84] sm:$0xf]
      %v238 = vld [vmem:[%s1 + $0x88] sm:$0xf]
      %v239 = vld [vmem:[%s1 + $0x8c] sm:$0xf]
      %v240 = vld [vmem:[%s1 + $0x90] sm:$0xf]
      %v241 = vld [vmem:[%s1 + $0x94] sm:$0xf]
      %v242 = vld [vmem:[%s1 + $0x98] sm:$0xf]
      %v243 = vld [vmem:[%s1 + $0x9c] sm:$0xf]
      %v244 = vld [vmem:[%s1 + $0xa0] sm:$0xf]
      %v245 = vld [vmem:[%s1 + $0xa4] sm:$0xf]
      %v246 = vld [vmem:[%s1 + $0xa8] sm:$0xf]
      %v247 = vld [vmem:[%s1 + $0xac] sm:$0xf]
      %v248 = vld [vmem:[%s1 + $0xb0] sm:$0xf]
      %v249 = vld [vmem:[%s1 + $0xb4] sm:$0xf]
      %v250 = vld [vmem:[%s1 + $0xb8] sm:$0xf]
      %v251 = vld [vmem:[%s1 + $0xbc] sm:$0xf]
      %v252 = vld [vmem:[%s1 + $0xc0] sm:$0xf]
      %v253 = vld [vmem:[%s1 + $0xc4] sm:$0xf]
      %v254 = vld [vmem:[%s1 + $0xc8] sm:$0xf]
      %v255 = vld [vmem:[%s1 + $0xcc] sm:$0xf]
      %v256 = vld [vmem:[%s1 + $0xd0] sm:$0xf]
      %v257 = vld [vmem:[%s1 + $0xd4] sm:$0xf]
      %v258 = vld [vmem:[%s1 + $0xd8] sm:$0xf]
      %v259 = vld [vmem:[%s1 + $0xdc] sm:$0xf]
      %v260 = vld [vmem:[%s1 + $0xe0] sm:$0xf]
      %v261 = vld [vmem:[%s1 + $0xe4] sm:$0xf]
      %v262 = vld [vmem:[%s1 + $0xe8] sm:$0xf]
      %v263 = vld [vmem:[%s1 + $0xec] sm:$0xf]
      %v264 = vld [vmem:[%s1 + $0xf0] sm:$0xf]
      %v265 = vld [vmem:[%s1 + $0xf4] sm:$0xf]
      %v266 = vld [vmem:[%s1 + $0xf8] sm:$0xf]
      %v267 = vld [vmem:[%s1 + $0xfc] sm:$0xf]
      %v268 = vld [vmem:[%s1 + $0x100] sm:$0xf]
      %v269 = vld [vmem:[%s1 + $0x104] sm:$0xf]
      %v270 = vld [vmem:[%s1 + $0x108] sm:$0xf]
      %v271 = vld [vmem:[%s1 + $0x10c] sm:$0xf]
      %v272 = vld [vmem:[%s1 + $0x110] sm:$0xf]
      %v273 = vld [vmem:[%s1 + $0x114] sm:$0xf]
      %v274 = vld [vmem:[%s1 + $0x118] sm:$0xf]
      %v275 = vld [vmem:[%s1 + $0x11c] sm:$0xf]
      %v276 = vld [vmem:[%s1 + $0x120] sm:$0xf]
      %v277 = vld [vmem:[%s1 + $0x124] sm:$0xf]
      %v278 = vld [vmem:[%s1 + $0x128] sm:$0xf]
      %v279 = vld [vmem:[%s1 + $0x12c] sm:$0xf]
      %v280 = vld [vmem:[%s1 + $0x130] sm:$0xf]
      %v281 = vld [vmem:[%s1 + $0x134] sm:$0xf]
      %v282 = vld [vmem:[%s1 + $0x138] sm:$0xf]
      %v283 = vld [vmem:[%s1 + $0x13c] sm:$0xf]
      %v284 = vld [vmem:[%s1 + $0x140] sm:$0xf]
      %v285 = vld [vmem:[%s1 + $0x144] sm:$0xf]
      %v286 = vld [vmem:[%s1 + $0x148] sm:$0xf]
      %v287 = vld [vmem:[%s1 + $0x14c] sm:$0xf]
      %v288 = vld [vmem:[%s1 + $0x150] sm:$0xf]
      %v289 = vld [vmem:[%s1 + $0x154] sm:$0xf]
      %v290 = vld [vmem:[%s1 + $0x158] sm:$0xf]
      %v291 = vld [vmem:[%s1 + $0x15c] sm:$0xf]
      %v292 = vld [vmem:[%s1 + $0x160] sm:$0xf]
      %v293 = vld [vmem:[%s1 + $0x164] sm:$0xf]
      %v294 = vld [vmem:[%s1 + $0x168] sm:$0xf]
      %v295 = vld [vmem:[%s1 + $0x16c] sm:$0xf]
      %v296 = vld [vmem:[%s1 + $0x170] sm:$0xf]
      %v297 = vld [vmem:[%s1 + $0x174] sm:$0xf]
      %v298 = vld [vmem:[%s1 + $0x178] sm:$0xf]
      %v299 = vld [vmem:[%s1 + $0x17c] sm:$0xf]
      %v300 = vld [vmem:[%s1 + $0x180] sm:$0xf]
      %v301 = vld [vmem:[%s1 + $0x184] sm:$0xf]
      %v302 = vld [vmem:[%s1 + $0x188] sm:$0xf]
      %v303 = vld [vmem:[%s1 + $0x18c] sm:$0xf]
      %v304 = vld [vmem:[%s1 + $0x190] sm:$0xf]
      %v305 = vld [vmem:[%s1 + $0x194] sm:$0xf]
      %v306 = vld [vmem:[%s1 + $0x198] sm:$0xf]
      %v307 = vld [vmem:[%s1 + $0x19c] sm:$0xf]
      %v308 = vld [vmem:[%s1 + $0x1a0] sm:$0xf]
      %v309 = vld [vmem:[%s1 + $0x1a4] sm:$0xf]
      %v310 = vld [vmem:[%s1 + $0x1a8] sm:$0xf]
      %v311 = vld [vmem:[%s1 + $0x1ac] sm:$0xf]
      %v312 = vld [vmem:[%s1 + $0x1b0] sm:$0xf]
      %v313 = vld [vmem:[%s1 + $0x1b4] sm:$0xf]
      %v314 = vld [vmem:[%s1 + $0x1b8] sm:$0xf]
      %v315 = vld [vmem:[%s1 + $0x1bc] sm:$0xf]
      %v316 = vld [vmem:[%s1 + $0x1c0] sm:$0xf]
      %v317 = vld [vmem:[%s1 + $0x1c4] sm:$0xf]
      %v318 = vld [vmem:[%s1 + $0x1c8] sm:$0xf]
      %v319 = vld [vmem:[%s1 + $0x1cc] sm:$0xf]
      %v320 = vld [vmem:[%s1 + $0x1d0] sm:$0xf]
      %v321 = vld [vmem:[%s1 + $0x1d4] sm:$0xf]
      %v322 = vld [vmem:[%s1 + $0x1d8] sm:$0xf]
      %v323 = vld [vmem:[%s1 + $0x1dc] sm:$0xf]
      %v324 = vld [vmem:[%s1 + $0x1e0] sm:$0xf]
      %v325 = vld [vmem:[%s1 + $0x1e4] sm:$0xf]
      %v326 = vld [vmem:[%s1 + $0x1e8] sm:$0xf]
      %v327 = vld [vmem:[%s1 + $0x1ec] sm:$0xf]
      %v328 = vld [vmem:[%s1 + $0x1f0] sm:$0xf]
      %v329 = vld [vmem:[%s1 + $0x1f4] sm:$0xf]
      %v330 = vld [vmem:[%s1 + $0x1f8] sm:$0xf]
      %v331 = vld [vmem:[%s1 + $0x1fc] sm:$0xf]
      %v332 = vld [vmem:[%s1 + $0x200] sm:$0xf]
      %v333 = vld [vmem:[%s1 + $0x204] sm:$0xf]
      %v334 = vld [vmem:[%s1 + $0x208] sm:$0xf]
      %v335 = vld [vmem:[%s1 + $0x20c] sm:$0xf]
      %v336 = vld [vmem:[%s1 + $0x210] sm:$0xf]
      %v337 = vld [vmem:[%s1 + $0x214] sm:$0xf]
      %v338 = vld [vmem:[%s1 + $0x218] sm:$0xf]
      %v339 = vld [vmem:[%s1 + $0x21c] sm:$0xf]
      %v340 = vld [vmem:[%s1 + $0x220] sm:$0xf]
      %v341 = vld [vmem:[%s1 + $0x224] sm:$0xf]
      %v342 = vld [vmem:[%s1 + $0x228] sm:$0xf]
      %v343 = vld [vmem:[%s1 + $0x22c] sm:$0xf]
      %v344 = vld [vmem:[%s1 + $0x230] sm:$0xf]
      %v345 = vld [vmem:[%s1 + $0x234] sm:$0xf]
      %v346 = vld [vmem:[%s1 + $0x238] sm:$0xf]
      %v347 = vld [vmem:[%s1 + $0x23c] sm:$0xf]
      %v348 = vld [vmem:[%s1 + $0x240] sm:$0xf]
      %v349 = vld [vmem:[%s1 + $0x244] sm:$0xf]
      %v350 = vld [vmem:[%s1 + $0x248] sm:$0xf]
      %v351 = vld [vmem:[%s1 + $0x24c] sm:$0xf]
      %v352 = vld [vmem:[%s1 + $0x250] sm:$0xf]
      %v353 = vld [vmem:[%s1 + $0x254] sm:$0xf]
      %v354 = vld [vmem:[%s1 + $0x258] sm:$0xf]
      %v355 = vld [vmem:[%s1 + $0x25c] sm:$0xf]
      %v356 = vld [vmem:[%s1 + $0x260] sm:$0xf]
      %v357 = vld [vmem:[%s1 + $0x264] sm:$0xf]
      %v358 = vld [vmem:[%s1 + $0x268] sm:$0xf]
      %v359 = vld [vmem:[%s1 + $0x26c] sm:$0xf]
      %v360 = vld [vmem:[%s1 + $0x270] sm:$0xf]
      %v361 = vld [vmem:[%s1 + $0x274] sm:$0xf]
      %v362 = vld [vmem:[%s1 + $0x278] sm:$0xf]
      %v363 = vld [vmem:[%s1 + $0x27c] sm:$0xf]
      %v364 = vld [vmem:[%s1 + $0x280] sm:$0xf]
      %v365 = vld [vmem:[%s1 + $0x284] sm:$0xf]
      %v366 = vld [vmem:[%s1 + $0x288] sm:$0xf]
      %v367 = vld [vmem:[%s1 + $0x28c] sm:$0xf]
      %v368 = vld [vmem:[%s1 + $0x290] sm:$0xf]
      %v369 = vld [vmem:[%s1 + $0x294] sm:$0xf]
      %v370 = vld [vmem:[%s1 + $0x298] sm:$0xf]
      %v371 = vld [vmem:[%s1 + $0x29c] sm:$0xf]
      %v372 = vld [vmem:[%s1 + $0x2a0] sm:$0xf]
      %v373 = vld [vmem:[%s1 + $0x2a4] sm:$0xf]
      %v374 = vld [vmem:[%s1 + $0x2a8] sm:$0xf]
      %v375 = vld [vmem:[%s1 + $0x2ac] sm:$0xf]
      %v376 = vld [vmem:[%s1 + $0x2b0] sm:$0xf]
      %v377 = vld [vmem:[%s1 + $0x2b4] sm:$0xf]
      %v378 = vld [vmem:[%s1 + $0x2b8] sm:$0xf]
      %v379 = vld [vmem:[%s1 + $0x2bc] sm:$0xf]
      %v380 = vld [vmem:[%s1 + $0x2c0] sm:$0xf]
      %v381 = vld [vmem:[%s1 + $0x2c4] sm:$0xf]
      %v382 = vld [vmem:[%s1 + $0x2c8] sm:$0xf]
      %v383 = vld [vmem:[%s1 + $0x2cc] sm:$0xf]
      %v384 = vld [vmem:[%s1 + $0x2d0] sm:$0xf]
      %v385 = vld [vmem:[%s1 + $0x2d4] sm:$0xf]
      %v386 = vld [vmem:[%s1 + $0x2d8] sm:$0xf]
      %v387 = vld [vmem:[%s1 + $0x2dc] sm:$0xf]
      %v388 = vld [vmem:[%s1 + $0x2e0] sm:$0xf]
      %v389 = vld [vmem:[%s1 + $0x2e4] sm:$0xf]
      %v390 = vld [vmem:[%s1 + $0x2e8] sm:$0xf]
      %v391 = vld [vmem:[%s1 + $0x2ec] sm:$0xf]
      %v392 = vld [vmem:[%s1 + $0x2f0] sm:$0xf]
      %v393 = vld [vmem:[%s1 + $0x2f4] sm:$0xf]
      %v394 = vld [vmem:[%s1 + $0x2f8] sm:$0xf]
      %v395 = vld [vmem:[%s1 + $0x2fc] sm:$0xf]
      %v396 = vld [vmem:[%s1 + $0x300] sm:$0xf]
      %v397 = vld [vmem:[%s1 + $0x304] sm:$0xf]
      %v398 = vld [vmem:[%s1 + $0x308] sm:$0xf]
      %v399 = vld [vmem:[%s1 + $0x30c] sm:$0xf]
      %v400 = vld [vmem:[%s1 + $0x310] sm:$0xf]
      %v401 = vld [vmem:[%s1 + $0x314] sm:$0xf]
      %v402 = vld [vmem:[%s1 + $0x318] sm:$0xf]
      %v403 = vld [vmem:[%s1 + $0x31c] sm:$0xf]
      %v404 = vld [vmem:[%s1 + $0x320] sm:$0xf]
      %v405 = vld [vmem:[%s1 + $0x324] sm:$0xf]
      %v406 = vld [vmem:[%s1 + $0x328] sm:$0xf]
      %v407 = vld [vmem:[%s1 + $0x32c] sm:$0xf]
      %v408 = vld [vmem:[%s1 + $0x330] sm:$0xf]
      %v409 = vld [vmem:[%s1 + $0x334] sm:$0xf]
      %v410 = vld [vmem:[%s1 + $0x338] sm:$0xf]
      %v411 = vld [vmem:[%s1 + $0x33c] sm:$0xf]
      %v412 = vld [vmem:[%s1 + $0x340] sm:$0xf]
      %v413 = vld [vmem:[%s1 + $0x344] sm:$0xf]
      %v414 = vld [vmem:[%s1 + $0x348] sm:$0xf]
      %v415 = vld [vmem:[%s1 + $0x34c] sm:$0xf]
      %v416 = vld [vmem:[%s1 + $0x350] sm:$0xf]
      %v417 = vld [vmem:[%s1 + $0x354] sm:$0xf]
      %v418 = vld [vmem:[%s1 + $0x358] sm:$0xf]
      %v419 = vld [vmem:[%s1 + $0x35c] sm:$0xf]
      %v420 = vld [vmem:[%s1 + $0x360] sm:$0xf]
      %v421 = vld [vmem:[%s1 + $0x364] sm:$0xf]
      %v422 = vld [vmem:[%s1 + $0x368] sm:$0xf]
      %v423 = vld [vmem:[%s1 + $0x36c] sm:$0xf]
      %v424 = vld [vmem:[%s1 + $0x370] sm:$0xf]
      %v425 = vld [vmem:[%s1 + $0x374] sm:$0xf]
      %v426 = vld [vmem:[%s1 + $0x378] sm:$0xf]
      %v427 = vld [vmem:[%s1 + $0x37c] sm:$0xf]
      %v428 = vld [vmem:[%s1 + $0x380] sm:$0xf]
      %v429 = vld [vmem:[%s1 + $0x384] sm:$0xf]
      %v430 = vld [vmem:[%s1 + $0x388] sm:$0xf]
      %v431 = vld [vmem:[%s1 + $0x38c] sm:$0xf]
      %v432 = vld [vmem:[%s1 + $0x390] sm:$0xf]
      %v433 = vld [vmem:[%s1 + $0x394] sm:$0xf]
      %v434 = vld [vmem:[%s1 + $0x398] sm:$0xf]
      %v435 = vld [vmem:[%s1 + $0x39c] sm:$0xf]
      %v436 = vld [vmem:[%s1 + $0x3a0] sm:$0xf]
      %v437 = vld [vmem:[%s1 + $0x3a4] sm:$0xf]
      %v438 = vld [vmem:[%s1 + $0x3a8] sm:$0xf]
      %v439 = vld [vmem:[%s1 + $0x3ac] sm:$0xf]
      %v440 = vld [vmem:[%s1 + $0x3b0] sm:$0xf]
      %v441 = vld [vmem:[%s1 + $0x3b4] sm:$0xf]
      %v442 = vld [vmem:[%s1 + $0x3b8] sm:$0xf]
      %v443 = vld [vmem:[%s1 + $0x3bc] sm:$0xf]
      %v444 = vld [vmem:[%s1 + $0x3c0] sm:$0xf]
      %v445 = vld [vmem:[%s1 + $0x3c4] sm:$0xf]
      %v446 = vld [vmem:[%s1 + $0x3c8] sm:$0xf]
      %v447 = vld [vmem:[%s1 + $0x3cc] sm:$0xf]
      %v448 = vld [vmem:[%s1 + $0x3d0] sm:$0xf]
      %v449 = vld [vmem:[%s1 + $0x3d4] sm:$0xf]
      %v450 = vld [vmem:[%s1 + $0x3d8] sm:$0xf]
      %v451 = vld [vmem:[%s1 + $0x3dc] sm:$0xf]
      %v452 = vld [vmem:[%s1 + $0x3e0] sm:$0xf]
      %v453 = vld [vmem:[%s1 + $0x3e4] sm:$0xf]
      %v454 = vld [vmem:[%s1 + $0x3e8] sm:$0xf]
      %v455 = vld [vmem:[%s1 + $0x3ec] sm:$0xf]
      %v456 = vld [vmem:[%s1 + $0x3f0] sm:$0xf]
      %v457 = vld [vmem:[%s1 + $0x3f4] sm:$0xf]
      %v458 = vld [vmem:[%s1 + $0x3f8] sm:$0xf]
      %v459 = vld [vmem:[%s1 + $0x3fc] sm:$0xf]
      %v460 = vld [vmem:[%s1 + $0x400] sm:$0xf]
      %v461 = vld [vmem:[%s1 + $0x404] sm:$0xf]
      %v462 = vld [vmem:[%s1 + $0x408] sm:$0xf]
      %v463 = vld [vmem:[%s1 + $0x40c] sm:$0xf]
      %v464 = vld [vmem:[%s1 + $0x410] sm:$0xf]
      %v465 = vld [vmem:[%s1 + $0x414] sm:$0xf]
      %v466 = vld [vmem:[%s1 + $0x418] sm:$0xf]
      %v467 = vld [vmem:[%s1 + $0x41c] sm:$0xf]
      %v468 = vld [vmem:[%s1 + $0x420] sm:$0xf]
      %v469 = vld [vmem:[%s1 + $0x424] sm:$0xf]
      %v470 = vld [vmem:[%s1 + $0x428] sm:$0xf]
      %v471 = vld [vmem:[%s1 + $0x42c] sm:$0xf]
      %v472 = vld [vmem:[%s1 + $0x430] sm:$0xf]
      %v473 = vld [vmem:[%s1 + $0x434] sm:$0xf]
      %v474 = vld [vmem:[%s1 + $0x438] sm:$0xf]
      %v475 = vld [vmem:[%s1 + $0x43c] sm:$0xf]
      %v476 = vld [vmem:[%s1 + $0x440] sm:$0xf]
      %v477 = vld [vmem:[%s1 + $0x444] sm:$0xf]
      %v478 = vld [vmem:[%s1 + $0x448] sm:$0xf]
      %v479 = vld [vmem:[%s1 + $0x44c] sm:$0xf]
      %v480 = vld [vmem:[%s1 + $0x450] sm:$0xf]
      %v481 = vld [vmem:[%s1 + $0x454] sm:$0xf]
      %v482 = vld [vmem:[%s1 + $0x458] sm:$0xf]
      %v483 = vld [vmem:[%s1 + $0x45c] sm:$0xf]
      %v484 = vld [vmem:[%s1 + $0x460] sm:$0xf]
      %v485 = vld [vmem:[%s1 + $0x464] sm:$0xf]
      %v486 = vld [vmem:[%s1 + $0x468] sm:$0xf]
      %v487 = vld [vmem:[%s1 + $0x46c] sm:$0xf]
      %v488 = vld [vmem:[%s1 + $0x470] sm:$0xf]
      %v489 = vld [vmem:[%s1 + $0x474] sm:$0xf]
      %v490 = vld [vmem:[%s1 + $0x478] sm:$0xf]
      %v491 = vld [vmem:[%s1 + $0x47c] sm:$0xf]
      %v492 = vld [vmem:[%s1 + $0x480] sm:$0xf]
      %v493 = vld [vmem:[%s1 + $0x484] sm:$0xf]
      %v494 = vld [vmem:[%s1 + $0x488] sm:$0xf]
      %v495 = vld [vmem:[%s1 + $0x48c] sm:$0xf]
      %v496 = vld [vmem:[%s1 + $0x490] sm:$0xf]
      %v497 = vld [vmem:[%s1 + $0x494] sm:$0xf]
      %v498 = vld [vmem:[%s1 + $0x498] sm:$0xf]
      %v499 = vld [vmem:[%s1 + $0x49c] sm:$0xf]
      %v500 = vld [vmem:[%s1 + $0x4a0] sm:$0xf]
      %v501 = vld [vmem:[%s1 + $0x4a4] sm:$0xf]
      %v502 = vld [vmem:[%s1 + $0x4a8] sm:$0xf]
      %v503 = vld [vmem:[%s1 + $0x4ac] sm:$0xf]
      %v504 = vld [vmem:[%s1 + $0x4b0] sm:$0xf]
      %v505 = vld [vmem:[%s1 + $0x4b4] sm:$0xf]
      %v506 = vld [vmem:[%s1 + $0x4b8] sm:$0xf]
      %v507 = vld [vmem:[%s1 + $0x4bc] sm:$0xf]
      %v508 = vld [vmem:[%s1 + $0x4c0] sm:$0xf]
      %v509 = vld [vmem:[%s1 + $0x4c4] sm:$0xf]
      %v510 = vld [vmem:[%s1 + $0x4c8] sm:$0xf]
      %v511 = vld [vmem:[%s1 + $0x4cc] sm:$0xf]
      %v512 = vld [vmem:[%s1 + $0x4d0] sm:$0xf]
      %v513 = vld [vmem:[%s1 + $0x4d4] sm:$0xf]
      %v514 = vld [vmem:[%s1 + $0x4d8] sm:$0xf]
      %v515 = vld [vmem:[%s1 + $0x4dc] sm:$0xf]
      %v516 = vld [vmem:[%s1 + $0x4e0] sm:$0xf]
      %v517 = vld [vmem:[%s1 + $0x4e4] sm:$0xf]
      %v518 = vld [vmem:[%s1 + $0x4e8] sm:$0xf]
      %v519 = vld [vmem:[%s1 + $0x4ec] sm:$0xf]
      %v520 = vld [vmem:[%s1 + $0x4f0] sm:$0xf]
      %v521 = vld [vmem:[%s1 + $0x4f4] sm:$0xf]
      %v522 = vld [vmem:[%s1 + $0x4f8] sm:$0xf]
      %v523 = vld [vmem:[%s1 + $0x4fc] sm:$0xf]
      %v524 = vld [vmem:[%s1 + $0x500] sm:$0xf]
      %v525 = vld [vmem:[%s1 + $0x504] sm:$0xf]
      %v526 = vld [vmem:[%s1 + $0x508] sm:$0xf]
      %v527 = vld [vmem:[%s1 + $0x50c] sm:$0xf]
      %v528 = vld [vmem:[%s1 + $0x510] sm:$0xf]
      %v529 = vld [vmem:[%s1 + $0x514] sm:$0xf]
      %v530 = vld [vmem:[%s1 + $0x518] sm:$0xf]
      %v531 = vld [vmem:[%s1 + $0x51c] sm:$0xf]
      %v532 = vld [vmem:[%s1 + $0x520] sm:$0xf]
      %v533 = vld [vmem:[%s1 + $0x524] sm:$0xf]
      %v534 = vld [vmem:[%s1 + $0x528] sm:$0xf]
      %v535 = vld [vmem:[%s1 + $0x52c] sm:$0xf]
      %v536 = vld [vmem:[%s1 + $0x530] sm:$0xf]
      %v537 = vld [vmem:[%s1 + $0x534] sm:$0xf]
      %v538 = vld [vmem:[%s1 + $0x538] sm:$0xf]
      %v539 = vld [vmem:[%s1 + $0x53c] sm:$0xf]
      %v540 = vld [vmem:[%s1 + $0x540] sm:$0xf]
      %v541 = vld [vmem:[%s1 + $0x544] sm:$0xf]
      %v542 = vld [vmem:[%s1 + $0x548] sm:$0xf]
      %v543 = vld [vmem:[%s1 + $0x54c] sm:$0xf]
      %v544 = vld [vmem:[%s1 + $0x550] sm:$0xf]
      %v545 = vld [vmem:[%s1 + $0x554] sm:$0xf]
      %v546 = vld [vmem:[%s1 + $0x558] sm:$0xf]
      %v547 = vld [vmem:[%s1 + $0x55c] sm:$0xf]
      %v548 = vld [vmem:[%s1 + $0x560] sm:$0xf]
      %v549 = vld [vmem:[%s1 + $0x564] sm:$0xf]
      %v550 = vld [vmem:[%s1 + $0x568] sm:$0xf]
      %v551 = vld [vmem:[%s1 + $0x56c] sm:$0xf]
      %v552 = vld [vmem:[%s1 + $0x570] sm:$0xf]
      %v553 = vld [vmem:[%s1 + $0x574] sm:$0xf]
      %v554 = vld [vmem:[%s1 + $0x578] sm:$0xf]
      %v555 = vld [vmem:[%s1 + $0x57c] sm:$0xf]
      %v556 = vld [vmem:[%s1 + $0x580] sm:$0xf]
      %v557 = vld [vmem:[%s1 + $0x584] sm:$0xf]
      %v558 = vld [vmem:[%s1 + $0x588] sm:$0xf]
      %v559 = vld [vmem:[%s1 + $0x58c] sm:$0xf]
      %v560 = vld [vmem:[%s1 + $0x590] sm:$0xf]
      %v561 = vld [vmem:[%s1 + $0x594] sm:$0xf]
      %v562 = vld [vmem:[%s1 + $0x598] sm:$0xf]
      %v563 = vld [vmem:[%s1 + $0x59c] sm:$0xf]
      %v564 = vld [vmem:[%s1 + $0x5a0] sm:$0xf]
      %v565 = vld [vmem:[%s1 + $0x5a4] sm:$0xf]
      %v566 = vld [vmem:[%s1 + $0x5a8] sm:$0xf]
      %v567 = vld [vmem:[%s1 + $0x5ac] sm:$0xf]
      %v568 = vld [vmem:[%s1 + $0x5b0] sm:$0xf]
      %v569 = vld [vmem:[%s1 + $0x5b4] sm:$0xf]
      %v570 = vld [vmem:[%s1 + $0x5b8] sm:$0xf]
      %v571 = vld [vmem:[%s1 + $0x5bc] sm:$0xf]
      %v572 = vld [vmem:[%s1 + $0x5c0] sm:$0xf]
      %v573 = vld [vmem:[%s1 + $0x5c4] sm:$0xf]
      %v574 = vld [vmem:[%s1 + $0x5c8] sm:$0xf]
      %v575 = vld [vmem:[%s1 + $0x5cc] sm:$0xf]
      %v576 = vld [vmem:[%s1 + $0x5d0] sm:$0xf]
      %v577 = vld [vmem:[%s1 + $0x5d4] sm:$0xf]
      %v578 = vld [vmem:[%s1 + $0x5d8] sm:$0xf]
      %v579 = vld [vmem:[%s1 + $0x5dc] sm:$0xf]
      %v580 = vld [vmem:[%s1 + $0x5e0] sm:$0xf]
      %v581 = vld [vmem:[%s1 + $0x5e4] sm:$0xf]
      %v582 = vld [vmem:[%s1 + $0x5e8] sm:$0xf]
      %v583 = vld [vmem:[%s1 + $0x5ec] sm:$0xf]
      %v584 = vld [vmem:[%s1 + $0x5f0] sm:$0xf]
      %v585 = vld [vmem:[%s1 + $0x5f4] sm:$0xf]
      %v586 = vld [vmem:[%s1 + $0x5f8] sm:$0xf]
      %v587 = vld [vmem:[%s1 + $0x5fc] sm:$0xf]
      %v588 = vld [vmem:[%s1 + $0x600] sm:$0xf]
      %v589 = vld [vmem:[%s1 + $0x604] sm:$0xf]
      %v590 = vld [vmem:[%s1 + $0x608] sm:$0xf]
      %v591 = vld [vmem:[%s1 + $0x60c] sm:$0xf]
      %v592 = vld [vmem:[%s1 + $0x610] sm:$0xf]
      %v593 = vld [vmem:[%s1 + $0x614] sm:$0xf]
      %v594 = vld [vmem:[%s1 + $0x618] sm:$0xf]
      %v595 = vld [vmem:[%s1 + $0x61c] sm:$0xf]
      %v596 = vld [vmem:[%s2] sm:$0x1]
      %v598 = vlaneseq
      %v599 = vshrl.u32 %v598, 7
      %v600 = vsub.s32 0, %v599
      %v601 = vrot.slane %v596, %v600
      %v629 = vunpack.c.l.b16 %v178
      %v630 = vunpack.c.h.b16 %v178
      %v631 = vunpack.c.l.b16 %v179
      %v632 = vunpack.c.h.b16 %v179
      %v633 = vunpack.c.l.b16 %v180
      %v634 = vunpack.c.h.b16 %v180
      %v635 = vunpack.c.l.b16 %v181
      %v636 = vunpack.c.h.b16 %v181
      %v637 = vunpack.c.l.b16 %v182
      %v638 = vunpack.c.h.b16 %v182
      %v639 = vunpack.c.l.b16 %v183
      %v640 = vunpack.c.h.b16 %v183
      %v641 = vunpack.c.l.b16 %v184
      %v642 = vunpack.c.h.b16 %v184
      %v643 = vunpack.c.l.b16 %v185
      %v644 = vunpack.c.h.b16 %v185
      %v645 = vunpack.c.l.b16 %v186
      %v646 = vunpack.c.h.b16 %v186
      %v647 = vunpack.c.l.b16 %v187
      %v648 = vunpack.c.h.b16 %v187
      %v649 = vunpack.c.l.b16 %v188
      %v650 = vunpack.c.h.b16 %v188
      %v651 = vunpack.c.l.b16 %v189
      %v652 = vunpack.c.h.b16 %v189
      %v653 = vunpack.c.l.b16 %v190
      %v654 = vunpack.c.l.b16 %v191
      %v655 = vunpack.c.h.b16 %v191
      %v656 = vunpack.c.l.b16 %v192
      %v657 = vunpack.c.h.b16 %v192
      %v658 = vunpack.c.l.b16 %v193
      %v659 = vunpack.c.h.b16 %v193
      %v660 = vunpack.c.l.b16 %v194
      %v661 = vunpack.c.h.b16 %v194
      %v662 = vunpack.c.l.b16 %v195
      %v663 = vunpack.c.h.b16 %v195
      %v664 = vunpack.c.l.b16 %v196
      %v665 = vunpack.c.h.b16 %v196
      %v666 = vunpack.c.l.b16 %v197
      %v667 = vunpack.c.h.b16 %v197
      %v668 = vunpack.c.l.b16 %v198
      %v669 = vunpack.c.h.b16 %v198
      %v670 = vunpack.c.l.b16 %v199
      %v671 = vunpack.c.h.b16 %v199
      %v672 = vunpack.c.l.b16 %v200
      %v673 = vunpack.c.h.b16 %v200
      %v674 = vunpack.c.l.b16 %v201
      %v675 = vunpack.c.h.b16 %v201
      %v676 = vunpack.c.l.b16 %v202
      %v677 = vunpack.c.h.b16 %v202
      %v678 = vunpack.c.l.b16 %v203
      %v679 = vpack.c.b16 %v654, %v629
      %v680 = vpack.c.b16 %v655, %v630
      %v681 = vpack.c.b16 %v656, %v631
      %v682 = vpack.c.b16 %v657, %v632
      %v683 = vpack.c.b16 %v658, %v633
      %v684 = vpack.c.b16 %v659, %v634
      %v685 = vpack.c.b16 %v660, %v635
      %v686 = vpack.c.b16 %v661, %v636
      %v687 = vpack.c.b16 %v662, %v637
      %v688 = vpack.c.b16 %v663, %v638
      %v689 = vpack.c.b16 %v664, %v639
      %v690 = vpack.c.b16 %v665, %v640
      %v691 = vpack.c.b16 %v666, %v641
      %v692 = vpack.c.b16 %v667, %v642
      %v693 = vpack.c.b16 %v668, %v643
      %v694 = vpack.c.b16 %v669, %v644
      %v695 = vpack.c.b16 %v670, %v645
      %v696 = vpack.c.b16 %v671, %v646
      %v697 = vpack.c.b16 %v672, %v647
      %v698 = vpack.c.b16 %v673, %v648
      %v699 = vpack.c.b16 %v674, %v649
      %v700 = vpack.c.b16 %v675, %v650
      %v701 = vpack.c.b16 %v676, %v651
      %v702 = vpack.c.b16 %v677, %v652
      %v703 = vpack.c.b16 %v678, %v653
      %v1120 = vunpack.c.l.b16 %v204
      %v1121 = vunpack.c.l.b16 %v205
      %v1122 = vunpack.c.l.b16 %v206
      %v1123 = vunpack.c.l.b16 %v207
      %v1124 = vunpack.c.l.b16 %v208
      %v1125 = vunpack.c.l.b16 %v209
      %v1126 = vunpack.c.l.b16 %v210
      %v1127 = vunpack.c.l.b16 %v211
      %v1128 = vunpack.c.l.b16 %v212
      %v1129 = vunpack.c.l.b16 %v213
      %v1130 = vunpack.c.l.b16 %v214
      %v1131 = vunpack.c.l.b16 %v215
      %v1132 = vunpack.c.l.b16 %v216
      %v1133 = vunpack.c.l.b16 %v217
      %v1134 = vunpack.c.l.b16 %v218
      %v1135 = vunpack.c.l.b16 %v219
      %v1136 = vunpack.c.l.b16 %v220
      %v1137 = vunpack.c.l.b16 %v221
      %v1138 = vunpack.c.l.b16 %v222
      %v1139 = vunpack.c.l.b16 %v223
      %v1140 = vunpack.c.l.b16 %v224
      %v1141 = vunpack.c.l.b16 %v225
      %v1142 = vunpack.c.l.b16 %v226
      %v1143 = vunpack.c.l.b16 %v227
      %v1144 = vunpack.c.l.b16 %v228
      %v1145 = vunpack.c.l.b16 %v229
      %v1146 = vunpack.c.l.b16 %v230
      %v1147 = vunpack.c.l.b16 %v231
      %v1148 = vunpack.c.l.b16 %v232
      %v1149 = vunpack.c.l.b16 %v233
      %v1150 = vunpack.c.l.b16 %v234
      %v1151 = vunpack.c.l.b16 %v235
      %v1152 = vunpack.c.l.b16 %v236
      %v1153 = vunpack.c.l.b16 %v237
      %v1154 = vunpack.c.l.b16 %v238
      %v1155 = vunpack.c.l.b16 %v239
      %v1156 = vunpack.c.l.b16 %v240
      %v1157 = vunpack.c.l.b16 %v241
      %v1158 = vunpack.c.l.b16 %v242
      %v1159 = vunpack.c.l.b16 %v243
      %v1160 = vunpack.c.l.b16 %v244
      %v1161 = vunpack.c.l.b16 %v245
      %v1162 = vunpack.c.l.b16 %v246
      %v1163 = vunpack.c.l.b16 %v247
      %v1164 = vunpack.c.l.b16 %v248
      %v1165 = vunpack.c.l.b16 %v249
      %v1166 = vunpack.c.l.b16 %v250
      %v1167 = vunpack.c.l.b16 %v251
      %v1168 = vunpack.c.l.b16 %v252
      %v1169 = vunpack.c.l.b16 %v253
      %v1170 = vunpack.c.l.b16 %v254
      %v1171 = vunpack.c.l.b16 %v255
      %v1172 = vunpack.c.l.b16 %v256
      %v1173 = vunpack.c.l.b16 %v257
      %v1174 = vunpack.c.l.b16 %v258
      %v1175 = vunpack.c.l.b16 %v259
      %v1176 = vunpack.c.l.b16 %v260
      %v1177 = vunpack.c.l.b16 %v261
      %v1178 = vunpack.c.l.b16 %v262
      %v1179 = vunpack.c.l.b16 %v263
      %v1180 = vunpack.c.l.b16 %v264
      %v1181 = vunpack.c.l.b16 %v265
      %v1182 = vunpack.c.l.b16 %v266
      %v1183 = vunpack.c.l.b16 %v267
      %v1184 = vunpack.c.l.b16 %v268
      %v1185 = vunpack.c.l.b16 %v269
      %v1186 = vunpack.c.l.b16 %v270
      %v1187 = vunpack.c.l.b16 %v271
      %v1188 = vunpack.c.l.b16 %v272
      %v1189 = vunpack.c.l.b16 %v273
      %v1190 = vunpack.c.l.b16 %v274
      %v1191 = vunpack.c.l.b16 %v275
      %v1192 = vunpack.c.l.b16 %v276
      %v1193 = vunpack.c.l.b16 %v277
      %v1194 = vunpack.c.l.b16 %v278
      %v1195 = vunpack.c.l.b16 %v279
      %v1196 = vunpack.c.l.b16 %v280
      %v1197 = vunpack.c.l.b16 %v281
      %v1198 = vunpack.c.l.b16 %v282
      %v1199 = vunpack.c.l.b16 %v283
      %v1200 = vunpack.c.l.b16 %v284
      %v1201 = vunpack.c.l.b16 %v285
      %v1202 = vunpack.c.l.b16 %v286
      %v1203 = vunpack.c.l.b16 %v287
      %v1204 = vunpack.c.l.b16 %v288
      %v1205 = vunpack.c.l.b16 %v289
      %v1206 = vunpack.c.l.b16 %v290
      %v1207 = vunpack.c.l.b16 %v291
      %v1208 = vunpack.c.l.b16 %v292
      %v1209 = vunpack.c.l.b16 %v293
      %v1210 = vunpack.c.l.b16 %v294
      %v1211 = vunpack.c.l.b16 %v295
      %v1212 = vunpack.c.l.b16 %v296
      %v1213 = vunpack.c.l.b16 %v297
      %v1214 = vunpack.c.l.b16 %v298
      %v1215 = vunpack.c.l.b16 %v299
      %v1216 = vunpack.c.l.b16 %v300
      %v1217 = vunpack.c.l.b16 %v301
      %v1218 = vunpack.c.l.b16 %v302
      %v1219 = vunpack.c.l.b16 %v303
      %v1220 = vunpack.c.l.b16 %v304
      %v1221 = vunpack.c.l.b16 %v305
      %v1222 = vunpack.c.l.b16 %v306
      %v1223 = vunpack.c.l.b16 %v307
      %v1224 = vunpack.c.l.b16 %v308
      %v1225 = vunpack.c.l.b16 %v309
      %v1226 = vunpack.c.l.b16 %v310
      %v1227 = vunpack.c.l.b16 %v311
      %v1228 = vunpack.c.l.b16 %v312
      %v1229 = vunpack.c.l.b16 %v313
      %v1230 = vunpack.c.l.b16 %v314
      %v1231 = vunpack.c.l.b16 %v315
      %v1232 = vunpack.c.l.b16 %v316
      %v1233 = vunpack.c.l.b16 %v317
      %v1234 = vunpack.c.l.b16 %v318
      %v1235 = vunpack.c.l.b16 %v319
      %v1236 = vunpack.c.l.b16 %v320
      %v1237 = vunpack.c.l.b16 %v321
      %v1238 = vunpack.c.l.b16 %v322
      %v1239 = vunpack.c.l.b16 %v323
      %v1240 = vunpack.c.l.b16 %v324
      %v1241 = vunpack.c.l.b16 %v325
      %v1242 = vunpack.c.l.b16 %v326
      %v1243 = vunpack.c.l.b16 %v327
      %v1244 = vunpack.c.l.b16 %v328
      %v1245 = vunpack.c.l.b16 %v329
      %v1246 = vunpack.c.l.b16 %v330
      %v1247 = vunpack.c.l.b16 %v331
      %v1248 = vunpack.c.l.b16 %v332
      %v1249 = vunpack.c.l.b16 %v333
      %v1250 = vunpack.c.l.b16 %v334
      %v1251 = vunpack.c.l.b16 %v335
      %v1252 = vunpack.c.l.b16 %v336
      %v1253 = vunpack.c.l.b16 %v337
      %v1254 = vunpack.c.l.b16 %v338
      %v1255 = vunpack.c.l.b16 %v339
      %v1256 = vunpack.c.l.b16 %v340
      %v1257 = vunpack.c.l.b16 %v341
      %v1258 = vunpack.c.l.b16 %v342
      %v1259 = vunpack.c.l.b16 %v343
      %v1260 = vunpack.c.l.b16 %v344
      %v1261 = vunpack.c.l.b16 %v345
      %v1262 = vunpack.c.l.b16 %v346
      %v1263 = vunpack.c.l.b16 %v347
      %v1264 = vunpack.c.l.b16 %v348
      %v1265 = vunpack.c.l.b16 %v349
      %v1266 = vunpack.c.l.b16 %v350
      %v1267 = vunpack.c.l.b16 %v351
      %v1268 = vunpack.c.l.b16 %v352
      %v1269 = vunpack.c.l.b16 %v353
      %v1270 = vunpack.c.l.b16 %v354
      %v1271 = vunpack.c.l.b16 %v355
      %v1272 = vunpack.c.l.b16 %v356
      %v1273 = vunpack.c.l.b16 %v357
      %v1274 = vunpack.c.l.b16 %v358
      %v1275 = vunpack.c.l.b16 %v359
      %v1276 = vunpack.c.l.b16 %v360
      %v1277 = vunpack.c.l.b16 %v361
      %v1278 = vunpack.c.l.b16 %v362
      %v1279 = vunpack.c.l.b16 %v363
      %v1280 = vunpack.c.l.b16 %v364
      %v1281 = vunpack.c.l.b16 %v365
      %v1282 = vunpack.c.l.b16 %v366
      %v1283 = vunpack.c.l.b16 %v367
      %v1284 = vunpack.c.l.b16 %v368
      %v1285 = vunpack.c.l.b16 %v369
      %v1286 = vunpack.c.l.b16 %v370
      %v1287 = vunpack.c.l.b16 %v371
      %v1288 = vunpack.c.l.b16 %v372
      %v1289 = vunpack.c.l.b16 %v373
      %v1290 = vunpack.c.l.b16 %v374
      %v1291 = vunpack.c.l.b16 %v375
      %v1292 = vunpack.c.l.b16 %v376
      %v1293 = vunpack.c.l.b16 %v377
      %v1294 = vunpack.c.l.b16 %v378
      %v1295 = vunpack.c.l.b16 %v379
      %v1296 = vunpack.c.l.b16 %v380
      %v1297 = vunpack.c.l.b16 %v381
      %v1298 = vunpack.c.l.b16 %v382
      %v1299 = vunpack.c.l.b16 %v383
      %v1300 = vunpack.c.l.b16 %v384
      %v1301 = vunpack.c.l.b16 %v385
      %v1302 = vunpack.c.l.b16 %v386
      %v1303 = vunpack.c.l.b16 %v387
      %v1304 = vunpack.c.l.b16 %v388
      %v1305 = vunpack.c.l.b16 %v389
      %v1306 = vunpack.c.l.b16 %v390
      %v1307 = vunpack.c.l.b16 %v391
      %v1308 = vunpack.c.l.b16 %v392
      %v1309 = vunpack.c.l.b16 %v393
      %v1310 = vunpack.c.l.b16 %v394
      %v1311 = vunpack.c.l.b16 %v395
      %v1312 = vunpack.c.l.b16 %v396
      %v1313 = vunpack.c.l.b16 %v397
      %v1314 = vunpack.c.l.b16 %v398
      %v1315 = vunpack.c.l.b16 %v399
      %v1316 = vunpack.c.l.b16 %v400
      %v1317 = vunpack.c.l.b16 %v401
      %v1318 = vunpack.c.l.b16 %v402
      %v1319 = vunpack.c.l.b16 %v403
      %v1320 = vunpack.c.l.b16 %v404
      %v1321 = vunpack.c.l.b16 %v405
      %v1322 = vunpack.c.l.b16 %v406
      %v1323 = vunpack.c.l.b16 %v407
      %v1324 = vunpack.c.l.b16 %v408
      %v1325 = vunpack.c.l.b16 %v409
      %v1326 = vunpack.c.l.b16 %v410
      %v1327 = vunpack.c.l.b16 %v411
      %v1328 = vunpack.c.l.b16 %v412
      %v1329 = vunpack.c.l.b16 %v413
      %v1330 = vunpack.c.l.b16 %v414
      %v1331 = vunpack.c.l.b16 %v415
      %v1332 = vunpack.c.l.b16 %v416
      %v1333 = vunpack.c.l.b16 %v417
      %v1334 = vunpack.c.l.b16 %v418
      %v1335 = vunpack.c.l.b16 %v419
      %v1336 = vunpack.c.l.b16 %v420
      %v1337 = vunpack.c.l.b16 %v421
      %v1338 = vunpack.c.l.b16 %v422
      %v1339 = vunpack.c.l.b16 %v423
      %v1340 = vunpack.c.l.b16 %v424
      %v1341 = vunpack.c.l.b16 %v425
      %v1342 = vunpack.c.l.b16 %v426
      %v1343 = vunpack.c.l.b16 %v427
      %v1344 = vunpack.c.l.b16 %v428
      %v1345 = vunpack.c.l.b16 %v429
      %v1346 = vunpack.c.l.b16 %v430
      %v1347 = vunpack.c.l.b16 %v431
      %v1348 = vunpack.c.l.b16 %v432
      %v1349 = vunpack.c.l.b16 %v433
      %v1350 = vunpack.c.l.b16 %v434
      %v1351 = vunpack.c.l.b16 %v435
      %v1352 = vunpack.c.l.b16 %v436
      %v1353 = vunpack.c.l.b16 %v437
      %v1354 = vunpack.c.l.b16 %v438
      %v1355 = vunpack.c.l.b16 %v439
      %v1356 = vunpack.c.l.b16 %v440
      %v1357 = vunpack.c.l.b16 %v441
      %v1358 = vunpack.c.l.b16 %v442
      %v1359 = vunpack.c.l.b16 %v443
      %v1360 = vunpack.c.l.b16 %v444
      %v1361 = vunpack.c.l.b16 %v445
      %v1362 = vunpack.c.l.b16 %v446
      %v1363 = vunpack.c.l.b16 %v447
      %v1364 = vunpack.c.l.b16 %v448
      %v1365 = vunpack.c.l.b16 %v449
      %v1366 = vunpack.c.l.b16 %v450
      %v1367 = vunpack.c.l.b16 %v451
      %v1368 = vunpack.c.l.b16 %v452
      %v1369 = vunpack.c.l.b16 %v453
      %v1370 = vunpack.c.l.b16 %v454
      %v1371 = vunpack.c.l.b16 %v455
      %v1372 = vunpack.c.l.b16 %v456
      %v1373 = vunpack.c.l.b16 %v457
      %v1374 = vunpack.c.l.b16 %v458
      %v1375 = vunpack.c.l.b16 %v459
      %v1376 = vunpack.c.l.b16 %v460
      %v1377 = vunpack.c.l.b16 %v461
      %v1378 = vunpack.c.l.b16 %v462
      %v1379 = vunpack.c.l.b16 %v463
      %v1380 = vunpack.c.l.b16 %v464
      %v1381 = vunpack.c.l.b16 %v465
      %v1382 = vunpack.c.l.b16 %v466
      %v1383 = vunpack.c.l.b16 %v467
      %v1384 = vunpack.c.l.b16 %v468
      %v1385 = vunpack.c.l.b16 %v469
      %v1386 = vunpack.c.l.b16 %v470
      %v1387 = vunpack.c.l.b16 %v471
      %v1388 = vunpack.c.l.b16 %v472
      %v1389 = vunpack.c.l.b16 %v473
      %v1390 = vunpack.c.l.b16 %v474
      %v1391 = vunpack.c.l.b16 %v475
      %v1392 = vunpack.c.l.b16 %v476
      %v1393 = vunpack.c.l.b16 %v477
      %v1394 = vunpack.c.l.b16 %v478
      %v1395 = vunpack.c.l.b16 %v479
      %v1396 = vunpack.c.l.b16 %v480
      %v1397 = vunpack.c.l.b16 %v481
      %v1398 = vunpack.c.l.b16 %v482
      %v1399 = vunpack.c.l.b16 %v483
      %v1400 = vunpack.c.l.b16 %v484
      %v1401 = vunpack.c.l.b16 %v485
      %v1402 = vunpack.c.l.b16 %v486
      %v1403 = vunpack.c.l.b16 %v487
      %v1404 = vunpack.c.l.b16 %v488
      %v1405 = vunpack.c.l.b16 %v489
      %v1406 = vunpack.c.l.b16 %v490
      %v1407 = vunpack.c.l.b16 %v491
      %v1408 = vunpack.c.l.b16 %v492
      %v1409 = vunpack.c.l.b16 %v493
      %v1410 = vunpack.c.l.b16 %v494
      %v1411 = vunpack.c.l.b16 %v495
      %v1412 = vunpack.c.l.b16 %v496
      %v1413 = vunpack.c.l.b16 %v497
      %v1414 = vunpack.c.l.b16 %v498
      %v1415 = vunpack.c.l.b16 %v499
      %v1416 = vunpack.c.l.b16 %v500
      %v1417 = vunpack.c.l.b16 %v501
      %v1418 = vunpack.c.l.b16 %v502
      %v1419 = vunpack.c.l.b16 %v503
      %v1420 = vunpack.c.l.b16 %v504
      %v1421 = vunpack.c.l.b16 %v505
      %v1422 = vunpack.c.l.b16 %v506
      %v1423 = vunpack.c.l.b16 %v507
      %v1424 = vunpack.c.l.b16 %v508
      %v1425 = vunpack.c.l.b16 %v509
      %v1426 = vunpack.c.l.b16 %v510
      %v1427 = vunpack.c.l.b16 %v511
      %v1428 = vunpack.c.l.b16 %v512
      %v1429 = vunpack.c.l.b16 %v513
      %v1430 = vunpack.c.l.b16 %v514
      %v1431 = vunpack.c.l.b16 %v515
      %v1432 = vunpack.c.l.b16 %v516
      %v1433 = vunpack.c.l.b16 %v517
      %v1434 = vunpack.c.l.b16 %v518
      %v1435 = vunpack.c.l.b16 %v519
      %v1436 = vunpack.c.l.b16 %v520
      %v1437 = vunpack.c.l.b16 %v521
      %v1438 = vunpack.c.l.b16 %v522
      %v1439 = vunpack.c.l.b16 %v523
      %v1440 = vunpack.c.l.b16 %v524
      %v1441 = vunpack.c.l.b16 %v525
      %v1442 = vunpack.c.l.b16 %v526
      %v1443 = vunpack.c.l.b16 %v527
      %v1444 = vunpack.c.l.b16 %v528
      %v1445 = vunpack.c.l.b16 %v529
      %v1446 = vunpack.c.l.b16 %v530
      %v1447 = vunpack.c.l.b16 %v531
      %v1448 = vunpack.c.l.b16 %v532
      %v1449 = vunpack.c.l.b16 %v533
      %v1450 = vunpack.c.l.b16 %v534
      %v1451 = vunpack.c.l.b16 %v535
      %v1452 = vunpack.c.l.b16 %v536
      %v1453 = vunpack.c.l.b16 %v537
      %v1454 = vunpack.c.l.b16 %v538
      %v1455 = vunpack.c.l.b16 %v539
      %v1456 = vunpack.c.l.b16 %v540
      %v1457 = vunpack.c.l.b16 %v541
      %v1458 = vunpack.c.l.b16 %v542
      %v1459 = vunpack.c.l.b16 %v543
      %v1460 = vunpack.c.l.b16 %v544
      %v1461 = vunpack.c.l.b16 %v545
      %v1462 = vunpack.c.l.b16 %v546
      %v1463 = vunpack.c.l.b16 %v547
      %v1464 = vunpack.c.l.b16 %v548
      %v1465 = vunpack.c.l.b16 %v549
      %v1466 = vunpack.c.l.b16 %v550
      %v1467 = vunpack.c.l.b16 %v551
      %v1468 = vunpack.c.l.b16 %v552
      %v1469 = vunpack.c.l.b16 %v553
      %v1470 = vunpack.c.l.b16 %v554
      %v1471 = vunpack.c.l.b16 %v555
      %v1472 = vunpack.c.l.b16 %v556
      %v1473 = vunpack.c.l.b16 %v557
      %v1474 = vunpack.c.l.b16 %v558
      %v1475 = vunpack.c.l.b16 %v559
      %v1476 = vunpack.c.l.b16 %v560
      %v1477 = vunpack.c.l.b16 %v561
      %v1478 = vunpack.c.l.b16 %v562
      %v1479 = vunpack.c.l.b16 %v563
      %v1480 = vunpack.c.l.b16 %v564
      %v1481 = vunpack.c.l.b16 %v565
      %v1482 = vunpack.c.l.b16 %v566
      %v1483 = vunpack.c.l.b16 %v567
      %v1484 = vunpack.c.l.b16 %v568
      %v1485 = vunpack.c.l.b16 %v569
      %v1486 = vunpack.c.l.b16 %v570
      %v1487 = vunpack.c.l.b16 %v571
      %v1488 = vunpack.c.l.b16 %v572
      %v1489 = vunpack.c.l.b16 %v573
      %v1490 = vunpack.c.l.b16 %v574
      %v1491 = vunpack.c.l.b16 %v575
      %v1492 = vunpack.c.l.b16 %v576
      %v1493 = vunpack.c.l.b16 %v577
      %v1494 = vunpack.c.l.b16 %v578
      %v1495 = vunpack.c.l.b16 %v579
      %v1496 = vunpack.c.l.b16 %v580
      %v1497 = vunpack.c.l.b16 %v581
      %v1498 = vunpack.c.l.b16 %v582
      %v1499 = vunpack.c.l.b16 %v583
      %v1500 = vunpack.c.l.b16 %v584
      %v1501 = vunpack.c.l.b16 %v585
      %v1502 = vunpack.c.l.b16 %v586
      %v1503 = vunpack.c.l.b16 %v587
      %v1504 = vunpack.c.l.b16 %v588
      %v1505 = vunpack.c.l.b16 %v589
      %v1506 = vunpack.c.l.b16 %v590
      %v1507 = vunpack.c.l.b16 %v591
      %v1508 = vunpack.c.l.b16 %v592
      %v1509 = vunpack.c.l.b16 %v593
      %v1510 = vunpack.c.l.b16 %v594
      %v1511 = vunpack.c.l.b16 %v595
      %v1512 = vpack.c.b16 %v1121, %v1120
      %v1513 = vpack.c.b16 %v1123, %v1122
      %v1514 = vpack.c.b16 %v1125, %v1124
      %v1515 = vpack.c.b16 %v1127, %v1126
      %v1516 = vpack.c.b16 %v1129, %v1128
      %v1517 = vpack.c.b16 %v1131, %v1130
      %v1518 = vpack.c.b16 %v1133, %v1132
      %v1519 = vpack.c.b16 %v1135, %v1134
      %v1520 = vpack.c.b16 %v1137, %v1136
      %v1521 = vpack.c.b16 %v1139, %v1138
      %v1522 = vpack.c.b16 %v1141, %v1140
      %v1523 = vpack.c.b16 %v1143, %v1142
      %v1524 = vpack.c.b16 %v1145, %v1144
      %v1525 = vpack.c.b16 %v1147, %v1146
      %v1526 = vpack.c.b16 %v1149, %v1148
      %v1527 = vpack.c.b16 %v1151, %v1150
      %v1528 = vpack.c.b16 %v1153, %v1152
      %v1529 = vpack.c.b16 %v1155, %v1154
      %v1530 = vpack.c.b16 %v1157, %v1156
      %v1531 = vpack.c.b16 %v1159, %v1158
      %v1532 = vpack.c.b16 %v1161, %v1160
      %v1533 = vpack.c.b16 %v1163, %v1162
      %v1534 = vpack.c.b16 %v1165, %v1164
      %v1535 = vpack.c.b16 %v1167, %v1166
      %v1536 = vpack.c.b16 %v1169, %v1168
      %v1537 = vpack.c.b16 %v1171, %v1170
      %v1538 = vpack.c.b16 %v1173, %v1172
      %v1539 = vpack.c.b16 %v1175, %v1174
      %v1540 = vpack.c.b16 %v1177, %v1176
      %v1541 = vpack.c.b16 %v1179, %v1178
      %v1542 = vpack.c.b16 %v1181, %v1180
      %v1543 = vpack.c.b16 %v1183, %v1182
      %v1544 = vpack.c.b16 %v1185, %v1184
      %v1545 = vpack.c.b16 %v1187, %v1186
      %v1546 = vpack.c.b16 %v1189, %v1188
      %v1547 = vpack.c.b16 %v1191, %v1190
      %v1548 = vpack.c.b16 %v1193, %v1192
      %v1549 = vpack.c.b16 %v1195, %v1194
      %v1550 = vpack.c.b16 %v1197, %v1196
      %v1551 = vpack.c.b16 %v1199, %v1198
      %v1552 = vpack.c.b16 %v1201, %v1200
      %v1553 = vpack.c.b16 %v1203, %v1202
      %v1554 = vpack.c.b16 %v1205, %v1204
      %v1555 = vpack.c.b16 %v1207, %v1206
      %v1556 = vpack.c.b16 %v1209, %v1208
      %v1557 = vpack.c.b16 %v1211, %v1210
      %v1558 = vpack.c.b16 %v1213, %v1212
      %v1559 = vpack.c.b16 %v1215, %v1214
      %v1560 = vpack.c.b16 %v1217, %v1216
      %v1561 = vpack.c.b16 %v1219, %v1218
      %v1562 = vpack.c.b16 %v1221, %v1220
      %v1563 = vpack.c.b16 %v1223, %v1222
      %v1564 = vpack.c.b16 %v1225, %v1224
      %v1565 = vpack.c.b16 %v1227, %v1226
      %v1566 = vpack.c.b16 %v1229, %v1228
      %v1567 = vpack.c.b16 %v1231, %v1230
      %v1568 = vpack.c.b16 %v1233, %v1232
      %v1569 = vpack.c.b16 %v1235, %v1234
      %v1570 = vpack.c.b16 %v1237, %v1236
      %v1571 = vpack.c.b16 %v1239, %v1238
      %v1572 = vpack.c.b16 %v1241, %v1240
      %v1573 = vpack.c.b16 %v1243, %v1242
      %v1574 = vpack.c.b16 %v1245, %v1244
      %v1575 = vpack.c.b16 %v1247, %v1246
      %v1576 = vpack.c.b16 %v1249, %v1248
      %v1577 = vpack.c.b16 %v1251, %v1250
      %v1578 = vpack.c.b16 %v1253, %v1252
      %v1579 = vpack.c.b16 %v1255, %v1254
      %v1580 = vpack.c.b16 %v1257, %v1256
      %v1581 = vpack.c.b16 %v1259, %v1258
      %v1582 = vpack.c.b16 %v1261, %v1260
      %v1583 = vpack.c.b16 %v1263, %v1262
      %v1584 = vpack.c.b16 %v1265, %v1264
      %v1585 = vpack.c.b16 %v1267, %v1266
      %v1586 = vpack.c.b16 %v1269, %v1268
      %v1587 = vpack.c.b16 %v1271, %v1270
      %v1588 = vpack.c.b16 %v1273, %v1272
      %v1589 = vpack.c.b16 %v1275, %v1274
      %v1590 = vpack.c.b16 %v1277, %v1276
      %v1591 = vpack.c.b16 %v1279, %v1278
      %v1592 = vpack.c.b16 %v1281, %v1280
      %v1593 = vpack.c.b16 %v1283, %v1282
      %v1594 = vpack.c.b16 %v1285, %v1284
      %v1595 = vpack.c.b16 %v1287, %v1286
      %v1596 = vpack.c.b16 %v1289, %v1288
      %v1597 = vpack.c.b16 %v1291, %v1290
      %v1598 = vpack.c.b16 %v1293, %v1292
      %v1599 = vpack.c.b16 %v1295, %v1294
      %v1600 = vpack.c.b16 %v1297, %v1296
      %v1601 = vpack.c.b16 %v1299, %v1298
      %v1602 = vpack.c.b16 %v1301, %v1300
      %v1603 = vpack.c.b16 %v1303, %v1302
      %v1604 = vpack.c.b16 %v1305, %v1304
      %v1605 = vpack.c.b16 %v1307, %v1306
      %v1606 = vpack.c.b16 %v1309, %v1308
      %v1607 = vpack.c.b16 %v1311, %v1310
      %v1608 = vpack.c.b16 %v1313, %v1312
      %v1609 = vpack.c.b16 %v1315, %v1314
      %v1610 = vpack.c.b16 %v1317, %v1316
      %v1611 = vpack.c.b16 %v1319, %v1318
      %v1612 = vpack.c.b16 %v1321, %v1320
      %v1613 = vpack.c.b16 %v1323, %v1322
      %v1614 = vpack.c.b16 %v1325, %v1324
      %v1615 = vpack.c.b16 %v1327, %v1326
      %v1616 = vpack.c.b16 %v1329, %v1328
      %v1617 = vpack.c.b16 %v1331, %v1330
      %v1618 = vpack.c.b16 %v1333, %v1332
      %v1619 = vpack.c.b16 %v1335, %v1334
      %v1620 = vpack.c.b16 %v1337, %v1336
      %v1621 = vpack.c.b16 %v1339, %v1338
      %v1622 = vpack.c.b16 %v1341, %v1340
      %v1623 = vpack.c.b16 %v1343, %v1342
      %v1624 = vpack.c.b16 %v1345, %v1344
      %v1625 = vpack.c.b16 %v1347, %v1346
      %v1626 = vpack.c.b16 %v1349, %v1348
      %v1627 = vpack.c.b16 %v1351, %v1350
      %v1628 = vpack.c.b16 %v1353, %v1352
      %v1629 = vpack.c.b16 %v1355, %v1354
      %v1630 = vpack.c.b16 %v1357, %v1356
      %v1631 = vpack.c.b16 %v1359, %v1358
      %v1632 = vpack.c.b16 %v1361, %v1360
      %v1633 = vpack.c.b16 %v1363, %v1362
      %v1634 = vpack.c.b16 %v1365, %v1364
      %v1635 = vpack.c.b16 %v1367, %v1366
      %v1636 = vpack.c.b16 %v1369, %v1368
      %v1637 = vpack.c.b16 %v1371, %v1370
      %v1638 = vpack.c.b16 %v1373, %v1372
      %v1639 = vpack.c.b16 %v1375, %v1374
      %v1640 = vpack.c.b16 %v1377, %v1376
      %v1641 = vpack.c.b16 %v1379, %v1378
      %v1642 = vpack.c.b16 %v1381, %v1380
      %v1643 = vpack.c.b16 %v1383, %v1382
      %v1644 = vpack.c.b16 %v1385, %v1384
      %v1645 = vpack.c.b16 %v1387, %v1386
      %v1646 = vpack.c.b16 %v1389, %v1388
      %v1647 = vpack.c.b16 %v1391, %v1390
      %v1648 = vpack.c.b16 %v1393, %v1392
      %v1649 = vpack.c.b16 %v1395, %v1394
      %v1650 = vpack.c.b16 %v1397, %v1396
      %v1651 = vpack.c.b16 %v1399, %v1398
      %v1652 = vpack.c.b16 %v1401, %v1400
      %v1653 = vpack.c.b16 %v1403, %v1402
      %v1654 = vpack.c.b16 %v1405, %v1404
      %v1655 = vpack.c.b16 %v1407, %v1406
      %v1656 = vpack.c.b16 %v1409, %v1408
      %v1657 = vpack.c.b16 %v1411, %v1410
      %v1658 = vpack.c.b16 %v1413, %v1412
      %v1659 = vpack.c.b16 %v1415, %v1414
      %v1660 = vpack.c.b16 %v1417, %v1416
      %v1661 = vpack.c.b16 %v1419, %v1418
      %v1662 = vpack.c.b16 %v1421, %v1420
      %v1663 = vpack.c.b16 %v1423, %v1422
      %v1664 = vpack.c.b16 %v1425, %v1424
      %v1665 = vpack.c.b16 %v1427, %v1426
      %v1666 = vpack.c.b16 %v1429, %v1428
      %v1667 = vpack.c.b16 %v1431, %v1430
      %v1668 = vpack.c.b16 %v1433, %v1432
      %v1669 = vpack.c.b16 %v1435, %v1434
      %v1670 = vpack.c.b16 %v1437, %v1436
      %v1671 = vpack.c.b16 %v1439, %v1438
      %v1672 = vpack.c.b16 %v1441, %v1440
      %v1673 = vpack.c.b16 %v1443, %v1442
      %v1674 = vpack.c.b16 %v1445, %v1444
      %v1675 = vpack.c.b16 %v1447, %v1446
      %v1676 = vpack.c.b16 %v1449, %v1448
      %v1677 = vpack.c.b16 %v1451, %v1450
      %v1678 = vpack.c.b16 %v1453, %v1452
      %v1679 = vpack.c.b16 %v1455, %v1454
      %v1680 = vpack.c.b16 %v1457, %v1456
      %v1681 = vpack.c.b16 %v1459, %v1458
      %v1682 = vpack.c.b16 %v1461, %v1460
      %v1683 = vpack.c.b16 %v1463, %v1462
      %v1684 = vpack.c.b16 %v1465, %v1464
      %v1685 = vpack.c.b16 %v1467, %v1466
      %v1686 = vpack.c.b16 %v1469, %v1468
      %v1687 = vpack.c.b16 %v1471, %v1470
      %v1688 = vpack.c.b16 %v1473, %v1472
      %v1689 = vpack.c.b16 %v1475, %v1474
      %v1690 = vpack.c.b16 %v1477, %v1476
      %v1691 = vpack.c.b16 %v1479, %v1478
      %v1692 = vpack.c.b16 %v1481, %v1480
      %v1693 = vpack.c.b16 %v1483, %v1482
      %v1694 = vpack.c.b16 %v1485, %v1484
      %v1695 = vpack.c.b16 %v1487, %v1486
      %v1696 = vpack.c.b16 %v1489, %v1488
      %v1697 = vpack.c.b16 %v1491, %v1490
      %v1698 = vpack.c.b16 %v1493, %v1492
      %v1699 = vpack.c.b16 %v1495, %v1494
      %v1700 = vpack.c.b16 %v1497, %v1496
      %v1701 = vpack.c.b16 %v1499, %v1498
      %v1702 = vpack.c.b16 %v1501, %v1500
      %v1703 = vpack.c.b16 %v1503, %v1502
      %v1704 = vpack.c.b16 %v1505, %v1504
      %v1705 = vpack.c.b16 %v1507, %v1506
      %v1706 = vpack.c.b16 %v1509, %v1508
      %v1707 = vpack.c.b16 %v1511, %v1510
      %vm1904 = vcmask 523264
      %v1906 = vsel %vm1904, %v703, 0
      %1908 = vmatprep.subr.bf16.mxu0 0
      %1909 = vmatpush1.bf16.msra.mxu0 %v1512
      %1910 = vmatprep.subr.bf16.mxu0 0
      %1911 = vmatpush1.bf16.msra.mxu0 %v1513
      %1912 = vmatprep.subr.bf16.mxu0 0
      %1913 = vmatpush1.bf16.msra.mxu0 %v1514
      %1914 = vmatprep.subr.bf16.mxu0 0
      %1915 = vmatpush1.bf16.msra.mxu0 %v1515
      %1916 = vmatprep.subr.bf16.mxu0 0
      %1917 = vmatpush1.bf16.msra.mxu0 %v1516
      %1918 = vmatprep.subr.bf16.mxu0 0
      %1919 = vmatpush1.bf16.msra.mxu0 %v1517
      %1920 = vmatprep.subr.bf16.mxu0 0
      %1921 = vmatpush1.bf16.msra.mxu0 %v1518
      %1922 = vmatprep.subr.bf16.mxu0 0
      %1923 = vmatpush1.bf16.msra.mxu0 %v1519
      %1924 = vmatprep.subr.bf16.mxu0 0
      %1925 = vmatpush1.bf16.msra.mxu0 %v1520
      %1926 = vmatprep.subr.bf16.mxu0 0
      %1927 = vmatpush1.bf16.msra.mxu0 %v1521
      %1928 = vmatprep.subr.bf16.mxu0 0
      %1929 = vmatpush1.bf16.msra.mxu0 %v1522
      %1930 = vmatprep.subr.bf16.mxu0 0
      %1931 = vmatpush1.bf16.msra.mxu0 %v1523
      %1932 = vmatprep.subr.bf16.mxu0 0
      %1933 = vmatpush1.bf16.msra.mxu0 %v1524
      %1934 = vmatprep.subr.bf16.mxu0 0
      %1935 = vmatpush1.bf16.msra.mxu0 %v1525
      %1936 = vmatprep.subr.bf16.mxu0 0
      %1937 = vmatpush1.bf16.msra.mxu0 %v1526
      %1938 = vmatprep.subr.bf16.mxu0 0
      %1939 = vmatpush1.bf16.msra.mxu0 %v1527
      %1940 = vmatprep.mubr.bf16.mxu0 %v680
      %1941 = vmatmul.mubr.bf16.gmra.mrb[0].mxu0 %v679
      %v1942 = vpop.f32.mrb[0].mxu0
      %v1943 = vadd.f32 %v601, %v1942
      %v1944 = vpop.f32.mrb[0].mxu0
      %v1945 = vpop.f32.mrb[0].mxu0
      %v1946 = vadd.f32 %v601, %v1945
      %v1947 = vpop.f32.mrb[0].mxu0
      %1948 = vdwg.mxu0
      %1949 = vmatprep.subr.bf16.mxu0 0
      %1950 = vmatpush1.bf16.msra.mxu0 %v1528
      %1951 = vmatprep.subr.bf16.mxu0 0
      %1952 = vmatpush1.bf16.msra.mxu0 %v1529
      %1953 = vmatprep.subr.bf16.mxu0 0
      %1954 = vmatpush1.bf16.msra.mxu0 %v1530
      %1955 = vmatprep.subr.bf16.mxu0 0
      %1956 = vmatpush1.bf16.msra.mxu0 %v1531
      %1957 = vmatprep.subr.bf16.mxu0 0
      %1958 = vmatpush1.bf16.msra.mxu0 %v1532
      %1959 = vmatprep.subr.bf16.mxu0 0
      %1960 = vmatpush1.bf16.msra.mxu0 %v1533
      %1961 = vmatprep.subr.bf16.mxu0 0
      %1962 = vmatpush1.bf16.msra.mxu0 %v1534
      %1963 = vmatprep.subr.bf16.mxu0 0
      %1964 = vmatpush1.bf16.msra.mxu0 %v1535
      %1965 = vmatprep.subr.bf16.mxu0 0
      %1966 = vmatpush1.bf16.msra.mxu0 %v1536
      %1967 = vmatprep.subr.bf16.mxu0 0
      %1968 = vmatpush1.bf16.msra.mxu0 %v1537
      %1969 = vmatprep.subr.bf16.mxu0 0
      %1970 = vmatpush1.bf16.msra.mxu0 %v1538
      %1971 = vmatprep.subr.bf16.mxu0 0
      %1972 = vmatpush1.bf16.msra.mxu0 %v1539
      %1973 = vmatprep.subr.bf16.mxu0 0
      %1974 = vmatpush1.bf16.msra.mxu0 %v1540
      %1975 = vmatprep.subr.bf16.mxu0 0
      %1976 = vmatpush1.bf16.msra.mxu0 %v1541
      %1977 = vmatprep.subr.bf16.mxu0 0
      %1978 = vmatpush1.bf16.msra.mxu0 %v1542
      %1979 = vmatprep.subr.bf16.mxu0 0
      %1980 = vmatpush1.bf16.msra.mxu0 %v1543
      %1981 = vmatprep.mubr.bf16.mxu0 %v682
      %1982 = vmatmul.mubr.bf16.gmra.mrb[0].mxu0 %v681
      %v1983 = vpop.f32.mrb[0].mxu0
      %v1984 = vadd.f32 %v1943, %v1983
      %v1985 = vpop.f32.mrb[0].mxu0
      %v1986 = vpop.f32.mrb[0].mxu0
      %v1987 = vadd.f32 %v1946, %v1986
      %v1988 = vpop.f32.mrb[0].mxu0
      %1989 = vdwg.mxu0
      %1990 = vmatprep.subr.bf16.mxu0 0
      %1991 = vmatpush1.bf16.msra.mxu0 %v1544
      %1992 = vmatprep.subr.bf16.mxu0 0
      %1993 = vmatpush1.bf16.msra.mxu0 %v1545
      %1994 = vmatprep.subr.bf16.mxu0 0
      %1995 = vmatpush1.bf16.msra.mxu0 %v1546
      %1996 = vmatprep.subr.bf16.mxu0 0
      %1997 = vmatpush1.bf16.msra.mxu0 %v1547
      %1998 = vmatprep.subr.bf16.mxu0 0
      %1999 = vmatpush1.bf16.msra.mxu0 %v1548
      %2000 = vmatprep.subr.bf16.mxu0 0
      %2001 = vmatpush1.bf16.msra.mxu0 %v1549
      %2002 = vmatprep.subr.bf16.mxu0 0
      %2003 = vmatpush1.bf16.msra.mxu0 %v1550
      %2004 = vmatprep.subr.bf16.mxu0 0
      %2005 = vmatpush1.bf16.msra.mxu0 %v1551
      %2006 = vmatprep.subr.bf16.mxu0 0
      %2007 = vmatpush1.bf16.msra.mxu0 %v1552
      %2008 = vmatprep.subr.bf16.mxu0 0
      %2009 = vmatpush1.bf16.msra.mxu0 %v1553
      %2010 = vmatprep.subr.bf16.mxu0 0
      %2011 = vmatpush1.bf16.msra.mxu0 %v1554
      %2012 = vmatprep.subr.bf16.mxu0 0
      %2013 = vmatpush1.bf16.msra.mxu0 %v1555
      %2014 = vmatprep.subr.bf16.mxu0 0
      %2015 = vmatpush1.bf16.msra.mxu0 %v1556
      %2016 = vmatprep.subr.bf16.mxu0 0
      %2017 = vmatpush1.bf16.msra.mxu0 %v1557
      %2018 = vmatprep.subr.bf16.mxu0 0
      %2019 = vmatpush1.bf16.msra.mxu0 %v1558
      %2020 = vmatprep.subr.bf16.mxu0 0
      %2021 = vmatpush1.bf16.msra.mxu0 %v1559
      %2022 = vmatprep.mubr.bf16.mxu0 %v684
      %2023 = vmatmul.mubr.bf16.gmra.mrb[0].mxu0 %v683
      %v2024 = vpop.f32.mrb[0].mxu0
      %v2025 = vadd.f32 %v1984, %v2024
      %v2026 = vpop.f32.mrb[0].mxu0
      %v2027 = vpop.f32.mrb[0].mxu0
      %v2028 = vadd.f32 %v1987, %v2027
      %v2029 = vpop.f32.mrb[0].mxu0
      %2030 = vdwg.mxu0
      %2031 = vmatprep.subr.bf16.mxu0 0
      %2032 = vmatpush1.bf16.msra.mxu0 %v1560
      %2033 = vmatprep.subr.bf16.mxu0 0
      %2034 = vmatpush1.bf16.msra.mxu0 %v1561
      %2035 = vmatprep.subr.bf16.mxu0 0
      %2036 = vmatpush1.bf16.msra.mxu0 %v1562
      %2037 = vmatprep.subr.bf16.mxu0 0
      %2038 = vmatpush1.bf16.msra.mxu0 %v1563
      %2039 = vmatprep.subr.bf16.mxu0 0
      %2040 = vmatpush1.bf16.msra.mxu0 %v1564
      %2041 = vmatprep.subr.bf16.mxu0 0
      %2042 = vmatpush1.bf16.msra.mxu0 %v1565
      %2043 = vmatprep.subr.bf16.mxu0 0
      %2044 = vmatpush1.bf16.msra.mxu0 %v1566
      %2045 = vmatprep.subr.bf16.mxu0 0
      %2046 = vmatpush1.bf16.msra.mxu0 %v1567
      %2047 = vmatprep.subr.bf16.mxu0 0
      %2048 = vmatpush1.bf16.msra.mxu0 %v1568
      %2049 = vmatprep.subr.bf16.mxu0 0
      %2050 = vmatpush1.bf16.msra.mxu0 %v1569
      %2051 = vmatprep.subr.bf16.mxu0 0
      %2052 = vmatpush1.bf16.msra.mxu0 %v1570
      %2053 = vmatprep.subr.bf16.mxu0 0
      %2054 = vmatpush1.bf16.msra.mxu0 %v1571
      %2055 = vmatprep.subr.bf16.mxu0 0
      %2056 = vmatpush1.bf16.msra.mxu0 %v1572
      %2057 = vmatprep.subr.bf16.mxu0 0
      %2058 = vmatpush1.bf16.msra.mxu0 %v1573
      %2059 = vmatprep.subr.bf16.mxu0 0
      %2060 = vmatpush1.bf16.msra.mxu0 %v1574
      %2061 = vmatprep.subr.bf16.mxu0 0
      %2062 = vmatpush1.bf16.msra.mxu0 %v1575
      %2063 = vmatprep.mubr.bf16.mxu0 %v686
      %2064 = vmatmul.mubr.bf16.gmra.mrb[0].mxu0 %v685
      %v2065 = vpop.f32.mrb[0].mxu0
      %v2066 = vadd.f32 %v2025, %v2065
      %v2067 = vpop.f32.mrb[0].mxu0
      %v2068 = vpop.f32.mrb[0].mxu0
      %v2069 = vadd.f32 %v2028, %v2068
      %v2070 = vpop.f32.mrb[0].mxu0
      %2071 = vdwg.mxu0
      %2072 = vmatprep.subr.bf16.mxu0 0
      %2073 = vmatpush1.bf16.msra.mxu0 %v1576
      %2074 = vmatprep.subr.bf16.mxu0 0
      %2075 = vmatpush1.bf16.msra.mxu0 %v1577
      %2076 = vmatprep.subr.bf16.mxu0 0
      %2077 = vmatpush1.bf16.msra.mxu0 %v1578
      %2078 = vmatprep.subr.bf16.mxu0 0
      %2079 = vmatpush1.bf16.msra.mxu0 %v1579
      %2080 = vmatprep.subr.bf16.mxu0 0
      %2081 = vmatpush1.bf16.msra.mxu0 %v1580
      %2082 = vmatprep.subr.bf16.mxu0 0
      %2083 = vmatpush1.bf16.msra.mxu0 %v1581
      %2084 = vmatprep.subr.bf16.mxu0 0
      %2085 = vmatpush1.bf16.msra.mxu0 %v1582
      %2086 = vmatprep.subr.bf16.mxu0 0
      %2087 = vmatpush1.bf16.msra.mxu0 %v1583
      %2088 = vmatprep.subr.bf16.mxu0 0
      %2089 = vmatpush1.bf16.msra.mxu0 %v1584
      %2090 = vmatprep.subr.bf16.mxu0 0
      %2091 = vmatpush1.bf16.msra.mxu0 %v1585
      %2092 = vmatprep.subr.bf16.mxu0 0
      %2093 = vmatpush1.bf16.msra.mxu0 %v1586
      %2094 = vmatprep.subr.bf16.mxu0 0
      %2095 = vmatpush1.bf16.msra.mxu0 %v1587
      %2096 = vmatprep.subr.bf16.mxu0 0
      %2097 = vmatpush1.bf16.msra.mxu0 %v1588
      %2098 = vmatprep.subr.bf16.mxu0 0
      %2099 = vmatpush1.bf16.msra.mxu0 %v1589
      %2100 = vmatprep.subr.bf16.mxu0 0
      %2101 = vmatpush1.bf16.msra.mxu0 %v1590
      %2102 = vmatprep.subr.bf16.mxu0 0
      %2103 = vmatpush1.bf16.msra.mxu0 %v1591
      %2104 = vmatprep.mubr.bf16.mxu0 %v688
      %2105 = vmatmul.mubr.bf16.gmra.mrb[0].mxu0 %v687
      %v2106 = vpop.f32.mrb[0].mxu0
      %v2107 = vadd.f32 %v2066, %v2106
      %v2108 = vpop.f32.mrb[0].mxu0
      %v2109 = vpop.f32.mrb[0].mxu0
      %v2110 = vadd.f32 %v2069, %v2109
      %v2111 = vpop.f32.mrb[0].mxu0
      %2112 = vdwg.mxu0
      %2113 = vmatprep.subr.bf16.mxu0 0
      %2114 = vmatpush1.bf16.msra.mxu0 %v1592
      %2115 = vmatprep.subr.bf16.mxu0 0
      %2116 = vmatpush1.bf16.msra.mxu0 %v1593
      %2117 = vmatprep.subr.bf16.mxu0 0
      %2118 = vmatpush1.bf16.msra.mxu0 %v1594
      %2119 = vmatprep.subr.bf16.mxu0 0
      %2120 = vmatpush1.bf16.msra.mxu0 %v1595
      %2121 = vmatprep.subr.bf16.mxu0 0
      %2122 = vmatpush1.bf16.msra.mxu0 %v1596
      %2123 = vmatprep.subr.bf16.mxu0 0
      %2124 = vmatpush1.bf16.msra.mxu0 %v1597
      %2125 = vmatprep.subr.bf16.mxu0 0
      %2126 = vmatpush1.bf16.msra.mxu0 %v1598
      %2127 = vmatprep.subr.bf16.mxu0 0
      %2128 = vmatpush1.bf16.msra.mxu0 %v1599
      %2129 = vmatprep.subr.bf16.mxu0 0
      %2130 = vmatpush1.bf16.msra.mxu0 %v1600
      %2131 = vmatprep.subr.bf16.mxu0 0
      %2132 = vmatpush1.bf16.msra.mxu0 %v1601
      %2133 = vmatprep.subr.bf16.mxu0 0
      %2134 = vmatpush1.bf16.msra.mxu0 %v1602
      %2135 = vmatprep.subr.bf16.mxu0 0
      %2136 = vmatpush1.bf16.msra.mxu0 %v1603
      %2137 = vmatprep.subr.bf16.mxu0 0
      %2138 = vmatpush1.bf16.msra.mxu0 %v1604
      %2139 = vmatprep.subr.bf16.mxu0 0
      %2140 = vmatpush1.bf16.msra.mxu0 %v1605
      %2141 = vmatprep.subr.bf16.mxu0 0
      %2142 = vmatpush1.bf16.msra.mxu0 %v1606
      %2143 = vmatprep.subr.bf16.mxu0 0
      %2144 = vmatpush1.bf16.msra.mxu0 %v1607
      %2145 = vmatprep.mubr.bf16.mxu0 %v690
      %2146 = vmatmul.mubr.bf16.gmra.mrb[0].mxu0 %v689
      %v2147 = vpop.f32.mrb[0].mxu0
      %v2148 = vadd.f32 %v2107, %v2147
      %v2149 = vpop.f32.mrb[0].mxu0
      %v2150 = vpop.f32.mrb[0].mxu0
      %v2151 = vadd.f32 %v2110, %v2150
      %v2152 = vpop.f32.mrb[0].mxu0
      %2153 = vdwg.mxu0
      %2154 = vmatprep.subr.bf16.mxu0 0
      %2155 = vmatpush1.bf16.msra.mxu0 %v1608
      %2156 = vmatprep.subr.bf16.mxu0 0
      %2157 = vmatpush1.bf16.msra.mxu0 %v1609
      %2158 = vmatprep.subr.bf16.mxu0 0
      %2159 = vmatpush1.bf16.msra.mxu0 %v1610
      %2160 = vmatprep.subr.bf16.mxu0 0
      %2161 = vmatpush1.bf16.msra.mxu0 %v1611
      %2162 = vmatprep.subr.bf16.mxu0 0
      %2163 = vmatpush1.bf16.msra.mxu0 %v1612
      %2164 = vmatprep.subr.bf16.mxu0 0
      %2165 = vmatpush1.bf16.msra.mxu0 %v1613
      %2166 = vmatprep.subr.bf16.mxu0 0
      %2167 = vmatpush1.bf16.msra.mxu0 %v1614
      %2168 = vmatprep.subr.bf16.mxu0 0
      %2169 = vmatpush1.bf16.msra.mxu0 %v1615
      %2170 = vmatprep.subr.bf16.mxu0 0
      %2171 = vmatpush1.bf16.msra.mxu0 %v1616
      %2172 = vmatprep.subr.bf16.mxu0 0
      %2173 = vmatpush1.bf16.msra.mxu0 %v1617
      %2174 = vmatprep.subr.bf16.mxu0 0
      %2175 = vmatpush1.bf16.msra.mxu0 %v1618
      %2176 = vmatprep.subr.bf16.mxu0 0
      %2177 = vmatpush1.bf16.msra.mxu0 %v1619
      %2178 = vmatprep.subr.bf16.mxu0 0
      %2179 = vmatpush1.bf16.msra.mxu0 %v1620
      %2180 = vmatprep.subr.bf16.mxu0 0
      %2181 = vmatpush1.bf16.msra.mxu0 %v1621
      %2182 = vmatprep.subr.bf16.mxu0 0
      %2183 = vmatpush1.bf16.msra.mxu0 %v1622
      %2184 = vmatprep.subr.bf16.mxu0 0
      %2185 = vmatpush1.bf16.msra.mxu0 %v1623
      %2186 = vmatprep.mubr.bf16.mxu0 %v692
      %2187 = vmatmul.mubr.bf16.gmra.mrb[0].mxu0 %v691
      %v2188 = vpop.f32.mrb[0].mxu0
      %v2189 = vadd.f32 %v2148, %v2188
      %v2190 = vpop.f32.mrb[0].mxu0
      %v2191 = vpop.f32.mrb[0].mxu0
      %v2192 = vadd.f32 %v2151, %v2191
      %v2193 = vpop.f32.mrb[0].mxu0
      %2194 = vdwg.mxu0
      %2195 = vmatprep.subr.bf16.mxu0 0
      %2196 = vmatpush1.bf16.msra.mxu0 %v1624
      %2197 = vmatprep.subr.bf16.mxu0 0
      %2198 = vmatpush1.bf16.msra.mxu0 %v1625
      %2199 = vmatprep.subr.bf16.mxu0 0
      %2200 = vmatpush1.bf16.msra.mxu0 %v1626
      %2201 = vmatprep.subr.bf16.mxu0 0
      %2202 = vmatpush1.bf16.msra.mxu0 %v1627
      %2203 = vmatprep.subr.bf16.mxu0 0
      %2204 = vmatpush1.bf16.msra.mxu0 %v1628
      %2205 = vmatprep.subr.bf16.mxu0 0
      %2206 = vmatpush1.bf16.msra.mxu0 %v1629
      %2207 = vmatprep.subr.bf16.mxu0 0
      %2208 = vmatpush1.bf16.msra.mxu0 %v1630
      %2209 = vmatprep.subr.bf16.mxu0 0
      %2210 = vmatpush1.bf16.msra.mxu0 %v1631
      %2211 = vmatprep.subr.bf16.mxu0 0
      %2212 = vmatpush1.bf16.msra.mxu0 %v1632
      %2213 = vmatprep.subr.bf16.mxu0 0
      %2214 = vmatpush1.bf16.msra.mxu0 %v1633
      %2215 = vmatprep.subr.bf16.mxu0 0
      %2216 = vmatpush1.bf16.msra.mxu0 %v1634
      %2217 = vmatprep.subr.bf16.mxu0 0
      %2218 = vmatpush1.bf16.msra.mxu0 %v1635
      %2219 = vmatprep.subr.bf16.mxu0 0
      %2220 = vmatpush1.bf16.msra.mxu0 %v1636
      %2221 = vmatprep.subr.bf16.mxu0 0
      %2222 = vmatpush1.bf16.msra.mxu0 %v1637
      %2223 = vmatprep.subr.bf16.mxu0 0
      %2224 = vmatpush1.bf16.msra.mxu0 %v1638
      %2225 = vmatprep.subr.bf16.mxu0 0
      %2226 = vmatpush1.bf16.msra.mxu0 %v1639
      %2227 = vmatprep.mubr.bf16.mxu0 %v694
      %2228 = vmatmul.mubr.bf16.gmra.mrb[0].mxu0 %v693
      %v2229 = vpop.f32.mrb[0].mxu0
      %v2230 = vadd.f32 %v2189, %v2229
      %v2231 = vpop.f32.mrb[0].mxu0
      %v2232 = vpop.f32.mrb[0].mxu0
      %v2233 = vadd.f32 %v2192, %v2232
      %v2234 = vpop.f32.mrb[0].mxu0
      %2235 = vdwg.mxu0
      %2236 = vmatprep.subr.bf16.mxu0 0
      %2237 = vmatpush1.bf16.msra.mxu0 %v1640
      %2238 = vmatprep.subr.bf16.mxu0 0
      %2239 = vmatpush1.bf16.msra.mxu0 %v1641
      %2240 = vmatprep.subr.bf16.mxu0 0
      %2241 = vmatpush1.bf16.msra.mxu0 %v1642
      %2242 = vmatprep.subr.bf16.mxu0 0
      %2243 = vmatpush1.bf16.msra.mxu0 %v1643
      %2244 = vmatprep.subr.bf16.mxu0 0
      %2245 = vmatpush1.bf16.msra.mxu0 %v1644
      %2246 = vmatprep.subr.bf16.mxu0 0
      %2247 = vmatpush1.bf16.msra.mxu0 %v1645
      %2248 = vmatprep.subr.bf16.mxu0 0
      %2249 = vmatpush1.bf16.msra.mxu0 %v1646
      %2250 = vmatprep.subr.bf16.mxu0 0
      %2251 = vmatpush1.bf16.msra.mxu0 %v1647
      %2252 = vmatprep.subr.bf16.mxu0 0
      %2253 = vmatpush1.bf16.msra.mxu0 %v1648
      %2254 = vmatprep.subr.bf16.mxu0 0
      %2255 = vmatpush1.bf16.msra.mxu0 %v1649
      %2256 = vmatprep.subr.bf16.mxu0 0
      %2257 = vmatpush1.bf16.msra.mxu0 %v1650
      %2258 = vmatprep.subr.bf16.mxu0 0
      %2259 = vmatpush1.bf16.msra.mxu0 %v1651
      %2260 = vmatprep.subr.bf16.mxu0 0
      %2261 = vmatpush1.bf16.msra.mxu0 %v1652
      %2262 = vmatprep.subr.bf16.mxu0 0
      %2263 = vmatpush1.bf16.msra.mxu0 %v1653
      %2264 = vmatprep.subr.bf16.mxu0 0
      %2265 = vmatpush1.bf16.msra.mxu0 %v1654
      %2266 = vmatprep.subr.bf16.mxu0 0
      %2267 = vmatpush1.bf16.msra.mxu0 %v1655
      %2268 = vmatprep.mubr.bf16.mxu0 %v696
      %2269 = vmatmul.mubr.bf16.gmra.mrb[0].mxu0 %v695
      %v2270 = vpop.f32.mrb[0].mxu0
      %v2271 = vadd.f32 %v2230, %v2270
      %v2272 = vpop.f32.mrb[0].mxu0
      %v2273 = vpop.f32.mrb[0].mxu0
      %v2274 = vadd.f32 %v2233, %v2273
      %v2275 = vpop.f32.mrb[0].mxu0
      %2276 = vdwg.mxu0
      %2277 = vmatprep.subr.bf16.mxu0 0
      %2278 = vmatpush1.bf16.msra.mxu0 %v1656
      %2279 = vmatprep.subr.bf16.mxu0 0
      %2280 = vmatpush1.bf16.msra.mxu0 %v1657
      %2281 = vmatprep.subr.bf16.mxu0 0
      %2282 = vmatpush1.bf16.msra.mxu0 %v1658
      %2283 = vmatprep.subr.bf16.mxu0 0
      %2284 = vmatpush1.bf16.msra.mxu0 %v1659
      %2285 = vmatprep.subr.bf16.mxu0 0
      %2286 = vmatpush1.bf16.msra.mxu0 %v1660
      %2287 = vmatprep.subr.bf16.mxu0 0
      %2288 = vmatpush1.bf16.msra.mxu0 %v1661
      %2289 = vmatprep.subr.bf16.mxu0 0
      %2290 = vmatpush1.bf16.msra.mxu0 %v1662
      %2291 = vmatprep.subr.bf16.mxu0 0
      %2292 = vmatpush1.bf16.msra.mxu0 %v1663
      %2293 = vmatprep.subr.bf16.mxu0 0
      %2294 = vmatpush1.bf16.msra.mxu0 %v1664
      %2295 = vmatprep.subr.bf16.mxu0 0
      %2296 = vmatpush1.bf16.msra.mxu0 %v1665
      %2297 = vmatprep.subr.bf16.mxu0 0
      %2298 = vmatpush1.bf16.msra.mxu0 %v1666
      %2299 = vmatprep.subr.bf16.mxu0 0
      %2300 = vmatpush1.bf16.msra.mxu0 %v1667
      %2301 = vmatprep.subr.bf16.mxu0 0
      %2302 = vmatpush1.bf16.msra.mxu0 %v1668
      %2303 = vmatprep.subr.bf16.mxu0 0
      %2304 = vmatpush1.bf16.msra.mxu0 %v1669
      %2305 = vmatprep.subr.bf16.mxu0 0
      %2306 = vmatpush1.bf16.msra.mxu0 %v1670
      %2307 = vmatprep.subr.bf16.mxu0 0
      %2308 = vmatpush1.bf16.msra.mxu0 %v1671
      %2309 = vmatprep.mubr.bf16.mxu0 %v698
      %2310 = vmatmul.mubr.bf16.gmra.mrb[0].mxu0 %v697
      %v2311 = vpop.f32.mrb[0].mxu0
      %v2312 = vadd.f32 %v2271, %v2311
      %v2313 = vpop.f32.mrb[0].mxu0
      %v2314 = vpop.f32.mrb[0].mxu0
      %v2315 = vadd.f32 %v2274, %v2314
      %v2316 = vpop.f32.mrb[0].mxu0
      %2317 = vdwg.mxu0
      %2318 = vmatprep.subr.bf16.mxu0 0
      %2319 = vmatpush1.bf16.msra.mxu0 %v1672
      %2320 = vmatprep.subr.bf16.mxu0 0
      %2321 = vmatpush1.bf16.msra.mxu0 %v1673
      %2322 = vmatprep.subr.bf16.mxu0 0
      %2323 = vmatpush1.bf16.msra.mxu0 %v1674
      %2324 = vmatprep.subr.bf16.mxu0 0
      %2325 = vmatpush1.bf16.msra.mxu0 %v1675
      %2326 = vmatprep.subr.bf16.mxu0 0
      %2327 = vmatpush1.bf16.msra.mxu0 %v1676
      %2328 = vmatprep.subr.bf16.mxu0 0
      %2329 = vmatpush1.bf16.msra.mxu0 %v1677
      %2330 = vmatprep.subr.bf16.mxu0 0
      %2331 = vmatpush1.bf16.msra.mxu0 %v1678
      %2332 = vmatprep.subr.bf16.mxu0 0
      %2333 = vmatpush1.bf16.msra.mxu0 %v1679
      %2334 = vmatprep.subr.bf16.mxu0 0
      %2335 = vmatpush1.bf16.msra.mxu0 %v1680
      %2336 = vmatprep.subr.bf16.mxu0 0
      %2337 = vmatpush1.bf16.msra.mxu0 %v1681
      %2338 = vmatprep.subr.bf16.mxu0 0
      %2339 = vmatpush1.bf16.msra.mxu0 %v1682
      %2340 = vmatprep.subr.bf16.mxu0 0
      %2341 = vmatpush1.bf16.msra.mxu0 %v1683
      %2342 = vmatprep.subr.bf16.mxu0 0
      %2343 = vmatpush1.bf16.msra.mxu0 %v1684
      %2344 = vmatprep.subr.bf16.mxu0 0
      %2345 = vmatpush1.bf16.msra.mxu0 %v1685
      %2346 = vmatprep.subr.bf16.mxu0 0
      %2347 = vmatpush1.bf16.msra.mxu0 %v1686
      %2348 = vmatprep.subr.bf16.mxu0 0
      %2349 = vmatpush1.bf16.msra.mxu0 %v1687
      %2350 = vmatprep.mubr.bf16.mxu0 %v700
      %2351 = vmatmul.mubr.bf16.gmra.mrb[0].mxu0 %v699
      %v2352 = vpop.f32.mrb[0].mxu0
      %v2353 = vadd.f32 %v2312, %v2352
      %v2354 = vpop.f32.mrb[0].mxu0
      %v2355 = vpop.f32.mrb[0].mxu0
      %v2356 = vadd.f32 %v2315, %v2355
      %v2357 = vpop.f32.mrb[0].mxu0
      %2358 = vdwg.mxu0
      %2359 = vmatprep.subr.bf16.mxu0 0
      %2360 = vmatpush1.bf16.msra.mxu0 %v1688
      %2361 = vmatprep.subr.bf16.mxu0 0
      %2362 = vmatpush1.bf16.msra.mxu0 %v1689
      %2363 = vmatprep.subr.bf16.mxu0 0
      %2364 = vmatpush1.bf16.msra.mxu0 %v1690
      %2365 = vmatprep.subr.bf16.mxu0 0
      %2366 = vmatpush1.bf16.msra.mxu0 %v1691
      %2367 = vmatprep.subr.bf16.mxu0 0
      %2368 = vmatpush1.bf16.msra.mxu0 %v1692
      %2369 = vmatprep.subr.bf16.mxu0 0
      %2370 = vmatpush1.bf16.msra.mxu0 %v1693
      %2371 = vmatprep.subr.bf16.mxu0 0
      %2372 = vmatpush1.bf16.msra.mxu0 %v1694
      %2373 = vmatprep.subr.bf16.mxu0 0
      %2374 = vmatpush1.bf16.msra.mxu0 %v1695
      %2375 = vmatprep.subr.bf16.mxu0 0
      %2376 = vmatpush1.bf16.msra.mxu0 %v1696
      %2377 = vmatprep.subr.bf16.mxu0 0
      %2378 = vmatpush1.bf16.msra.mxu0 %v1697
      %2379 = vmatprep.subr.bf16.mxu0 0
      %2380 = vmatpush1.bf16.msra.mxu0 %v1698
      %2381 = vmatprep.subr.bf16.mxu0 0
      %2382 = vmatpush1.bf16.msra.mxu0 %v1699
      %2383 = vmatprep.subr.bf16.mxu0 0
      %2384 = vmatpush1.bf16.msra.mxu0 %v1700
      %2385 = vmatprep.subr.bf16.mxu0 0
      %2386 = vmatpush1.bf16.msra.mxu0 %v1701
      %2387 = vmatprep.subr.bf16.mxu0 0
      %2388 = vmatpush1.bf16.msra.mxu0 %v1702
      %2389 = vmatprep.subr.bf16.mxu0 0
      %2390 = vmatpush1.bf16.msra.mxu0 %v1703
      %2391 = vmatprep.mubr.bf16.mxu0 %v702
      %2392 = vmatmul.mubr.bf16.gmra.mrb[0].mxu0 %v701
      %v2393 = vpop.f32.mrb[0].mxu0
      %v2394 = vadd.f32 %v2353, %v2393
      %v2395 = vpop.f32.mrb[0].mxu0
      %v2396 = vpop.f32.mrb[0].mxu0
      %v2397 = vadd.f32 %v2356, %v2396
      %v2398 = vpop.f32.mrb[0].mxu0
      %2399 = vdwg.mxu0
      %2400 = vmatprep.subr.bf16.mxu0 0
      %2401 = vmatpush1.bf16.msra.mxu0 %v1704
      %2402 = vmatprep.subr.bf16.mxu0 0
      %2403 = vmatpush1.bf16.msra.mxu0 %v1705
      %2404 = vmatprep.subr.bf16.mxu0 0
      %2405 = vmatpush1.bf16.msra.mxu0 %v1706
      %2406 = vmatprep.subr.bf16.mxu0 0
      %2407 = vmatpush1.bf16.msra.mxu0 %v1707
      %2408 = vmatprep.subr.bf16.mxu0 0
      %2409 = vmatpush1.bf16.msra.mxu0 0
      %2410 = vmatprep.subr.bf16.mxu0 0
      %2411 = vmatpush1.bf16.msra.mxu0 0
      %2412 = vmatprep.subr.bf16.mxu0 0
      %2413 = vmatpush1.bf16.msra.mxu0 0
      %2414 = vmatprep.subr.bf16.mxu0 0
      %2415 = vmatpush1.bf16.msra.mxu0 0
      %2416 = vmatprep.subr.bf16.mxu0 0
      %2417 = vmatpush1.bf16.msra.mxu0 0
      %2418 = vmatprep.subr.bf16.mxu0 0
      %2419 = vmatpush1.bf16.msra.mxu0 0
      %2420 = vmatprep.subr.bf16.mxu0 0
      %2421 = vmatpush1.bf16.msra.mxu0 0
      %2422 = vmatprep.subr.bf16.mxu0 0
      %2423 = vmatpush1.bf16.msra.mxu0 0
      %2424 = vmatprep.subr.bf16.mxu0 0
      %2425 = vmatpush1.bf16.msra.mxu0 0
      %2426 = vmatprep.subr.bf16.mxu0 0
      %2427 = vmatpush1.bf16.msra.mxu0 0
      %2428 = vmatprep.subr.bf16.mxu0 0
      %2429 = vmatpush1.bf16.msra.mxu0 0
      %2430 = vmatprep.subr.bf16.mxu0 0
      %2431 = vmatpush1.bf16.msra.mxu0 0
      %2432 = vmatprep.mubr.bf16.mxu0 0
      %2433 = vmatmul.mubr.bf16.gmra.mrb[0].mxu0 %v1906
      %v2434 = vpop.f32.mrb[0].mxu0
      %v2435 = vadd.f32 %v2394, %v2434
      %v2436 = vpop.f32.mrb[0].mxu0
      %v2437 = vpop.f32.mrb[0].mxu0
      %v2438 = vadd.f32 %v2397, %v2437
      %v2439 = vpop.f32.mrb[0].mxu0
      %2440 = vdwg.mxu0
      %v2441 = vmax.f32 %v2435, 0.0
      %v2442 = vmax.f32 %v2438, 0.0
      %2443 = vst [vmem:[%s175] sm:$0xff] %v2441
      %2444 = vst [vmem:[%s175 + $0x8] sm:$0xff] %v2442
      %s2445 = smul.u32 2, %s14
      %p2446 = scmp.lt.s32.totalorder %s2445, 3
      %s2447 = scalar_select %p2446, %s2445, 3
      %s2448 = smul.addr %s2447, 8
      %s2449 = scalar_lea.vmem %s3, %s2448
      // Predicated region
      $region33: #{ace_forward.5} parent=31 // pred_check
        %p2450 = pneg %p100
      $region34: #{ace_forward.5} parent=31 // pred_check_branch
        %2452 = sbr.rel (%p2450) target = $region36
      $region35: #{ace_forward.5} parent=31 // pred_region
        %s2453 = smul.u32 2, %s14
      $region36: #{ace_forward.5} parent=31 // pred_fallthru
        _
    $region32: #{ace_forward.5} parent=5 // pred_fallthru
      _
    %p2454 = scmp.le.s32.totalorder 2, %s9
    // Predicated region
    $region37: #{ace_forward.5} parent=5 // pred_check
      %p2455 = pneg %p2454
    $region38: #{ace_forward.5} parent=5 // pred_check_branch
      %2457 = sbr.rel (%p2455) target = $region40
    $region39: #{ace_forward.5} parent=5 // pred_region
      %s2458 = ssub.s32 %s9, 2
      // Predicated region
      $region41: #{ace_forward.5} parent=39 // pred_check
        %p2459 = pneg %p106
      $region42: #{ace_forward.5} parent=39 // pred_check_branch
        %2461 = sbr.rel (%p2459) target = $region44
      $region43: #{ace_forward.5} parent=39 // pred_region
        %s2462 = smul.u32 2, %s15
        %p2463 = scmp.lt.s32.totalorder %s2462, 3
        %s2464 = scalar_select %p2463, %s2462, 3
        %s2465 = smul.addr %s2464, 8
        %s2466 = scalar_lea.vmem %s3, %s2465
      $region44: #{ace_forward.5} parent=39 // pred_fallthru
        _
    $region40: #{ace_forward.5} parent=5 // pred_fallthru
      _
  $region6: #{ace_forward.5} parent=0 // loop_footer
    %s13 = sadd.s32 1, %s9
  $region7: #{ace_forward.5} parent=0 // loop_footer_branch
    %8 = sbr.rel target = $region3
  $region8: #{ace_forward.5} parent=0 // loop_exit
    _

</llo_original>
